<compile_context>
chip_gen: v7x
topology: tpu7x:2x2x1
jax: 0.10.0
libtpu: 0.0.40
codegen_flags: <defaults>
</compile_context>

<pallas_src>
import itertools

import jax
import jax.numpy as jnp
import numpy as np
from jax.experimental import pallas as pl
from jax.experimental.pallas import tpu as pltpu

OUT_CH = 3   # velocity components produced by the reg-model surrogate
IN_CH = 2    # the two images of a pair
KS = 3       # 3x3 spatial kernel of the surrogate
LANE = 128   # TPU lane width


def hadjhamou_conv_kernel(w_ref, b_ref, x_ref, o_ref):
    """Fused velocity conv.  grid = (H_tiles, D_tiles), both fully parallel.

    x_ref : (IN_CH, KS, Hp, W, TD) VMEM  pre-kw-shifted taps, depth on lanes
    w_ref : (OUT_CH*IN_CH*KS*KS,)  SMEM  conv weights * (1/denum)
    b_ref : (OUT_CH,)              SMEM  conv bias * (sum_t/denum)
    o_ref : (OUT_CH, BH, W, TD)    VMEM  velocity output block
    """
    _, BH, W, TD = o_ref.shape
    base = pl.multiple_of(pl.program_id(0) * BH, BH)   # first output row here

    # Hoist every SMEM scalar read out of the unrolled MAC loops.
    wv = [w_ref[i] for i in range(OUT_CH * IN_CH * KS * KS)]
    bv = [b_ref[c] for c in range(OUT_CH)]

    # Row/column chunking keeps the 3 per-channel accumulators plus one live
    # tap register-resident: 3*TH*TW*TD/1024 <= 24 vregs (+ 8 for the tap).
    TH = 4 if BH % 4 == 0 else (2 if BH % 2 == 0 else 1)
    if W > 16 and W % 16 == 0:
        TW = 16
    elif W > 16 and W % 8 == 0:
        TW = 8
    else:
        TW = W

    for h0 in range(0, BH, TH):
        for w0 in range(0, W, TW):
            # Bias (already scaled by sum_t/denum) seeds the accumulators.
            vels = [jnp.full((TH, TW, TD), bv[c], dtype=jnp.float32)
                    for c in range(OUT_CH)]
            for k in range(IN_CH):
                for kh in range(KS):
                    for kw in range(KS):
                        # Pre-shifted taps: only major-dim offsets + aligned
                        # sublane/lane slices -> no realignment on the VALU.
                        tap = x_ref[k, kw, pl.ds(base + h0 + kh, TH),
                                    w0:w0 + TW, :]
                        for c in range(OUT_CH):
                            w = wv[((c * IN_CH + k) * KS + kh) * KS + kw]
                            vels[c] = vels[c] + w * tap
            for c in range(OUT_CH):
                o_ref[c, h0:h0 + TH, w0:w0 + TW, :] = vels[c]


def hadjhamou_forward(images, ages, conv_w, conv_b):
    """images: (N, D, H, W) f32, ages: (N,) f32,
       conv_w: (3, 2, 3, 3) f32, conv_b: (3,) f32 -> (1, 3, D, H, W) f32."""
    N, D, H, W = images.shape
    pairs = list(itertools.combinations(range(N), 2))
    if len(pairs) == 0:   # no pairs -> denum == 0 -> zeros (torch semantics)
        return jnp.zeros((1, OUT_CH, D, H, W), jnp.float32)

    pi = jnp.asarray([a for a, _ in pairs], dtype=jnp.int32)
    pj = jnp.asarray([b for _, b in pairs], dtype=jnp.int32)
    times = (ages[pj] - ages[pi]).astype(jnp.float32)            # (P,)
    t_sum = jnp.sum(times)
    denum = jnp.sum(times * times)
    inv_denum = jnp.where(denum != 0.0, 1.0 / denum, 0.0).astype(jnp.float32)

    # --- Linearity fold: collapse the O(N^2) pair loop to one conv. ---------
    #   num = conv([A, B]) + bias * sum_t
    #   A = sum_p t_p * img_i(p),  B = sum_p t_p * img_j(p)
    # TODO(synk): only valid while the reg-model surrogate is linear; a real
    # learned RegistrationModule needs the per-pair reduction path.
    imgs = images.astype(jnp.float32)
    wa = jnp.zeros((N,), jnp.float32).at[pi].add(times)
    wb = jnp.zeros((N,), jnp.float32).at[pj].add(times)
    A = jnp.tensordot(wa, imgs, axes=1)                          # (D, H, W)
    B = jnp.tensordot(wb, imgs, axes=1)                          # (D, H, W)
    AB = jnp.stack([A, B], axis=0)                               # (2, D, H, W)

    # --- Scalar fold: bake 1/denum and sum_t/denum into weights/bias. -------
    w_eff = (conv_w.astype(jnp.float32) * inv_denum).reshape(-1)     # (54,)
    b_eff = conv_b.astype(jnp.float32) * (t_sum * inv_denum)         # (3,)

    # --- Lane-dense layout: depth last, padded to a multiple of 128. --------
    Dp = ((D + LANE - 1) // LANE) * LANE
    xT = jnp.transpose(AB, (0, 2, 3, 1))                         # (2, H, W, D)
    xT = jnp.pad(xT, ((0, 0), (1, 1), (1, 1), (0, Dp - D)))      # (2, Hp, Wp, Dp)
    Hp = H + 2
    # Pre-shift the three kw taps (layout plumbing) so in-kernel tap loads are
    # aligned: x_shift[k, kw, h, w, :] == xT[k, h, w + kw, :].
    x_shift = jnp.stack([xT[:, :, kw:kw + W, :] for kw in range(KS)], axis=1)
    # x_shift: (2, 3, Hp, W, Dp)

    # Grid: block H (>=2 blocks for v7x's 2 TCs when H >= 16) and tile depth.
    BH = next(c for c in (8, 4, 2, 1) if H % c == 0)
    TD = LANE
    grid = (H // BH, Dp // TD)

    # TODO(synk): the input block keeps full Hp rows in VMEM per depth tile;
    # very large H*W volumes would need an H-haloed manual DMA instead.
    in_specs = [
        pl.BlockSpec(memory_space=pltpu.MemorySpace.SMEM),            # w_eff
        pl.BlockSpec(memory_space=pltpu.MemorySpace.SMEM),            # b_eff
        pl.BlockSpec((IN_CH, KS, Hp, W, TD), lambda h, d: (0, 0, 0, 0, d)),
    ]
    out_spec = pl.BlockSpec((OUT_CH, BH, W, TD), lambda h, d: (0, h, 0, d))

    out = pl.pallas_call(
        hadjhamou_conv_kernel,
        out_shape=jax.ShapeDtypeStruct((OUT_CH, H, W, Dp), jnp.float32),
        grid_spec=pltpu.PrefetchScalarGridSpec(
            num_scalar_prefetch=0,
            grid=grid,
            in_specs=in_specs,
            out_specs=out_spec,
        ),
        compiler_params=pltpu.CompilerParams(
            dimension_semantics=("parallel", "parallel"),
        ),
    )(w_eff, b_eff, x_shift)

    out = out[:, :, :, :D]                           # strip depth padding
    # (3, H, W, D) -> (1, 3, D, H, W)  (matches torch.zeros([1, 3] + in_shape))
    return jnp.transpose(out, (0, 3, 1, 2))[None]


def reference_forward(images, ages, conv_w, conv_b):
    """Pure-JAX per-pair reference of the same forward (correctness check)."""
    N, D, H, W = images.shape
    num = jnp.zeros((OUT_CH, D, H, W), jnp.float32)
    denum = jnp.float32(0.0)
    for i, j in itertools.combinations(range(N), 2):
        t = ages[j] - ages[i]
        inp = jnp.stack([images[i], images[j]], axis=1)          # (D, 2, H, W)
        vel = jax.lax.conv_general_dilated(
            inp, conv_w, window_strides=(1, 1), padding="SAME",
            dimension_numbers=("NCHW", "OIHW", "NCHW"))
        vel = vel + conv_b[None, :, None, None]
        vel = jnp.transpose(vel, (1, 0, 2, 3))                   # (3, D, H, W)
        num = num + vel * t
        denum = denum + t * t
    return jnp.where(denum != 0.0,
                     num / jnp.where(denum != 0.0, denum, 1.0),
                     jnp.zeros_like(num))


if __name__ == "__main__":
    key = jax.random.PRNGKey(0)
    k_img, k_w, k_b = jax.random.split(key, 3)

    # D = 128 so the depth axis exactly fills the 128-wide lane dimension.
    N, D, H, W = 3, 128, 16, 16
    images = jax.random.normal(k_img, (N, D, H, W), dtype=jnp.float32)
    ages = jnp.array([1.0, 2.5, 4.0], dtype=jnp.float32)

    # TODO(synk): the original RegistrationModule is an external network loaded
    # from a checkpoint; it is replaced by this deterministic conv surrogate.
    conv_w = 0.1 * jax.random.normal(k_w, (OUT_CH, IN_CH, KS, KS), jnp.float32)
    conv_b = 0.01 * jax.random.normal(k_b, (OUT_CH,), jnp.float32)

    out = hadjhamou_forward(images, ages, conv_w, conv_b)
    out = jax.block_until_ready(out)

    ref = reference_forward(images, ages, conv_w, conv_b)
    assert out.shape == (1, OUT_CH, D, H, W)
    np.testing.assert_allclose(np.asarray(out[0]), np.asarray(ref),
                               rtol=1e-4, atol=1e-4)

    print("KERNEL_OK")
</pallas_src>

<mosaic_0001>
module attributes {stable_mosaic.version = 11 : i64} {
  func.func @hadjhamou_conv_kernel(%arg0: i32, %arg1: i32, %arg2: memref<54xf32, #tpu.memory_space<smem>>, %arg3: memref<3xf32, #tpu.memory_space<smem>>, %arg4: memref<2x3x18x16x128xf32, #tpu.memory_space<vmem>>, %arg5: memref<3x8x16x128xf32, #tpu.memory_space<vmem>>) attributes {dimension_semantics = [#tpu.dimension_semantics<parallel>, #tpu.dimension_semantics<parallel>], iteration_bounds = array<i64: 2, 1>, scalar_prefetch = 0 : i64, scratch_operands = 0 : i64, tpu.core_type = #tpu.core_type<tc>, window_params = [{transform_indices = @transform_0, window_bounds = array<i64: 54>}, {transform_indices = @transform_1, window_bounds = array<i64: 3>}, {transform_indices = @transform_2, window_bounds = array<i64: 2, 3, 18, 16, 128>}, {transform_indices = @transform_3, window_bounds = array<i64: 3, 8, 16, 128>}]} {
    %c8_i32 = arith.constant 8 : i32
    %0 = arith.muli %arg0, %c8_i32 : i32
    %1 = tpu.assume_multiple %0, 8 : i32
    %c0 = arith.constant 0 : index
    %2 = memref.load %arg2[%c0] : memref<54xf32, #tpu.memory_space<smem>>
    %c1 = arith.constant 1 : index
    %3 = memref.load %arg2[%c1] : memref<54xf32, #tpu.memory_space<smem>>
    %c2 = arith.constant 2 : index
    %4 = memref.load %arg2[%c2] : memref<54xf32, #tpu.memory_space<smem>>
    %c3 = arith.constant 3 : index
    %5 = memref.load %arg2[%c3] : memref<54xf32, #tpu.memory_space<smem>>
    %c4 = arith.constant 4 : index
    %6 = memref.load %arg2[%c4] : memref<54xf32, #tpu.memory_space<smem>>
    %c5 = arith.constant 5 : index
    %7 = memref.load %arg2[%c5] : memref<54xf32, #tpu.memory_space<smem>>
    %c6 = arith.constant 6 : index
    %8 = memref.load %arg2[%c6] : memref<54xf32, #tpu.memory_space<smem>>
    %c7 = arith.constant 7 : index
    %9 = memref.load %arg2[%c7] : memref<54xf32, #tpu.memory_space<smem>>
    %c8 = arith.constant 8 : index
    %10 = memref.load %arg2[%c8] : memref<54xf32, #tpu.memory_space<smem>>
    %c9 = arith.constant 9 : index
    %11 = memref.load %arg2[%c9] : memref<54xf32, #tpu.memory_space<smem>>
    %c10 = arith.constant 10 : index
    %12 = memref.load %arg2[%c10] : memref<54xf32, #tpu.memory_space<smem>>
    %c11 = arith.constant 11 : index
    %13 = memref.load %arg2[%c11] : memref<54xf32, #tpu.memory_space<smem>>
    %c12 = arith.constant 12 : index
    %14 = memref.load %arg2[%c12] : memref<54xf32, #tpu.memory_space<smem>>
    %c13 = arith.constant 13 : index
    %15 = memref.load %arg2[%c13] : memref<54xf32, #tpu.memory_space<smem>>
    %c14 = arith.constant 14 : index
    %16 = memref.load %arg2[%c14] : memref<54xf32, #tpu.memory_space<smem>>
    %c15 = arith.constant 15 : index
    %17 = memref.load %arg2[%c15] : memref<54xf32, #tpu.memory_space<smem>>
    %c16 = arith.constant 16 : index
    %18 = memref.load %arg2[%c16] : memref<54xf32, #tpu.memory_space<smem>>
    %c17 = arith.constant 17 : index
    %19 = memref.load %arg2[%c17] : memref<54xf32, #tpu.memory_space<smem>>
    %c18 = arith.constant 18 : index
    %20 = memref.load %arg2[%c18] : memref<54xf32, #tpu.memory_space<smem>>
    %c19 = arith.constant 19 : index
    %21 = memref.load %arg2[%c19] : memref<54xf32, #tpu.memory_space<smem>>
    %c20 = arith.constant 20 : index
    %22 = memref.load %arg2[%c20] : memref<54xf32, #tpu.memory_space<smem>>
    %c21 = arith.constant 21 : index
    %23 = memref.load %arg2[%c21] : memref<54xf32, #tpu.memory_space<smem>>
    %c22 = arith.constant 22 : index
    %24 = memref.load %arg2[%c22] : memref<54xf32, #tpu.memory_space<smem>>
    %c23 = arith.constant 23 : index
    %25 = memref.load %arg2[%c23] : memref<54xf32, #tpu.memory_space<smem>>
    %c24 = arith.constant 24 : index
    %26 = memref.load %arg2[%c24] : memref<54xf32, #tpu.memory_space<smem>>
    %c25 = arith.constant 25 : index
    %27 = memref.load %arg2[%c25] : memref<54xf32, #tpu.memory_space<smem>>
    %c26 = arith.constant 26 : index
    %28 = memref.load %arg2[%c26] : memref<54xf32, #tpu.memory_space<smem>>
    %c27 = arith.constant 27 : index
    %29 = memref.load %arg2[%c27] : memref<54xf32, #tpu.memory_space<smem>>
    %c28 = arith.constant 28 : index
    %30 = memref.load %arg2[%c28] : memref<54xf32, #tpu.memory_space<smem>>
    %c29 = arith.constant 29 : index
    %31 = memref.load %arg2[%c29] : memref<54xf32, #tpu.memory_space<smem>>
    %c30 = arith.constant 30 : index
    %32 = memref.load %arg2[%c30] : memref<54xf32, #tpu.memory_space<smem>>
    %c31 = arith.constant 31 : index
    %33 = memref.load %arg2[%c31] : memref<54xf32, #tpu.memory_space<smem>>
    %c32 = arith.constant 32 : index
    %34 = memref.load %arg2[%c32] : memref<54xf32, #tpu.memory_space<smem>>
    %c33 = arith.constant 33 : index
    %35 = memref.load %arg2[%c33] : memref<54xf32, #tpu.memory_space<smem>>
    %c34 = arith.constant 34 : index
    %36 = memref.load %arg2[%c34] : memref<54xf32, #tpu.memory_space<smem>>
    %c35 = arith.constant 35 : index
    %37 = memref.load %arg2[%c35] : memref<54xf32, #tpu.memory_space<smem>>
    %c36 = arith.constant 36 : index
    %38 = memref.load %arg2[%c36] : memref<54xf32, #tpu.memory_space<smem>>
    %c37 = arith.constant 37 : index
    %39 = memref.load %arg2[%c37] : memref<54xf32, #tpu.memory_space<smem>>
    %c38 = arith.constant 38 : index
    %40 = memref.load %arg2[%c38] : memref<54xf32, #tpu.memory_space<smem>>
    %c39 = arith.constant 39 : index
    %41 = memref.load %arg2[%c39] : memref<54xf32, #tpu.memory_space<smem>>
    %c40 = arith.constant 40 : index
    %42 = memref.load %arg2[%c40] : memref<54xf32, #tpu.memory_space<smem>>
    %c41 = arith.constant 41 : index
    %43 = memref.load %arg2[%c41] : memref<54xf32, #tpu.memory_space<smem>>
    %c42 = arith.constant 42 : index
    %44 = memref.load %arg2[%c42] : memref<54xf32, #tpu.memory_space<smem>>
    %c43 = arith.constant 43 : index
    %45 = memref.load %arg2[%c43] : memref<54xf32, #tpu.memory_space<smem>>
    %c44 = arith.constant 44 : index
    %46 = memref.load %arg2[%c44] : memref<54xf32, #tpu.memory_space<smem>>
    %c45 = arith.constant 45 : index
    %47 = memref.load %arg2[%c45] : memref<54xf32, #tpu.memory_space<smem>>
    %c46 = arith.constant 46 : index
    %48 = memref.load %arg2[%c46] : memref<54xf32, #tpu.memory_space<smem>>
    %c47 = arith.constant 47 : index
    %49 = memref.load %arg2[%c47] : memref<54xf32, #tpu.memory_space<smem>>
    %c48 = arith.constant 48 : index
    %50 = memref.load %arg2[%c48] : memref<54xf32, #tpu.memory_space<smem>>
    %c49 = arith.constant 49 : index
    %51 = memref.load %arg2[%c49] : memref<54xf32, #tpu.memory_space<smem>>
    %c50 = arith.constant 50 : index
    %52 = memref.load %arg2[%c50] : memref<54xf32, #tpu.memory_space<smem>>
    %c51 = arith.constant 51 : index
    %53 = memref.load %arg2[%c51] : memref<54xf32, #tpu.memory_space<smem>>
    %c52 = arith.constant 52 : index
    %54 = memref.load %arg2[%c52] : memref<54xf32, #tpu.memory_space<smem>>
    %c53 = arith.constant 53 : index
    %55 = memref.load %arg2[%c53] : memref<54xf32, #tpu.memory_space<smem>>
    %c0_0 = arith.constant 0 : index
    %56 = memref.load %arg3[%c0_0] : memref<3xf32, #tpu.memory_space<smem>>
    %c1_1 = arith.constant 1 : index
    %57 = memref.load %arg3[%c1_1] : memref<3xf32, #tpu.memory_space<smem>>
    %c2_2 = arith.constant 2 : index
    %58 = memref.load %arg3[%c2_2] : memref<3xf32, #tpu.memory_space<smem>>
    %59 = vector.broadcast %56 : f32 to vector<4x16x128xf32>
    %60 = vector.broadcast %57 : f32 to vector<4x16x128xf32>
    %61 = vector.broadcast %58 : f32 to vector<4x16x128xf32>
    %c0_i32 = arith.constant 0 : i32
    %62 = arith.addi %1, %c0_i32 : i32
    %c0_i32_3 = arith.constant 0 : i32
    %63 = arith.addi %62, %c0_i32_3 : i32
    %c0_4 = arith.constant 0 : index
    %c0_5 = arith.constant 0 : index
    %64 = arith.index_cast %63 : i32 to index
    %c0_6 = arith.constant 0 : index
    %c0_7 = arith.constant 0 : index
    %65 = vector.load %arg4[%c0_4, %c0_5, %64, %c0_6, %c0_7] : memref<2x3x18x16x128xf32, #tpu.memory_space<vmem>>, vector<1x1x4x16x128xf32>
    %66 = vector.shape_cast %65 : vector<1x1x4x16x128xf32> to vector<4x16x128xf32>
    %67 = vector.broadcast %2 : f32 to vector<4x16x128xf32>
    %68 = arith.mulf %67, %66 : vector<4x16x128xf32>
    %69 = arith.addf %59, %68 : vector<4x16x128xf32>
    %70 = vector.broadcast %20 : f32 to vector<4x16x128xf32>
    %71 = arith.mulf %70, %66 : vector<4x16x128xf32>
    %72 = arith.addf %60, %71 : vector<4x16x128xf32>
    %73 = vector.broadcast %38 : f32 to vector<4x16x128xf32>
    %74 = arith.mulf %73, %66 : vector<4x16x128xf32>
    %75 = arith.addf %61, %74 : vector<4x16x128xf32>
    %c0_i32_8 = arith.constant 0 : i32
    %76 = arith.addi %1, %c0_i32_8 : i32
    %c0_i32_9 = arith.constant 0 : i32
    %77 = arith.addi %76, %c0_i32_9 : i32
    %c0_10 = arith.constant 0 : index
    %c1_11 = arith.constant 1 : index
    %78 = arith.index_cast %77 : i32 to index
    %c0_12 = arith.constant 0 : index
    %c0_13 = arith.constant 0 : index
    %79 = vector.load %arg4[%c0_10, %c1_11, %78, %c0_12, %c0_13] : memref<2x3x18x16x128xf32, #tpu.memory_space<vmem>>, vector<1x1x4x16x128xf32>
    %80 = vector.shape_cast %79 : vector<1x1x4x16x128xf32> to vector<4x16x128xf32>
    %81 = vector.broadcast %3 : f32 to vector<4x16x128xf32>
    %82 = arith.mulf %81, %80 : vector<4x16x128xf32>
    %83 = arith.addf %69, %82 : vector<4x16x128xf32>
    %84 = vector.broadcast %21 : f32 to vector<4x16x128xf32>
    %85 = arith.mulf %84, %80 : vector<4x16x128xf32>
    %86 = arith.addf %72, %85 : vector<4x16x128xf32>
    %87 = vector.broadcast %39 : f32 to vector<4x16x128xf32>
    %88 = arith.mulf %87, %80 : vector<4x16x128xf32>
    %89 = arith.addf %75, %88 : vector<4x16x128xf32>
    %c0_i32_14 = arith.constant 0 : i32
    %90 = arith.addi %1, %c0_i32_14 : i32
    %c0_i32_15 = arith.constant 0 : i32
    %91 = arith.addi %90, %c0_i32_15 : i32
    %c0_16 = arith.constant 0 : index
    %c2_17 = arith.constant 2 : index
    %92 = arith.index_cast %91 : i32 to index
    %c0_18 = arith.constant 0 : index
    %c0_19 = arith.constant 0 : index
    %93 = vector.load %arg4[%c0_16, %c2_17, %92, %c0_18, %c0_19] : memref<2x3x18x16x128xf32, #tpu.memory_space<vmem>>, vector<1x1x4x16x128xf32>
    %94 = vector.shape_cast %93 : vector<1x1x4x16x128xf32> to vector<4x16x128xf32>
    %95 = vector.broadcast %4 : f32 to vector<4x16x128xf32>
    %96 = arith.mulf %95, %94 : vector<4x16x128xf32>
    %97 = arith.addf %83, %96 : vector<4x16x128xf32>
    %98 = vector.broadcast %22 : f32 to vector<4x16x128xf32>
    %99 = arith.mulf %98, %94 : vector<4x16x128xf32>
    %100 = arith.addf %86, %99 : vector<4x16x128xf32>
    %101 = vector.broadcast %40 : f32 to vector<4x16x128xf32>
    %102 = arith.mulf %101, %94 : vector<4x16x128xf32>
    %103 = arith.addf %89, %102 : vector<4x16x128xf32>
    %c0_i32_20 = arith.constant 0 : i32
    %104 = arith.addi %1, %c0_i32_20 : i32
    %c1_i32 = arith.constant 1 : i32
    %105 = arith.addi %104, %c1_i32 : i32
    %c0_21 = arith.constant 0 : index
    %c0_22 = arith.constant 0 : index
    %106 = arith.index_cast %105 : i32 to index
    %c0_23 = arith.constant 0 : index
    %c0_24 = arith.constant 0 : index
    %107 = vector.load %arg4[%c0_21, %c0_22, %106, %c0_23, %c0_24] : memref<2x3x18x16x128xf32, #tpu.memory_space<vmem>>, vector<1x1x4x16x128xf32>
    %108 = vector.shape_cast %107 : vector<1x1x4x16x128xf32> to vector<4x16x128xf32>
    %109 = vector.broadcast %5 : f32 to vector<4x16x128xf32>
    %110 = arith.mulf %109, %108 : vector<4x16x128xf32>
    %111 = arith.addf %97, %110 : vector<4x16x128xf32>
    %112 = vector.broadcast %23 : f32 to vector<4x16x128xf32>
    %113 = arith.mulf %112, %108 : vector<4x16x128xf32>
    %114 = arith.addf %100, %113 : vector<4x16x128xf32>
    %115 = vector.broadcast %41 : f32 to vector<4x16x128xf32>
    %116 = arith.mulf %115, %108 : vector<4x16x128xf32>
    %117 = arith.addf %103, %116 : vector<4x16x128xf32>
    %c0_i32_25 = arith.constant 0 : i32
    %118 = arith.addi %1, %c0_i32_25 : i32
    %c1_i32_26 = arith.constant 1 : i32
    %119 = arith.addi %118, %c1_i32_26 : i32
    %c0_27 = arith.constant 0 : index
    %c1_28 = arith.constant 1 : index
    %120 = arith.index_cast %119 : i32 to index
    %c0_29 = arith.constant 0 : index
    %c0_30 = arith.constant 0 : index
    %121 = vector.load %arg4[%c0_27, %c1_28, %120, %c0_29, %c0_30] : memref<2x3x18x16x128xf32, #tpu.memory_space<vmem>>, vector<1x1x4x16x128xf32>
    %122 = vector.shape_cast %121 : vector<1x1x4x16x128xf32> to vector<4x16x128xf32>
    %123 = vector.broadcast %6 : f32 to vector<4x16x128xf32>
    %124 = arith.mulf %123, %122 : vector<4x16x128xf32>
    %125 = arith.addf %111, %124 : vector<4x16x128xf32>
    %126 = vector.broadcast %24 : f32 to vector<4x16x128xf32>
    %127 = arith.mulf %126, %122 : vector<4x16x128xf32>
    %128 = arith.addf %114, %127 : vector<4x16x128xf32>
    %129 = vector.broadcast %42 : f32 to vector<4x16x128xf32>
    %130 = arith.mulf %129, %122 : vector<4x16x128xf32>
    %131 = arith.addf %117, %130 : vector<4x16x128xf32>
    %c0_i32_31 = arith.constant 0 : i32
    %132 = arith.addi %1, %c0_i32_31 : i32
    %c1_i32_32 = arith.constant 1 : i32
    %133 = arith.addi %132, %c1_i32_32 : i32
    %c0_33 = arith.constant 0 : index
    %c2_34 = arith.constant 2 : index
    %134 = arith.index_cast %133 : i32 to index
    %c0_35 = arith.constant 0 : index
    %c0_36 = arith.constant 0 : index
    %135 = vector.load %arg4[%c0_33, %c2_34, %134, %c0_35, %c0_36] : memref<2x3x18x16x128xf32, #tpu.memory_space<vmem>>, vector<1x1x4x16x128xf32>
    %136 = vector.shape_cast %135 : vector<1x1x4x16x128xf32> to vector<4x16x128xf32>
    %137 = vector.broadcast %7 : f32 to vector<4x16x128xf32>
    %138 = arith.mulf %137, %136 : vector<4x16x128xf32>
    %139 = arith.addf %125, %138 : vector<4x16x128xf32>
    %140 = vector.broadcast %25 : f32 to vector<4x16x128xf32>
    %141 = arith.mulf %140, %136 : vector<4x16x128xf32>
    %142 = arith.addf %128, %141 : vector<4x16x128xf32>
    %143 = vector.broadcast %43 : f32 to vector<4x16x128xf32>
    %144 = arith.mulf %143, %136 : vector<4x16x128xf32>
    %145 = arith.addf %131, %144 : vector<4x16x128xf32>
    %c0_i32_37 = arith.constant 0 : i32
    %146 = arith.addi %1, %c0_i32_37 : i32
    %c2_i32 = arith.constant 2 : i32
    %147 = arith.addi %146, %c2_i32 : i32
    %c0_38 = arith.constant 0 : index
    %c0_39 = arith.constant 0 : index
    %148 = arith.index_cast %147 : i32 to index
    %c0_40 = arith.constant 0 : index
    %c0_41 = arith.constant 0 : index
    %149 = vector.load %arg4[%c0_38, %c0_39, %148, %c0_40, %c0_41] : memref<2x3x18x16x128xf32, #tpu.memory_space<vmem>>, vector<1x1x4x16x128xf32>
    %150 = vector.shape_cast %149 : vector<1x1x4x16x128xf32> to vector<4x16x128xf32>
    %151 = vector.broadcast %8 : f32 to vector<4x16x128xf32>
    %152 = arith.mulf %151, %150 : vector<4x16x128xf32>
    %153 = arith.addf %139, %152 : vector<4x16x128xf32>
    %154 = vector.broadcast %26 : f32 to vector<4x16x128xf32>
    %155 = arith.mulf %154, %150 : vector<4x16x128xf32>
    %156 = arith.addf %142, %155 : vector<4x16x128xf32>
    %157 = vector.broadcast %44 : f32 to vector<4x16x128xf32>
    %158 = arith.mulf %157, %150 : vector<4x16x128xf32>
    %159 = arith.addf %145, %158 : vector<4x16x128xf32>
    %c0_i32_42 = arith.constant 0 : i32
    %160 = arith.addi %1, %c0_i32_42 : i32
    %c2_i32_43 = arith.constant 2 : i32
    %161 = arith.addi %160, %c2_i32_43 : i32
    %c0_44 = arith.constant 0 : index
    %c1_45 = arith.constant 1 : index
    %162 = arith.index_cast %161 : i32 to index
    %c0_46 = arith.constant 0 : index
    %c0_47 = arith.constant 0 : index
    %163 = vector.load %arg4[%c0_44, %c1_45, %162, %c0_46, %c0_47] : memref<2x3x18x16x128xf32, #tpu.memory_space<vmem>>, vector<1x1x4x16x128xf32>
    %164 = vector.shape_cast %163 : vector<1x1x4x16x128xf32> to vector<4x16x128xf32>
    %165 = vector.broadcast %9 : f32 to vector<4x16x128xf32>
    %166 = arith.mulf %165, %164 : vector<4x16x128xf32>
    %167 = arith.addf %153, %166 : vector<4x16x128xf32>
    %168 = vector.broadcast %27 : f32 to vector<4x16x128xf32>
    %169 = arith.mulf %168, %164 : vector<4x16x128xf32>
    %170 = arith.addf %156, %169 : vector<4x16x128xf32>
    %171 = vector.broadcast %45 : f32 to vector<4x16x128xf32>
    %172 = arith.mulf %171, %164 : vector<4x16x128xf32>
    %173 = arith.addf %159, %172 : vector<4x16x128xf32>
    %c0_i32_48 = arith.constant 0 : i32
    %174 = arith.addi %1, %c0_i32_48 : i32
    %c2_i32_49 = arith.constant 2 : i32
    %175 = arith.addi %174, %c2_i32_49 : i32
    %c0_50 = arith.constant 0 : index
    %c2_51 = arith.constant 2 : index
    %176 = arith.index_cast %175 : i32 to index
    %c0_52 = arith.constant 0 : index
    %c0_53 = arith.constant 0 : index
    %177 = vector.load %arg4[%c0_50, %c2_51, %176, %c0_52, %c0_53] : memref<2x3x18x16x128xf32, #tpu.memory_space<vmem>>, vector<1x1x4x16x128xf32>
    %178 = vector.shape_cast %177 : vector<1x1x4x16x128xf32> to vector<4x16x128xf32>
    %179 = vector.broadcast %10 : f32 to vector<4x16x128xf32>
    %180 = arith.mulf %179, %178 : vector<4x16x128xf32>
    %181 = arith.addf %167, %180 : vector<4x16x128xf32>
    %182 = vector.broadcast %28 : f32 to vector<4x16x128xf32>
    %183 = arith.mulf %182, %178 : vector<4x16x128xf32>
    %184 = arith.addf %170, %183 : vector<4x16x128xf32>
    %185 = vector.broadcast %46 : f32 to vector<4x16x128xf32>
    %186 = arith.mulf %185, %178 : vector<4x16x128xf32>
    %187 = arith.addf %173, %186 : vector<4x16x128xf32>
    %c0_i32_54 = arith.constant 0 : i32
    %188 = arith.addi %1, %c0_i32_54 : i32
    %c0_i32_55 = arith.constant 0 : i32
    %189 = arith.addi %188, %c0_i32_55 : i32
    %c1_56 = arith.constant 1 : index
    %c0_57 = arith.constant 0 : index
    %190 = arith.index_cast %189 : i32 to index
    %c0_58 = arith.constant 0 : index
    %c0_59 = arith.constant 0 : index
    %191 = vector.load %arg4[%c1_56, %c0_57, %190, %c0_58, %c0_59] : memref<2x3x18x16x128xf32, #tpu.memory_space<vmem>>, vector<1x1x4x16x128xf32>
    %192 = vector.shape_cast %191 : vector<1x1x4x16x128xf32> to vector<4x16x128xf32>
    %193 = vector.broadcast %11 : f32 to vector<4x16x128xf32>
    %194 = arith.mulf %193, %192 : vector<4x16x128xf32>
    %195 = arith.addf %181, %194 : vector<4x16x128xf32>
    %196 = vector.broadcast %29 : f32 to vector<4x16x128xf32>
    %197 = arith.mulf %196, %192 : vector<4x16x128xf32>
    %198 = arith.addf %184, %197 : vector<4x16x128xf32>
    %199 = vector.broadcast %47 : f32 to vector<4x16x128xf32>
    %200 = arith.mulf %199, %192 : vector<4x16x128xf32>
    %201 = arith.addf %187, %200 : vector<4x16x128xf32>
    %c0_i32_60 = arith.constant 0 : i32
    %202 = arith.addi %1, %c0_i32_60 : i32
    %c0_i32_61 = arith.constant 0 : i32
    %203 = arith.addi %202, %c0_i32_61 : i32
    %c1_62 = arith.constant 1 : index
    %c1_63 = arith.constant 1 : index
    %204 = arith.index_cast %203 : i32 to index
    %c0_64 = arith.constant 0 : index
    %c0_65 = arith.constant 0 : index
    %205 = vector.load %arg4[%c1_62, %c1_63, %204, %c0_64, %c0_65] : memref<2x3x18x16x128xf32, #tpu.memory_space<vmem>>, vector<1x1x4x16x128xf32>
    %206 = vector.shape_cast %205 : vector<1x1x4x16x128xf32> to vector<4x16x128xf32>
    %207 = vector.broadcast %12 : f32 to vector<4x16x128xf32>
    %208 = arith.mulf %207, %206 : vector<4x16x128xf32>
    %209 = arith.addf %195, %208 : vector<4x16x128xf32>
    %210 = vector.broadcast %30 : f32 to vector<4x16x128xf32>
    %211 = arith.mulf %210, %206 : vector<4x16x128xf32>
    %212 = arith.addf %198, %211 : vector<4x16x128xf32>
    %213 = vector.broadcast %48 : f32 to vector<4x16x128xf32>
    %214 = arith.mulf %213, %206 : vector<4x16x128xf32>
    %215 = arith.addf %201, %214 : vector<4x16x128xf32>
    %c0_i32_66 = arith.constant 0 : i32
    %216 = arith.addi %1, %c0_i32_66 : i32
    %c0_i32_67 = arith.constant 0 : i32
    %217 = arith.addi %216, %c0_i32_67 : i32
    %c1_68 = arith.constant 1 : index
    %c2_69 = arith.constant 2 : index
    %218 = arith.index_cast %217 : i32 to index
    %c0_70 = arith.constant 0 : index
    %c0_71 = arith.constant 0 : index
    %219 = vector.load %arg4[%c1_68, %c2_69, %218, %c0_70, %c0_71] : memref<2x3x18x16x128xf32, #tpu.memory_space<vmem>>, vector<1x1x4x16x128xf32>
    %220 = vector.shape_cast %219 : vector<1x1x4x16x128xf32> to vector<4x16x128xf32>
    %221 = vector.broadcast %13 : f32 to vector<4x16x128xf32>
    %222 = arith.mulf %221, %220 : vector<4x16x128xf32>
    %223 = arith.addf %209, %222 : vector<4x16x128xf32>
    %224 = vector.broadcast %31 : f32 to vector<4x16x128xf32>
    %225 = arith.mulf %224, %220 : vector<4x16x128xf32>
    %226 = arith.addf %212, %225 : vector<4x16x128xf32>
    %227 = vector.broadcast %49 : f32 to vector<4x16x128xf32>
    %228 = arith.mulf %227, %220 : vector<4x16x128xf32>
    %229 = arith.addf %215, %228 : vector<4x16x128xf32>
    %c0_i32_72 = arith.constant 0 : i32
    %230 = arith.addi %1, %c0_i32_72 : i32
    %c1_i32_73 = arith.constant 1 : i32
    %231 = arith.addi %230, %c1_i32_73 : i32
    %c1_74 = arith.constant 1 : index
    %c0_75 = arith.constant 0 : index
    %232 = arith.index_cast %231 : i32 to index
    %c0_76 = arith.constant 0 : index
    %c0_77 = arith.constant 0 : index
    %233 = vector.load %arg4[%c1_74, %c0_75, %232, %c0_76, %c0_77] : memref<2x3x18x16x128xf32, #tpu.memory_space<vmem>>, vector<1x1x4x16x128xf32>
    %234 = vector.shape_cast %233 : vector<1x1x4x16x128xf32> to vector<4x16x128xf32>
    %235 = vector.broadcast %14 : f32 to vector<4x16x128xf32>
    %236 = arith.mulf %235, %234 : vector<4x16x128xf32>
    %237 = arith.addf %223, %236 : vector<4x16x128xf32>
    %238 = vector.broadcast %32 : f32 to vector<4x16x128xf32>
    %239 = arith.mulf %238, %234 : vector<4x16x128xf32>
    %240 = arith.addf %226, %239 : vector<4x16x128xf32>
    %241 = vector.broadcast %50 : f32 to vector<4x16x128xf32>
    %242 = arith.mulf %241, %234 : vector<4x16x128xf32>
    %243 = arith.addf %229, %242 : vector<4x16x128xf32>
    %c0_i32_78 = arith.constant 0 : i32
    %244 = arith.addi %1, %c0_i32_78 : i32
    %c1_i32_79 = arith.constant 1 : i32
    %245 = arith.addi %244, %c1_i32_79 : i32
    %c1_80 = arith.constant 1 : index
    %c1_81 = arith.constant 1 : index
    %246 = arith.index_cast %245 : i32 to index
    %c0_82 = arith.constant 0 : index
    %c0_83 = arith.constant 0 : index
    %247 = vector.load %arg4[%c1_80, %c1_81, %246, %c0_82, %c0_83] : memref<2x3x18x16x128xf32, #tpu.memory_space<vmem>>, vector<1x1x4x16x128xf32>
    %248 = vector.shape_cast %247 : vector<1x1x4x16x128xf32> to vector<4x16x128xf32>
    %249 = vector.broadcast %15 : f32 to vector<4x16x128xf32>
    %250 = arith.mulf %249, %248 : vector<4x16x128xf32>
    %251 = arith.addf %237, %250 : vector<4x16x128xf32>
    %252 = vector.broadcast %33 : f32 to vector<4x16x128xf32>
    %253 = arith.mulf %252, %248 : vector<4x16x128xf32>
    %254 = arith.addf %240, %253 : vector<4x16x128xf32>
    %255 = vector.broadcast %51 : f32 to vector<4x16x128xf32>
    %256 = arith.mulf %255, %248 : vector<4x16x128xf32>
    %257 = arith.addf %243, %256 : vector<4x16x128xf32>
    %c0_i32_84 = arith.constant 0 : i32
    %258 = arith.addi %1, %c0_i32_84 : i32
    %c1_i32_85 = arith.constant 1 : i32
    %259 = arith.addi %258, %c1_i32_85 : i32
    %c1_86 = arith.constant 1 : index
    %c2_87 = arith.constant 2 : index
    %260 = arith.index_cast %259 : i32 to index
    %c0_88 = arith.constant 0 : index
    %c0_89 = arith.constant 0 : index
    %261 = vector.load %arg4[%c1_86, %c2_87, %260, %c0_88, %c0_89] : memref<2x3x18x16x128xf32, #tpu.memory_space<vmem>>, vector<1x1x4x16x128xf32>
    %262 = vector.shape_cast %261 : vector<1x1x4x16x128xf32> to vector<4x16x128xf32>
    %263 = vector.broadcast %16 : f32 to vector<4x16x128xf32>
    %264 = arith.mulf %263, %262 : vector<4x16x128xf32>
    %265 = arith.addf %251, %264 : vector<4x16x128xf32>
    %266 = vector.broadcast %34 : f32 to vector<4x16x128xf32>
    %267 = arith.mulf %266, %262 : vector<4x16x128xf32>
    %268 = arith.addf %254, %267 : vector<4x16x128xf32>
    %269 = vector.broadcast %52 : f32 to vector<4x16x128xf32>
    %270 = arith.mulf %269, %262 : vector<4x16x128xf32>
    %271 = arith.addf %257, %270 : vector<4x16x128xf32>
    %c0_i32_90 = arith.constant 0 : i32
    %272 = arith.addi %1, %c0_i32_90 : i32
    %c2_i32_91 = arith.constant 2 : i32
    %273 = arith.addi %272, %c2_i32_91 : i32
    %c1_92 = arith.constant 1 : index
    %c0_93 = arith.constant 0 : index
    %274 = arith.index_cast %273 : i32 to index
    %c0_94 = arith.constant 0 : index
    %c0_95 = arith.constant 0 : index
    %275 = vector.load %arg4[%c1_92, %c0_93, %274, %c0_94, %c0_95] : memref<2x3x18x16x128xf32, #tpu.memory_space<vmem>>, vector<1x1x4x16x128xf32>
    %276 = vector.shape_cast %275 : vector<1x1x4x16x128xf32> to vector<4x16x128xf32>
    %277 = vector.broadcast %17 : f32 to vector<4x16x128xf32>
    %278 = arith.mulf %277, %276 : vector<4x16x128xf32>
    %279 = arith.addf %265, %278 : vector<4x16x128xf32>
    %280 = vector.broadcast %35 : f32 to vector<4x16x128xf32>
    %281 = arith.mulf %280, %276 : vector<4x16x128xf32>
    %282 = arith.addf %268, %281 : vector<4x16x128xf32>
    %283 = vector.broadcast %53 : f32 to vector<4x16x128xf32>
    %284 = arith.mulf %283, %276 : vector<4x16x128xf32>
    %285 = arith.addf %271, %284 : vector<4x16x128xf32>
    %c0_i32_96 = arith.constant 0 : i32
    %286 = arith.addi %1, %c0_i32_96 : i32
    %c2_i32_97 = arith.constant 2 : i32
    %287 = arith.addi %286, %c2_i32_97 : i32
    %c1_98 = arith.constant 1 : index
    %c1_99 = arith.constant 1 : index
    %288 = arith.index_cast %287 : i32 to index
    %c0_100 = arith.constant 0 : index
    %c0_101 = arith.constant 0 : index
    %289 = vector.load %arg4[%c1_98, %c1_99, %288, %c0_100, %c0_101] : memref<2x3x18x16x128xf32, #tpu.memory_space<vmem>>, vector<1x1x4x16x128xf32>
    %290 = vector.shape_cast %289 : vector<1x1x4x16x128xf32> to vector<4x16x128xf32>
    %291 = vector.broadcast %18 : f32 to vector<4x16x128xf32>
    %292 = arith.mulf %291, %290 : vector<4x16x128xf32>
    %293 = arith.addf %279, %292 : vector<4x16x128xf32>
    %294 = vector.broadcast %36 : f32 to vector<4x16x128xf32>
    %295 = arith.mulf %294, %290 : vector<4x16x128xf32>
    %296 = arith.addf %282, %295 : vector<4x16x128xf32>
    %297 = vector.broadcast %54 : f32 to vector<4x16x128xf32>
    %298 = arith.mulf %297, %290 : vector<4x16x128xf32>
    %299 = arith.addf %285, %298 : vector<4x16x128xf32>
    %c0_i32_102 = arith.constant 0 : i32
    %300 = arith.addi %1, %c0_i32_102 : i32
    %c2_i32_103 = arith.constant 2 : i32
    %301 = arith.addi %300, %c2_i32_103 : i32
    %c1_104 = arith.constant 1 : index
    %c2_105 = arith.constant 2 : index
    %302 = arith.index_cast %301 : i32 to index
    %c0_106 = arith.constant 0 : index
    %c0_107 = arith.constant 0 : index
    %303 = vector.load %arg4[%c1_104, %c2_105, %302, %c0_106, %c0_107] : memref<2x3x18x16x128xf32, #tpu.memory_space<vmem>>, vector<1x1x4x16x128xf32>
    %304 = vector.shape_cast %303 : vector<1x1x4x16x128xf32> to vector<4x16x128xf32>
    %305 = vector.broadcast %19 : f32 to vector<4x16x128xf32>
    %306 = arith.mulf %305, %304 : vector<4x16x128xf32>
    %307 = arith.addf %293, %306 : vector<4x16x128xf32>
    %308 = vector.broadcast %37 : f32 to vector<4x16x128xf32>
    %309 = arith.mulf %308, %304 : vector<4x16x128xf32>
    %310 = arith.addf %296, %309 : vector<4x16x128xf32>
    %311 = vector.broadcast %55 : f32 to vector<4x16x128xf32>
    %312 = arith.mulf %311, %304 : vector<4x16x128xf32>
    %313 = arith.addf %299, %312 : vector<4x16x128xf32>
    %c0_108 = arith.constant 0 : index
    %c0_109 = arith.constant 0 : index
    %c0_110 = arith.constant 0 : index
    %c0_111 = arith.constant 0 : index
    %314 = vector.load %arg5[%c0_108, %c0_109, %c0_110, %c0_111] : memref<3x8x16x128xf32, #tpu.memory_space<vmem>>, vector<1x4x16x128xf32>
    %315 = vector.shape_cast %314 : vector<1x4x16x128xf32> to vector<4x16x128xf32>
    %316 = vector.shape_cast %307 : vector<4x16x128xf32> to vector<1x4x16x128xf32>
    tpu.vector_store %arg5[%c0_108, %c0_109, %c0_110, %c0_111], %316 {strides = array<i32>} : memref<3x8x16x128xf32, #tpu.memory_space<vmem>>, vector<1x4x16x128xf32>,
    %c1_112 = arith.constant 1 : index
    %c0_113 = arith.constant 0 : index
    %c0_114 = arith.constant 0 : index
    %c0_115 = arith.constant 0 : index
    %317 = vector.load %arg5[%c1_112, %c0_113, %c0_114, %c0_115] : memref<3x8x16x128xf32, #tpu.memory_space<vmem>>, vector<1x4x16x128xf32>
    %318 = vector.shape_cast %317 : vector<1x4x16x128xf32> to vector<4x16x128xf32>
    %319 = vector.shape_cast %310 : vector<4x16x128xf32> to vector<1x4x16x128xf32>
    tpu.vector_store %arg5[%c1_112, %c0_113, %c0_114, %c0_115], %319 {strides = array<i32>} : memref<3x8x16x128xf32, #tpu.memory_space<vmem>>, vector<1x4x16x128xf32>,
    %c2_116 = arith.constant 2 : index
    %c0_117 = arith.constant 0 : index
    %c0_118 = arith.constant 0 : index
    %c0_119 = arith.constant 0 : index
    %320 = vector.load %arg5[%c2_116, %c0_117, %c0_118, %c0_119] : memref<3x8x16x128xf32, #tpu.memory_space<vmem>>, vector<1x4x16x128xf32>
    %321 = vector.shape_cast %320 : vector<1x4x16x128xf32> to vector<4x16x128xf32>
    %322 = vector.shape_cast %313 : vector<4x16x128xf32> to vector<1x4x16x128xf32>
    tpu.vector_store %arg5[%c2_116, %c0_117, %c0_118, %c0_119], %322 {strides = array<i32>} : memref<3x8x16x128xf32, #tpu.memory_space<vmem>>, vector<1x4x16x128xf32>,
    %323 = vector.broadcast %56 : f32 to vector<4x16x128xf32>
    %324 = vector.broadcast %57 : f32 to vector<4x16x128xf32>
    %325 = vector.broadcast %58 : f32 to vector<4x16x128xf32>
    %c4_i32 = arith.constant 4 : i32
    %326 = arith.addi %1, %c4_i32 : i32
    %c0_i32_120 = arith.constant 0 : i32
    %327 = arith.addi %326, %c0_i32_120 : i32
    %c0_121 = arith.constant 0 : index
    %c0_122 = arith.constant 0 : index
    %328 = arith.index_cast %327 : i32 to index
    %c0_123 = arith.constant 0 : index
    %c0_124 = arith.constant 0 : index
    %329 = vector.load %arg4[%c0_121, %c0_122, %328, %c0_123, %c0_124] : memref<2x3x18x16x128xf32, #tpu.memory_space<vmem>>, vector<1x1x4x16x128xf32>
    %330 = vector.shape_cast %329 : vector<1x1x4x16x128xf32> to vector<4x16x128xf32>
    %331 = vector.broadcast %2 : f32 to vector<4x16x128xf32>
    %332 = arith.mulf %331, %330 : vector<4x16x128xf32>
    %333 = arith.addf %323, %332 : vector<4x16x128xf32>
    %334 = vector.broadcast %20 : f32 to vector<4x16x128xf32>
    %335 = arith.mulf %334, %330 : vector<4x16x128xf32>
    %336 = arith.addf %324, %335 : vector<4x16x128xf32>
    %337 = vector.broadcast %38 : f32 to vector<4x16x128xf32>
    %338 = arith.mulf %337, %330 : vector<4x16x128xf32>
    %339 = arith.addf %325, %338 : vector<4x16x128xf32>
    %c4_i32_125 = arith.constant 4 : i32
    %340 = arith.addi %1, %c4_i32_125 : i32
    %c0_i32_126 = arith.constant 0 : i32
    %341 = arith.addi %340, %c0_i32_126 : i32
    %c0_127 = arith.constant 0 : index
    %c1_128 = arith.constant 1 : index
    %342 = arith.index_cast %341 : i32 to index
    %c0_129 = arith.constant 0 : index
    %c0_130 = arith.constant 0 : index
    %343 = vector.load %arg4[%c0_127, %c1_128, %342, %c0_129, %c0_130] : memref<2x3x18x16x128xf32, #tpu.memory_space<vmem>>, vector<1x1x4x16x128xf32>
    %344 = vector.shape_cast %343 : vector<1x1x4x16x128xf32> to vector<4x16x128xf32>
    %345 = vector.broadcast %3 : f32 to vector<4x16x128xf32>
    %346 = arith.mulf %345, %344 : vector<4x16x128xf32>
    %347 = arith.addf %333, %346 : vector<4x16x128xf32>
    %348 = vector.broadcast %21 : f32 to vector<4x16x128xf32>
    %349 = arith.mulf %348, %344 : vector<4x16x128xf32>
    %350 = arith.addf %336, %349 : vector<4x16x128xf32>
    %351 = vector.broadcast %39 : f32 to vector<4x16x128xf32>
    %352 = arith.mulf %351, %344 : vector<4x16x128xf32>
    %353 = arith.addf %339, %352 : vector<4x16x128xf32>
    %c4_i32_131 = arith.constant 4 : i32
    %354 = arith.addi %1, %c4_i32_131 : i32
    %c0_i32_132 = arith.constant 0 : i32
    %355 = arith.addi %354, %c0_i32_132 : i32
    %c0_133 = arith.constant 0 : index
    %c2_134 = arith.constant 2 : index
    %356 = arith.index_cast %355 : i32 to index
    %c0_135 = arith.constant 0 : index
    %c0_136 = arith.constant 0 : index
    %357 = vector.load %arg4[%c0_133, %c2_134, %356, %c0_135, %c0_136] : memref<2x3x18x16x128xf32, #tpu.memory_space<vmem>>, vector<1x1x4x16x128xf32>
    %358 = vector.shape_cast %357 : vector<1x1x4x16x128xf32> to vector<4x16x128xf32>
    %359 = vector.broadcast %4 : f32 to vector<4x16x128xf32>
    %360 = arith.mulf %359, %358 : vector<4x16x128xf32>
    %361 = arith.addf %347, %360 : vector<4x16x128xf32>
    %362 = vector.broadcast %22 : f32 to vector<4x16x128xf32>
    %363 = arith.mulf %362, %358 : vector<4x16x128xf32>
    %364 = arith.addf %350, %363 : vector<4x16x128xf32>
    %365 = vector.broadcast %40 : f32 to vector<4x16x128xf32>
    %366 = arith.mulf %365, %358 : vector<4x16x128xf32>
    %367 = arith.addf %353, %366 : vector<4x16x128xf32>
    %c4_i32_137 = arith.constant 4 : i32
    %368 = arith.addi %1, %c4_i32_137 : i32
    %c1_i32_138 = arith.constant 1 : i32
    %369 = arith.addi %368, %c1_i32_138 : i32
    %c0_139 = arith.constant 0 : index
    %c0_140 = arith.constant 0 : index
    %370 = arith.index_cast %369 : i32 to index
    %c0_141 = arith.constant 0 : index
    %c0_142 = arith.constant 0 : index
    %371 = vector.load %arg4[%c0_139, %c0_140, %370, %c0_141, %c0_142] : memref<2x3x18x16x128xf32, #tpu.memory_space<vmem>>, vector<1x1x4x16x128xf32>
    %372 = vector.shape_cast %371 : vector<1x1x4x16x128xf32> to vector<4x16x128xf32>
    %373 = vector.broadcast %5 : f32 to vector<4x16x128xf32>
    %374 = arith.mulf %373, %372 : vector<4x16x128xf32>
    %375 = arith.addf %361, %374 : vector<4x16x128xf32>
    %376 = vector.broadcast %23 : f32 to vector<4x16x128xf32>
    %377 = arith.mulf %376, %372 : vector<4x16x128xf32>
    %378 = arith.addf %364, %377 : vector<4x16x128xf32>
    %379 = vector.broadcast %41 : f32 to vector<4x16x128xf32>
    %380 = arith.mulf %379, %372 : vector<4x16x128xf32>
    %381 = arith.addf %367, %380 : vector<4x16x128xf32>
    %c4_i32_143 = arith.constant 4 : i32
    %382 = arith.addi %1, %c4_i32_143 : i32
    %c1_i32_144 = arith.constant 1 : i32
    %383 = arith.addi %382, %c1_i32_144 : i32
    %c0_145 = arith.constant 0 : index
    %c1_146 = arith.constant 1 : index
    %384 = arith.index_cast %383 : i32 to index
    %c0_147 = arith.constant 0 : index
    %c0_148 = arith.constant 0 : index
    %385 = vector.load %arg4[%c0_145, %c1_146, %384, %c0_147, %c0_148] : memref<2x3x18x16x128xf32, #tpu.memory_space<vmem>>, vector<1x1x4x16x128xf32>
    %386 = vector.shape_cast %385 : vector<1x1x4x16x128xf32> to vector<4x16x128xf32>
    %387 = vector.broadcast %6 : f32 to vector<4x16x128xf32>
    %388 = arith.mulf %387, %386 : vector<4x16x128xf32>
    %389 = arith.addf %375, %388 : vector<4x16x128xf32>
    %390 = vector.broadcast %24 : f32 to vector<4x16x128xf32>
    %391 = arith.mulf %390, %386 : vector<4x16x128xf32>
    %392 = arith.addf %378, %391 : vector<4x16x128xf32>
    %393 = vector.broadcast %42 : f32 to vector<4x16x128xf32>
    %394 = arith.mulf %393, %386 : vector<4x16x128xf32>
    %395 = arith.addf %381, %394 : vector<4x16x128xf32>
    %c4_i32_149 = arith.constant 4 : i32
    %396 = arith.addi %1, %c4_i32_149 : i32
    %c1_i32_150 = arith.constant 1 : i32
    %397 = arith.addi %396, %c1_i32_150 : i32
    %c0_151 = arith.constant 0 : index
    %c2_152 = arith.constant 2 : index
    %398 = arith.index_cast %397 : i32 to index
    %c0_153 = arith.constant 0 : index
    %c0_154 = arith.constant 0 : index
    %399 = vector.load %arg4[%c0_151, %c2_152, %398, %c0_153, %c0_154] : memref<2x3x18x16x128xf32, #tpu.memory_space<vmem>>, vector<1x1x4x16x128xf32>
    %400 = vector.shape_cast %399 : vector<1x1x4x16x128xf32> to vector<4x16x128xf32>
    %401 = vector.broadcast %7 : f32 to vector<4x16x128xf32>
    %402 = arith.mulf %401, %400 : vector<4x16x128xf32>
    %403 = arith.addf %389, %402 : vector<4x16x128xf32>
    %404 = vector.broadcast %25 : f32 to vector<4x16x128xf32>
    %405 = arith.mulf %404, %400 : vector<4x16x128xf32>
    %406 = arith.addf %392, %405 : vector<4x16x128xf32>
    %407 = vector.broadcast %43 : f32 to vector<4x16x128xf32>
    %408 = arith.mulf %407, %400 : vector<4x16x128xf32>
    %409 = arith.addf %395, %408 : vector<4x16x128xf32>
    %c4_i32_155 = arith.constant 4 : i32
    %410 = arith.addi %1, %c4_i32_155 : i32
    %c2_i32_156 = arith.constant 2 : i32
    %411 = arith.addi %410, %c2_i32_156 : i32
    %c0_157 = arith.constant 0 : index
    %c0_158 = arith.constant 0 : index
    %412 = arith.index_cast %411 : i32 to index
    %c0_159 = arith.constant 0 : index
    %c0_160 = arith.constant 0 : index
    %413 = vector.load %arg4[%c0_157, %c0_158, %412, %c0_159, %c0_160] : memref<2x3x18x16x128xf32, #tpu.memory_space<vmem>>, vector<1x1x4x16x128xf32>
    %414 = vector.shape_cast %413 : vector<1x1x4x16x128xf32> to vector<4x16x128xf32>
    %415 = vector.broadcast %8 : f32 to vector<4x16x128xf32>
    %416 = arith.mulf %415, %414 : vector<4x16x128xf32>
    %417 = arith.addf %403, %416 : vector<4x16x128xf32>
    %418 = vector.broadcast %26 : f32 to vector<4x16x128xf32>
    %419 = arith.mulf %418, %414 : vector<4x16x128xf32>
    %420 = arith.addf %406, %419 : vector<4x16x128xf32>
    %421 = vector.broadcast %44 : f32 to vector<4x16x128xf32>
    %422 = arith.mulf %421, %414 : vector<4x16x128xf32>
    %423 = arith.addf %409, %422 : vector<4x16x128xf32>
    %c4_i32_161 = arith.constant 4 : i32
    %424 = arith.addi %1, %c4_i32_161 : i32
    %c2_i32_162 = arith.constant 2 : i32
    %425 = arith.addi %424, %c2_i32_162 : i32
    %c0_163 = arith.constant 0 : index
    %c1_164 = arith.constant 1 : index
    %426 = arith.index_cast %425 : i32 to index
    %c0_165 = arith.constant 0 : index
    %c0_166 = arith.constant 0 : index
    %427 = vector.load %arg4[%c0_163, %c1_164, %426, %c0_165, %c0_166] : memref<2x3x18x16x128xf32, #tpu.memory_space<vmem>>, vector<1x1x4x16x128xf32>
    %428 = vector.shape_cast %427 : vector<1x1x4x16x128xf32> to vector<4x16x128xf32>
    %429 = vector.broadcast %9 : f32 to vector<4x16x128xf32>
    %430 = arith.mulf %429, %428 : vector<4x16x128xf32>
    %431 = arith.addf %417, %430 : vector<4x16x128xf32>
    %432 = vector.broadcast %27 : f32 to vector<4x16x128xf32>
    %433 = arith.mulf %432, %428 : vector<4x16x128xf32>
    %434 = arith.addf %420, %433 : vector<4x16x128xf32>
    %435 = vector.broadcast %45 : f32 to vector<4x16x128xf32>
    %436 = arith.mulf %435, %428 : vector<4x16x128xf32>
    %437 = arith.addf %423, %436 : vector<4x16x128xf32>
    %c4_i32_167 = arith.constant 4 : i32
    %438 = arith.addi %1, %c4_i32_167 : i32
    %c2_i32_168 = arith.constant 2 : i32
    %439 = arith.addi %438, %c2_i32_168 : i32
    %c0_169 = arith.constant 0 : index
    %c2_170 = arith.constant 2 : index
    %440 = arith.index_cast %439 : i32 to index
    %c0_171 = arith.constant 0 : index
    %c0_172 = arith.constant 0 : index
    %441 = vector.load %arg4[%c0_169, %c2_170, %440, %c0_171, %c0_172] : memref<2x3x18x16x128xf32, #tpu.memory_space<vmem>>, vector<1x1x4x16x128xf32>
    %442 = vector.shape_cast %441 : vector<1x1x4x16x128xf32> to vector<4x16x128xf32>
    %443 = vector.broadcast %10 : f32 to vector<4x16x128xf32>
    %444 = arith.mulf %443, %442 : vector<4x16x128xf32>
    %445 = arith.addf %431, %444 : vector<4x16x128xf32>
    %446 = vector.broadcast %28 : f32 to vector<4x16x128xf32>
    %447 = arith.mulf %446, %442 : vector<4x16x128xf32>
    %448 = arith.addf %434, %447 : vector<4x16x128xf32>
    %449 = vector.broadcast %46 : f32 to vector<4x16x128xf32>
    %450 = arith.mulf %449, %442 : vector<4x16x128xf32>
    %451 = arith.addf %437, %450 : vector<4x16x128xf32>
    %c4_i32_173 = arith.constant 4 : i32
    %452 = arith.addi %1, %c4_i32_173 : i32
    %c0_i32_174 = arith.constant 0 : i32
    %453 = arith.addi %452, %c0_i32_174 : i32
    %c1_175 = arith.constant 1 : index
    %c0_176 = arith.constant 0 : index
    %454 = arith.index_cast %453 : i32 to index
    %c0_177 = arith.constant 0 : index
    %c0_178 = arith.constant 0 : index
    %455 = vector.load %arg4[%c1_175, %c0_176, %454, %c0_177, %c0_178] : memref<2x3x18x16x128xf32, #tpu.memory_space<vmem>>, vector<1x1x4x16x128xf32>
    %456 = vector.shape_cast %455 : vector<1x1x4x16x128xf32> to vector<4x16x128xf32>
    %457 = vector.broadcast %11 : f32 to vector<4x16x128xf32>
    %458 = arith.mulf %457, %456 : vector<4x16x128xf32>
    %459 = arith.addf %445, %458 : vector<4x16x128xf32>
    %460 = vector.broadcast %29 : f32 to vector<4x16x128xf32>
    %461 = arith.mulf %460, %456 : vector<4x16x128xf32>
    %462 = arith.addf %448, %461 : vector<4x16x128xf32>
    %463 = vector.broadcast %47 : f32 to vector<4x16x128xf32>
    %464 = arith.mulf %463, %456 : vector<4x16x128xf32>
    %465 = arith.addf %451, %464 : vector<4x16x128xf32>
    %c4_i32_179 = arith.constant 4 : i32
    %466 = arith.addi %1, %c4_i32_179 : i32
    %c0_i32_180 = arith.constant 0 : i32
    %467 = arith.addi %466, %c0_i32_180 : i32
    %c1_181 = arith.constant 1 : index
    %c1_182 = arith.constant 1 : index
    %468 = arith.index_cast %467 : i32 to index
    %c0_183 = arith.constant 0 : index
    %c0_184 = arith.constant 0 : index
    %469 = vector.load %arg4[%c1_181, %c1_182, %468, %c0_183, %c0_184] : memref<2x3x18x16x128xf32, #tpu.memory_space<vmem>>, vector<1x1x4x16x128xf32>
    %470 = vector.shape_cast %469 : vector<1x1x4x16x128xf32> to vector<4x16x128xf32>
    %471 = vector.broadcast %12 : f32 to vector<4x16x128xf32>
    %472 = arith.mulf %471, %470 : vector<4x16x128xf32>
    %473 = arith.addf %459, %472 : vector<4x16x128xf32>
    %474 = vector.broadcast %30 : f32 to vector<4x16x128xf32>
    %475 = arith.mulf %474, %470 : vector<4x16x128xf32>
    %476 = arith.addf %462, %475 : vector<4x16x128xf32>
    %477 = vector.broadcast %48 : f32 to vector<4x16x128xf32>
    %478 = arith.mulf %477, %470 : vector<4x16x128xf32>
    %479 = arith.addf %465, %478 : vector<4x16x128xf32>
    %c4_i32_185 = arith.constant 4 : i32
    %480 = arith.addi %1, %c4_i32_185 : i32
    %c0_i32_186 = arith.constant 0 : i32
    %481 = arith.addi %480, %c0_i32_186 : i32
    %c1_187 = arith.constant 1 : index
    %c2_188 = arith.constant 2 : index
    %482 = arith.index_cast %481 : i32 to index
    %c0_189 = arith.constant 0 : index
    %c0_190 = arith.constant 0 : index
    %483 = vector.load %arg4[%c1_187, %c2_188, %482, %c0_189, %c0_190] : memref<2x3x18x16x128xf32, #tpu.memory_space<vmem>>, vector<1x1x4x16x128xf32>
    %484 = vector.shape_cast %483 : vector<1x1x4x16x128xf32> to vector<4x16x128xf32>
    %485 = vector.broadcast %13 : f32 to vector<4x16x128xf32>
    %486 = arith.mulf %485, %484 : vector<4x16x128xf32>
    %487 = arith.addf %473, %486 : vector<4x16x128xf32>
    %488 = vector.broadcast %31 : f32 to vector<4x16x128xf32>
    %489 = arith.mulf %488, %484 : vector<4x16x128xf32>
    %490 = arith.addf %476, %489 : vector<4x16x128xf32>
    %491 = vector.broadcast %49 : f32 to vector<4x16x128xf32>
    %492 = arith.mulf %491, %484 : vector<4x16x128xf32>
    %493 = arith.addf %479, %492 : vector<4x16x128xf32>
    %c4_i32_191 = arith.constant 4 : i32
    %494 = arith.addi %1, %c4_i32_191 : i32
    %c1_i32_192 = arith.constant 1 : i32
    %495 = arith.addi %494, %c1_i32_192 : i32
    %c1_193 = arith.constant 1 : index
    %c0_194 = arith.constant 0 : index
    %496 = arith.index_cast %495 : i32 to index
    %c0_195 = arith.constant 0 : index
    %c0_196 = arith.constant 0 : index
    %497 = vector.load %arg4[%c1_193, %c0_194, %496, %c0_195, %c0_196] : memref<2x3x18x16x128xf32, #tpu.memory_space<vmem>>, vector<1x1x4x16x128xf32>
    %498 = vector.shape_cast %497 : vector<1x1x4x16x128xf32> to vector<4x16x128xf32>
    %499 = vector.broadcast %14 : f32 to vector<4x16x128xf32>
    %500 = arith.mulf %499, %498 : vector<4x16x128xf32>
    %501 = arith.addf %487, %500 : vector<4x16x128xf32>
    %502 = vector.broadcast %32 : f32 to vector<4x16x128xf32>
    %503 = arith.mulf %502, %498 : vector<4x16x128xf32>
    %504 = arith.addf %490, %503 : vector<4x16x128xf32>
    %505 = vector.broadcast %50 : f32 to vector<4x16x128xf32>
    %506 = arith.mulf %505, %498 : vector<4x16x128xf32>
    %507 = arith.addf %493, %506 : vector<4x16x128xf32>
    %c4_i32_197 = arith.constant 4 : i32
    %508 = arith.addi %1, %c4_i32_197 : i32
    %c1_i32_198 = arith.constant 1 : i32
    %509 = arith.addi %508, %c1_i32_198 : i32
    %c1_199 = arith.constant 1 : index
    %c1_200 = arith.constant 1 : index
    %510 = arith.index_cast %509 : i32 to index
    %c0_201 = arith.constant 0 : index
    %c0_202 = arith.constant 0 : index
    %511 = vector.load %arg4[%c1_199, %c1_200, %510, %c0_201, %c0_202] : memref<2x3x18x16x128xf32, #tpu.memory_space<vmem>>, vector<1x1x4x16x128xf32>
    %512 = vector.shape_cast %511 : vector<1x1x4x16x128xf32> to vector<4x16x128xf32>
    %513 = vector.broadcast %15 : f32 to vector<4x16x128xf32>
    %514 = arith.mulf %513, %512 : vector<4x16x128xf32>
    %515 = arith.addf %501, %514 : vector<4x16x128xf32>
    %516 = vector.broadcast %33 : f32 to vector<4x16x128xf32>
    %517 = arith.mulf %516, %512 : vector<4x16x128xf32>
    %518 = arith.addf %504, %517 : vector<4x16x128xf32>
    %519 = vector.broadcast %51 : f32 to vector<4x16x128xf32>
    %520 = arith.mulf %519, %512 : vector<4x16x128xf32>
    %521 = arith.addf %507, %520 : vector<4x16x128xf32>
    %c4_i32_203 = arith.constant 4 : i32
    %522 = arith.addi %1, %c4_i32_203 : i32
    %c1_i32_204 = arith.constant 1 : i32
    %523 = arith.addi %522, %c1_i32_204 : i32
    %c1_205 = arith.constant 1 : index
    %c2_206 = arith.constant 2 : index
    %524 = arith.index_cast %523 : i32 to index
    %c0_207 = arith.constant 0 : index
    %c0_208 = arith.constant 0 : index
    %525 = vector.load %arg4[%c1_205, %c2_206, %524, %c0_207, %c0_208] : memref<2x3x18x16x128xf32, #tpu.memory_space<vmem>>, vector<1x1x4x16x128xf32>
    %526 = vector.shape_cast %525 : vector<1x1x4x16x128xf32> to vector<4x16x128xf32>
    %527 = vector.broadcast %16 : f32 to vector<4x16x128xf32>
    %528 = arith.mulf %527, %526 : vector<4x16x128xf32>
    %529 = arith.addf %515, %528 : vector<4x16x128xf32>
    %530 = vector.broadcast %34 : f32 to vector<4x16x128xf32>
    %531 = arith.mulf %530, %526 : vector<4x16x128xf32>
    %532 = arith.addf %518, %531 : vector<4x16x128xf32>
    %533 = vector.broadcast %52 : f32 to vector<4x16x128xf32>
    %534 = arith.mulf %533, %526 : vector<4x16x128xf32>
    %535 = arith.addf %521, %534 : vector<4x16x128xf32>
    %c4_i32_209 = arith.constant 4 : i32
    %536 = arith.addi %1, %c4_i32_209 : i32
    %c2_i32_210 = arith.constant 2 : i32
    %537 = arith.addi %536, %c2_i32_210 : i32
    %c1_211 = arith.constant 1 : index
    %c0_212 = arith.constant 0 : index
    %538 = arith.index_cast %537 : i32 to index
    %c0_213 = arith.constant 0 : index
    %c0_214 = arith.constant 0 : index
    %539 = vector.load %arg4[%c1_211, %c0_212, %538, %c0_213, %c0_214] : memref<2x3x18x16x128xf32, #tpu.memory_space<vmem>>, vector<1x1x4x16x128xf32>
    %540 = vector.shape_cast %539 : vector<1x1x4x16x128xf32> to vector<4x16x128xf32>
    %541 = vector.broadcast %17 : f32 to vector<4x16x128xf32>
    %542 = arith.mulf %541, %540 : vector<4x16x128xf32>
    %543 = arith.addf %529, %542 : vector<4x16x128xf32>
    %544 = vector.broadcast %35 : f32 to vector<4x16x128xf32>
    %545 = arith.mulf %544, %540 : vector<4x16x128xf32>
    %546 = arith.addf %532, %545 : vector<4x16x128xf32>
    %547 = vector.broadcast %53 : f32 to vector<4x16x128xf32>
    %548 = arith.mulf %547, %540 : vector<4x16x128xf32>
    %549 = arith.addf %535, %548 : vector<4x16x128xf32>
    %c4_i32_215 = arith.constant 4 : i32
    %550 = arith.addi %1, %c4_i32_215 : i32
    %c2_i32_216 = arith.constant 2 : i32
    %551 = arith.addi %550, %c2_i32_216 : i32
    %c1_217 = arith.constant 1 : index
    %c1_218 = arith.constant 1 : index
    %552 = arith.index_cast %551 : i32 to index
    %c0_219 = arith.constant 0 : index
    %c0_220 = arith.constant 0 : index
    %553 = vector.load %arg4[%c1_217, %c1_218, %552, %c0_219, %c0_220] : memref<2x3x18x16x128xf32, #tpu.memory_space<vmem>>, vector<1x1x4x16x128xf32>
    %554 = vector.shape_cast %553 : vector<1x1x4x16x128xf32> to vector<4x16x128xf32>
    %555 = vector.broadcast %18 : f32 to vector<4x16x128xf32>
    %556 = arith.mulf %555, %554 : vector<4x16x128xf32>
    %557 = arith.addf %543, %556 : vector<4x16x128xf32>
    %558 = vector.broadcast %36 : f32 to vector<4x16x128xf32>
    %559 = arith.mulf %558, %554 : vector<4x16x128xf32>
    %560 = arith.addf %546, %559 : vector<4x16x128xf32>
    %561 = vector.broadcast %54 : f32 to vector<4x16x128xf32>
    %562 = arith.mulf %561, %554 : vector<4x16x128xf32>
    %563 = arith.addf %549, %562 : vector<4x16x128xf32>
    %c4_i32_221 = arith.constant 4 : i32
    %564 = arith.addi %1, %c4_i32_221 : i32
    %c2_i32_222 = arith.constant 2 : i32
    %565 = arith.addi %564, %c2_i32_222 : i32
    %c1_223 = arith.constant 1 : index
    %c2_224 = arith.constant 2 : index
    %566 = arith.index_cast %565 : i32 to index
    %c0_225 = arith.constant 0 : index
    %c0_226 = arith.constant 0 : index
    %567 = vector.load %arg4[%c1_223, %c2_224, %566, %c0_225, %c0_226] : memref<2x3x18x16x128xf32, #tpu.memory_space<vmem>>, vector<1x1x4x16x128xf32>
    %568 = vector.shape_cast %567 : vector<1x1x4x16x128xf32> to vector<4x16x128xf32>
    %569 = vector.broadcast %19 : f32 to vector<4x16x128xf32>
    %570 = arith.mulf %569, %568 : vector<4x16x128xf32>
    %571 = arith.addf %557, %570 : vector<4x16x128xf32>
    %572 = vector.broadcast %37 : f32 to vector<4x16x128xf32>
    %573 = arith.mulf %572, %568 : vector<4x16x128xf32>
    %574 = arith.addf %560, %573 : vector<4x16x128xf32>
    %575 = vector.broadcast %55 : f32 to vector<4x16x128xf32>
    %576 = arith.mulf %575, %568 : vector<4x16x128xf32>
    %577 = arith.addf %563, %576 : vector<4x16x128xf32>
    %c0_227 = arith.constant 0 : index
    %c4_228 = arith.constant 4 : index
    %c0_229 = arith.constant 0 : index
    %c0_230 = arith.constant 0 : index
    %578 = vector.load %arg5[%c0_227, %c4_228, %c0_229, %c0_230] : memref<3x8x16x128xf32, #tpu.memory_space<vmem>>, vector<1x4x16x128xf32>
    %579 = vector.shape_cast %578 : vector<1x4x16x128xf32> to vector<4x16x128xf32>
    %580 = vector.shape_cast %571 : vector<4x16x128xf32> to vector<1x4x16x128xf32>
    tpu.vector_store %arg5[%c0_227, %c4_228, %c0_229, %c0_230], %580 {strides = array<i32>} : memref<3x8x16x128xf32, #tpu.memory_space<vmem>>, vector<1x4x16x128xf32>,
    %c1_231 = arith.constant 1 : index
    %c4_232 = arith.constant 4 : index
    %c0_233 = arith.constant 0 : index
    %c0_234 = arith.constant 0 : index
    %581 = vector.load %arg5[%c1_231, %c4_232, %c0_233, %c0_234] : memref<3x8x16x128xf32, #tpu.memory_space<vmem>>, vector<1x4x16x128xf32>
    %582 = vector.shape_cast %581 : vector<1x4x16x128xf32> to vector<4x16x128xf32>
    %583 = vector.shape_cast %574 : vector<4x16x128xf32> to vector<1x4x16x128xf32>
    tpu.vector_store %arg5[%c1_231, %c4_232, %c0_233, %c0_234], %583 {strides = array<i32>} : memref<3x8x16x128xf32, #tpu.memory_space<vmem>>, vector<1x4x16x128xf32>,
    %c2_235 = arith.constant 2 : index
    %c4_236 = arith.constant 4 : index
    %c0_237 = arith.constant 0 : index
    %c0_238 = arith.constant 0 : index
    %584 = vector.load %arg5[%c2_235, %c4_236, %c0_237, %c0_238] : memref<3x8x16x128xf32, #tpu.memory_space<vmem>>, vector<1x4x16x128xf32>
    %585 = vector.shape_cast %584 : vector<1x4x16x128xf32> to vector<4x16x128xf32>
    %586 = vector.shape_cast %577 : vector<4x16x128xf32> to vector<1x4x16x128xf32>
    tpu.vector_store %arg5[%c2_235, %c4_236, %c0_237, %c0_238], %586 {strides = array<i32>} : memref<3x8x16x128xf32, #tpu.memory_space<vmem>>, vector<1x4x16x128xf32>,
    return
  }
  func.func @transform_0(%arg0: i32, %arg1: i32) -> i32 {
    %c0_i32 = arith.constant 0 : i32
    %c0_i32_0 = arith.constant 0 : i32
    return %c0_i32 : i32
  }
  func.func @transform_1(%arg0: i32, %arg1: i32) -> i32 {
    %c0_i32 = arith.constant 0 : i32
    %c0_i32_0 = arith.constant 0 : i32
    return %c0_i32 : i32
  }
  func.func @transform_2(%arg0: i32, %arg1: i32) -> (i32, i32, i32, i32, i32) {
    %c0_i32 = arith.constant 0 : i32
    %c0_i32_0 = arith.constant 0 : i32
    %c0_i32_1 = arith.constant 0 : i32
    %c0_i32_2 = arith.constant 0 : i32
    %c0_i32_3 = arith.constant 0 : i32
    return %c0_i32, %c0_i32_0, %c0_i32_1, %c0_i32_2, %arg1 : i32, i32, i32, i32, i32
  }
  func.func @transform_3(%arg0: i32, %arg1: i32) -> (i32, i32, i32, i32) {
    %c0_i32 = arith.constant 0 : i32
    %c0_i32_0 = arith.constant 0 : i32
    %c0_i32_1 = arith.constant 0 : i32
    return %c0_i32, %arg0, %c0_i32_0, %arg1 : i32, i32, i32, i32
  }
}

</mosaic_0001>

<llo_original>
// kernel: tpu_custom_call.1
$region0: #{tpu_custom_call.1}
  #allocation0 [shape = 'u32[]', space=smem, size = 0x4, offset = 0x4, fixed_abs, tag = 'smem constant byte address 0x4 - core index']
  #allocation1 [shape = 'u32[144,128]{1,0:T(1,128)}', space=vmem, size = 0x12000, scoped, tag = 'internal scratch']
  #allocation10 [shape = 's32[]', space=sflag, size = 0x4, offset = 0, fixed_abs, tag = 'sflag constant byte address 0x0 - dummy sync flag']
  %s0 = inlined_call_operand.hbm [shape: f32[54], index: 0, kind: input, shape index: {}]
  %s1 = inlined_call_operand.vmem [shape: f32[3], index: 1, kind: input, shape index: {}]
  %s2 = inlined_call_operand.hbm [shape: f32[2,3,18,16,128], index: 2, kind: input, shape index: {}]
  %s3 = inlined_call_operand.hbm [shape: f32[3,16,16,128], index: 3, kind: output, shape index: {}]
  %s4 = sld [smem:[#allocation0]]
  $region57: #{tpu_custom_call.1} parent=0
    _
  %s6 = ssub.s32 1, %s4
  %s7 = scalar_select 0, %s6, %s4
  $region1: #{tpu_custom_call.1} parent=0
    #allocation2 [shape = 'u8[512]{0}', space=smem, size = 0x200, scoped, tag = 'input window, operand 0, single buffered']
    #allocation3 [shape = 's32[2]{0}', space=sflag, size = 0x8, scoped, tag = 'scoped memory for tpu_custom_call.1']
    #allocation4 [shape = 's32[2]{0}', space=sflag, size = 0x8, scoped, tag = 'scoped memory for tpu_custom_call.1']
    #allocation5 [shape = 's32[2]{0}', space=sflag, size = 0x8, scoped, tag = 'scoped memory for tpu_custom_call.1']
    #allocation6 [shape = 's32[2]{0}', space=sflag, size = 0x8, scoped, tag = 'scoped memory for tpu_custom_call.1']
    #allocation7 [shape = 'u8[512]{0}', space=smem, size = 0x200, scoped, tag = 'input window, operand 1, single buffered']
    #allocation8 [shape = 'u8[884736]{0}', space=vmem, size = 0xd8000, scoped, tag = 'input window, operand 2, single buffered']
    #allocation9 [shape = 'u8[393216]{0}', space=vmem, size = 0x60000, scoped, tag = 'output window, operand 0']
    %8 = vsyncpa [#allocation5], 0
    %9 = vsyncpa [#allocation6], 0
    %10 = vsyncpa [#allocation3], 0
    %11 = vsyncpa [#allocation4], 0
    %s12 = scalar_lea.sflag [#allocation4], 1
    %13 = vsyncpa %s12, 0
    loop: start=0, step=1, limit=4
    $region2: #{tpu_custom_call.1} parent=1 // loop_pre_header
      _
    $region3: #{tpu_custom_call.1} parent=1 // loop_header
      %s15 = sphi 0, %s19
      %p16 = scmp.ge.s32.totalorder %s15, 4
      %s22 = sphi 0, %s34
      %s23 = sphi 0, %s30
      %s24 = sphi 0, %s22
      %s25 = sphi 0, %s23
      %s26 = sphi 0, %s24
      %s27 = sphi 0, %s25
      %s35 = sphi 0, %s35
      %s37 = sphi 0, %s35
      %s38 = sphi 0, %s37
      %s52 = sphi 0, %s38
      %s56 = sphi 0, %s56
      %s58 = sphi 0, %s56
      %s59 = sphi 0, %s58
      %s73 = sphi 0, %s59
      %s79 = sphi 0, %s81
      %s82 = sphi 0, %s79
      %s83 = sphi 0, %s82
      %s99 = sphi 0, %s83
      %s107 = sphi 0, %s109
      %s110 = sphi 0, %s107
      %s111 = sphi 0, %s110
      %s127 = sphi 0, %s111
    $region4: #{tpu_custom_call.1} parent=1 // loop_header_branch
      %18 = sbr.rel (%p16) target = $region8
    $region5: #{tpu_custom_call.1} parent=1 // loop_body
      %s20 = ssub.s32 %s15, 1
      %s21 = ssub.s32 %s15, 2
      %s28 = sadd.s32 1, %s23
      %p29 = scmp.ge.s32.totalorder %s28, 1
      %s30 = scalar_select %p29, 0, %s28
      %s31 = sadd.s32 1, %s22
      %s32 = scalar_select %p29, %s31, %s22
      %p33 = scmp.ge.s32.totalorder %s32, 2
      %s34 = scalar_select %p33, 0, %s32
      %s36 = sadd.s32 %s35, 1
      %p39 = scmp.eq.s32.totalorder %s15, 1
      %p40 = scmp.ne.s32.totalorder %s35, %s37
      %p41 = scmp.eq.s32.totalorder %s15, 0
      %p42 = por %p40, %p41
      %p43 = scmp.ne.s32.totalorder %s35, %s37
      %p44 = scmp.eq.s32.totalorder %s20, 1
      %p45 = por %p43, %p44
      %p46 = scmp.ne.s32.totalorder %s37, %s38
      %p47 = scmp.eq.s32.totalorder %s20, 0
      %p48 = por %p46, %p47
      %p49 = scmp.ne.s32.totalorder %s37, %s38
      %p50 = scmp.eq.s32.totalorder %s21, 1
      %p51 = por %p49, %p50
      %p53 = scmp.ne.s32.totalorder %s38, %s52
      %p54 = scmp.eq.s32.totalorder %s21, 0
      %p55 = por %p53, %p54
      %s57 = sadd.s32 %s56, 1
      %p60 = scmp.eq.s32.totalorder %s15, 1
      %p61 = scmp.ne.s32.totalorder %s56, %s58
      %p62 = scmp.eq.s32.totalorder %s15, 0
      %p63 = por %p61, %p62
      %p64 = scmp.ne.s32.totalorder %s56, %s58
      %p65 = scmp.eq.s32.totalorder %s20, 1
      %p66 = por %p64, %p65
      %p67 = scmp.ne.s32.totalorder %s58, %s59
      %p68 = scmp.eq.s32.totalorder %s20, 0
      %p69 = por %p67, %p68
      %p70 = scmp.ne.s32.totalorder %s58, %s59
      %p71 = scmp.eq.s32.totalorder %s21, 1
      %p72 = por %p70, %p71
      %p74 = scmp.ne.s32.totalorder %s59, %s73
      %p75 = scmp.eq.s32.totalorder %s21, 0
      %p76 = por %p74, %p75
      %s77 = ssub.s32 %s23, %s30
      %p78 = scmp.eq.s32.totalorder %s77, 0
      %s80 = sadd.s32 %s79, 1
      %s81 = scalar_select %p78, %s79, %s80
      %p84 = pneg %p78
      %p85 = scmp.eq.s32.totalorder %s15, 1
      %p86 = por %p84, %p85
      %p87 = scmp.ne.s32.totalorder %s79, %s82
      %p88 = scmp.eq.s32.totalorder %s15, 0
      %p89 = por %p87, %p88
      %p90 = scmp.ne.s32.totalorder %s79, %s82
      %p91 = scmp.eq.s32.totalorder %s20, 1
      %p92 = por %p90, %p91
      %p93 = scmp.ne.s32.totalorder %s82, %s83
      %p94 = scmp.eq.s32.totalorder %s20, 0
      %p95 = por %p93, %p94
      %p96 = scmp.ne.s32.totalorder %s82, %s83
      %p97 = scmp.eq.s32.totalorder %s21, 1
      %p98 = por %p96, %p97
      %p100 = scmp.ne.s32.totalorder %s83, %s99
      %p101 = scmp.eq.s32.totalorder %s21, 0
      %p102 = por %p100, %p101
      %s103 = ssub.s32 %s22, %s34
      %s104 = ssub.s32 %s23, %s30
      %s105 = sor.u32 %s103, %s104
      %p106 = scmp.eq.s32.totalorder %s105, 0
      %s108 = sadd.s32 %s107, 1
      %s109 = scalar_select %p106, %s107, %s108
      %p112 = pneg %p106
      %p113 = scmp.eq.s32.totalorder %s15, 1
      %p114 = por %p112, %p113
      %p115 = scmp.ne.s32.totalorder %s107, %s110
      %p116 = scmp.eq.s32.totalorder %s15, 0
      %p117 = por %p115, %p116
      %p118 = scmp.ne.s32.totalorder %s107, %s110
      %p119 = scmp.eq.s32.totalorder %s20, 1
      %p120 = por %p118, %p119
      %p121 = scmp.ne.s32.totalorder %s110, %s111
      %p122 = scmp.eq.s32.totalorder %s20, 0
      %p123 = por %p121, %p122
      %p124 = scmp.ne.s32.totalorder %s110, %s111
      %p125 = scmp.eq.s32.totalorder %s21, 1
      %p126 = por %p124, %p125
      %p128 = scmp.ne.s32.totalorder %s111, %s127
      %p129 = scmp.eq.s32.totalorder %s21, 0
      %p130 = por %p128, %p129
      %p131 = scmp.le.s32.totalorder 1, %s15
      %p132 = scmp.lt.s32.totalorder %s15, 3
      %p133 = pnand %p131, %p132
      %p134 = pneg %p133
      // Predicated region
      $region9: #{tpu_custom_call.1} parent=5 // pred_check
        _
      $region10: #{tpu_custom_call.1} parent=5 // pred_check_branch
        %136 = sbr.rel (%p133) target = $region12
      $region11: #{tpu_custom_call.1} parent=5 // pred_region
        %s137 = ssub.s32 %s15, 1
        // Predicated region
        $region13: #{tpu_custom_call.1} parent=11 // pred_check
          %p138 = pneg %p48
        $region14: #{tpu_custom_call.1} parent=11 // pred_check_branch
          %140 = sbr.rel (%p138) target = $region16
        $region15: #{tpu_custom_call.1} parent=11 // pred_region
          %s142 = ssub.s32 16, 16
          %143 = vsyncadd [#allocation5], %s142
          %146 = dma.hbm_to_smem %s0, 16, [#allocation2], [#allocation5]
        $region16: #{tpu_custom_call.1} parent=11 // pred_fallthru
          _
        // Predicated region
        $region17: #{tpu_custom_call.1} parent=11 // pred_check
          %p147 = pneg %p69
        $region18: #{tpu_custom_call.1} parent=11 // pred_check_branch
          %149 = sbr.rel (%p147) target = $region20
        $region19: #{tpu_custom_call.1} parent=11 // pred_region
          %s151 = ssub.s32 16, 16
          %152 = vsyncadd [#allocation6], %s151
          %s154 = sshll.u32 %s1, 4
          %s155 = int_to_ptr.vmem [resolvable:$true] %s154
          %157 = dma.vmem_to_smem %s155, 16, [#allocation7], [#allocation6]
        $region20: #{tpu_custom_call.1} parent=11 // pred_fallthru
          _
        // Predicated region
        $region21: #{tpu_custom_call.1} parent=11 // pred_check
          %p158 = pneg %p95
        $region22: #{tpu_custom_call.1} parent=11 // pred_check_branch
          %160 = sbr.rel (%p158) target = $region24
        $region23: #{tpu_custom_call.1} parent=11 // pred_region
          %s162 = ssub.s32 27648, 27648
          %163 = vsyncadd [#allocation3], %s162
          %s164 = smul.addr %s25, 128
          %s165 = scalar_lea.hbm %s2, %s164
          %s166 = sshll.u32 [#allocation8], 4
          %s167 = int_to_ptr.vmem [resolvable:$true] %s166
          %172 = dma.hbm_to_vmem [thread:$0]  %s165, 27648, %s167, [#allocation3], 128, 128, 8
        $region24: #{tpu_custom_call.1} parent=11 // pred_fallthru
          _
      $region12: #{tpu_custom_call.1} parent=5 // pred_fallthru
        _
      %p173 = scmp.lt.s32.totalorder %s15, 2
      // Predicated region
      $region25: #{tpu_custom_call.1} parent=5 // pred_check
        %p174 = pneg %p173
      $region26: #{tpu_custom_call.1} parent=5 // pred_check_branch
        %176 = sbr.rel (%p174) target = $region28
      $region27: #{tpu_custom_call.1} parent=5 // pred_region
        _
      $region28: #{tpu_custom_call.1} parent=5 // pred_fallthru
        _
      %p177 = scmp.le.s32.totalorder 1, %s15
      %p178 = scmp.lt.s32.totalorder %s15, 3
      %p179 = pnand %p177, %p178
      %p180 = pneg %p179
      // Predicated region
      $region29: #{tpu_custom_call.1} parent=5 // pred_check
        _
      $region30: #{tpu_custom_call.1} parent=5 // pred_check_branch
        %182 = sbr.rel (%p179) target = $region32
      $region31: #{tpu_custom_call.1} parent=5 // pred_region
        %s183 = ssub.s32 %s15, 1
        // Predicated region
        $region33: #{tpu_custom_call.1} parent=31 // pred_check
          %p184 = pneg %p48
        $region34: #{tpu_custom_call.1} parent=31 // pred_check_branch
          %186 = sbr.rel (%p184) target = $region36
        $region35: #{tpu_custom_call.1} parent=31 // pred_region
          %187 = dma.done [#allocation5], 16
        $region36: #{tpu_custom_call.1} parent=31 // pred_fallthru
          _
        // Predicated region
        $region37: #{tpu_custom_call.1} parent=31 // pred_check
          %p188 = pneg %p69
        $region38: #{tpu_custom_call.1} parent=31 // pred_check_branch
          %190 = sbr.rel (%p188) target = $region40
        $region39: #{tpu_custom_call.1} parent=31 // pred_region
          %191 = dma.done [#allocation6], 16
        $region40: #{tpu_custom_call.1} parent=31 // pred_fallthru
          _
        // Predicated region
        $region41: #{tpu_custom_call.1} parent=31 // pred_check
          %p192 = pneg %p95
        $region42: #{tpu_custom_call.1} parent=31 // pred_check_branch
          %194 = sbr.rel (%p192) target = $region44
        $region43: #{tpu_custom_call.1} parent=31 // pred_region
          %195 = dma.done [#allocation3], 27648
        $region44: #{tpu_custom_call.1} parent=31 // pred_fallthru
          _
        %196 = sfence
        %p197 = pneg %p48
        %p198 = pneg %p45
        %p199 = pneg %p69
        %p200 = pneg %p66
        %p201 = pneg %p95
        %p202 = pneg %p92
        %p203 = pneg %p123
        %p204 = pneg %p120
        %s205 = sand.u32 %s110, 1
        %s206 = scalar_lea.sflag [#allocation4], %s205
        %s207 = sand.u32 %s110, 1
        %s208 = smul.addr %s207, 384
        %s209 = scalar_lea.vmem [#allocation9], %s208
        %s210 = smul.u32 8, %s24
        %s211 = smul.u32 %s24, 8
        %s212 = sld [smem:[#allocation2]]
        %s213 = sld [smem:[#allocation2 + $0x1]]
        %s214 = sld [smem:[#allocation2 + $0x2]]
        %s215 = sld [smem:[#allocation2 + $0x3]]
        %s216 = sld [smem:[#allocation2 + $0x4]]
        %s217 = sld [smem:[#allocation2 + $0x5]]
        %s218 = sld [smem:[#allocation2 + $0x6]]
        %s219 = sld [smem:[#allocation2 + $0x7]]
        %s220 = sld [smem:[#allocation2 + $0x8]]
        %s221 = sld [smem:[#allocation2 + $0x9]]
        %s222 = sld [smem:[#allocation2 + $0xa]]
        %s223 = sld [smem:[#allocation2 + $0xb]]
        %s224 = sld [smem:[#allocation2 + $0xc]]
        %s225 = sld [smem:[#allocation2 + $0xd]]
        %s226 = sld [smem:[#allocation2 + $0xe]]
        %s227 = sld [smem:[#allocation2 + $0xf]]
        %s228 = sld [smem:[#allocation2 + $0x10]]
        %s229 = sld [smem:[#allocation2 + $0x11]]
        %s230 = sld [smem:[#allocation2 + $0x12]]
        %s231 = sld [smem:[#allocation2 + $0x13]]
        %s232 = sld [smem:[#allocation2 + $0x14]]
        %s233 = sld [smem:[#allocation2 + $0x15]]
        %s234 = sld [smem:[#allocation2 + $0x16]]
        %s235 = sld [smem:[#allocation2 + $0x17]]
        %s236 = sld [smem:[#allocation2 + $0x18]]
        %s237 = sld [smem:[#allocation2 + $0x19]]
        %s238 = sld [smem:[#allocation2 + $0x1a]]
        %s239 = sld [smem:[#allocation2 + $0x1b]]
        %s240 = sld [smem:[#allocation2 + $0x1c]]
        %s241 = sld [smem:[#allocation2 + $0x1d]]
        %s242 = sld [smem:[#allocation2 + $0x1e]]
        %s243 = sld [smem:[#allocation2 + $0x1f]]
        %s244 = sld [smem:[#allocation2 + $0x20]]
        %s245 = sld [smem:[#allocation2 + $0x21]]
        %s246 = sld [smem:[#allocation2 + $0x22]]
        %s247 = sld [smem:[#allocation2 + $0x23]]
        %s248 = sld [smem:[#allocation2 + $0x24]]
        %s249 = sld [smem:[#allocation2 + $0x25]]
        %s250 = sld [smem:[#allocation2 + $0x26]]
        %s251 = sld [smem:[#allocation2 + $0x27]]
        %s252 = sld [smem:[#allocation2 + $0x28]]
        %s253 = sld [smem:[#allocation2 + $0x29]]
        %s254 = sld [smem:[#allocation2 + $0x2a]]
        %s255 = sld [smem:[#allocation2 + $0x2b]]
        %s256 = sld [smem:[#allocation2 + $0x2c]]
        %s257 = sld [smem:[#allocation2 + $0x2d]]
        %s258 = sld [smem:[#allocation2 + $0x2e]]
        %s259 = sld [smem:[#allocation2 + $0x2f]]
        %s260 = sld [smem:[#allocation2 + $0x30]]
        %s261 = sld [smem:[#allocation2 + $0x31]]
        %s262 = sld [smem:[#allocation2 + $0x32]]
        %s263 = sld [smem:[#allocation2 + $0x33]]
        %s264 = sld [smem:[#allocation2 + $0x34]]
        %s265 = sld [smem:[#allocation2 + $0x35]]
        %s266 = sld [smem:[#allocation7]]
        %s267 = sld [smem:[#allocation7 + $0x1]]
        %s268 = sld [smem:[#allocation7 + $0x2]]
        %v269 = vstv %s266
        %v270 = vstv %s267
        %v271 = vstv %s268
        %s272 = smul.u32 %s211, 16
        %s273 = scalar_lea.vmem [#allocation8], %s272
        %v274 = vld [vmem:[%s273] sm:$0xff]
        %v275 = vld [vmem:[%s273 + $0x8] sm:$0xff]
        %v276 = vld [vmem:[%s273 + $0x10] sm:$0xff]
        %v277 = vld [vmem:[%s273 + $0x18] sm:$0xff]
        %v278 = vld [vmem:[%s273 + $0x20] sm:$0xff]
        %v279 = vld [vmem:[%s273 + $0x28] sm:$0xff]
        %v280 = vld [vmem:[%s273 + $0x30] sm:$0xff]
        %v281 = vld [vmem:[%s273 + $0x38] sm:$0xff]
        %v282 = vstv %s212
        %v283 = vmul.f32 %v282, %v274
        %v284 = vmul.f32 %v282, %v275
        %v285 = vmul.f32 %v282, %v276
        %v286 = vmul.f32 %v282, %v277
        %v287 = vmul.f32 %v282, %v278
        %v288 = vmul.f32 %v282, %v279
        %v289 = vmul.f32 %v282, %v280
        %v290 = vmul.f32 %v282, %v281
        %v291 = vadd.f32 %v269, %v283
        %v292 = vadd.f32 %v269, %v284
        %v293 = vadd.f32 %v269, %v285
        %v294 = vadd.f32 %v269, %v286
        %v295 = vadd.f32 %v269, %v287
        %v296 = vadd.f32 %v269, %v288
        %v297 = vadd.f32 %v269, %v289
        %v298 = vadd.f32 %v269, %v290
        %v299 = vstv %s230
        %v300 = vmul.f32 %v299, %v274
        %v301 = vmul.f32 %v299, %v275
        %v302 = vmul.f32 %v299, %v276
        %v303 = vmul.f32 %v299, %v277
        %v304 = vmul.f32 %v299, %v278
        %v305 = vmul.f32 %v299, %v279
        %v306 = vmul.f32 %v299, %v280
        %v307 = vmul.f32 %v299, %v281
        %v308 = vadd.f32 %v270, %v300
        %v309 = vadd.f32 %v270, %v301
        %v310 = vadd.f32 %v270, %v302
        %v311 = vadd.f32 %v270, %v303
        %v312 = vadd.f32 %v270, %v304
        %v313 = vadd.f32 %v270, %v305
        %v314 = vadd.f32 %v270, %v306
        %v315 = vadd.f32 %v270, %v307
        %v316 = vstv %s248
        %v317 = vmul.f32 %v316, %v274
        %v318 = vmul.f32 %v316, %v275
        %v319 = vmul.f32 %v316, %v276
        %v320 = vmul.f32 %v316, %v277
        %v321 = vmul.f32 %v316, %v278
        %v322 = vmul.f32 %v316, %v279
        %v323 = vmul.f32 %v316, %v280
        %v324 = vmul.f32 %v316, %v281
        %v325 = vadd.f32 %v271, %v317
        %v326 = vadd.f32 %v271, %v318
        %v327 = vadd.f32 %v271, %v319
        %v328 = vadd.f32 %v271, %v320
        %v329 = vadd.f32 %v271, %v321
        %v330 = vadd.f32 %v271, %v322
        %v331 = vadd.f32 %v271, %v323
        %v332 = vadd.f32 %v271, %v324
        %s333 = sadd.s32 %s272, 288
        %s334 = scalar_lea.vmem [#allocation8], %s333
        %v335 = vld [vmem:[%s334] sm:$0xff]
        %v336 = vld [vmem:[%s334 + $0x8] sm:$0xff]
        %v337 = vld [vmem:[%s334 + $0x10] sm:$0xff]
        %v338 = vld [vmem:[%s334 + $0x18] sm:$0xff]
        %v339 = vld [vmem:[%s334 + $0x20] sm:$0xff]
        %v340 = vld [vmem:[%s334 + $0x28] sm:$0xff]
        %v341 = vld [vmem:[%s334 + $0x30] sm:$0xff]
        %v342 = vld [vmem:[%s334 + $0x38] sm:$0xff]
        %v343 = vstv %s213
        %v344 = vmul.f32 %v343, %v335
        %v345 = vmul.f32 %v343, %v336
        %v346 = vmul.f32 %v343, %v337
        %v347 = vmul.f32 %v343, %v338
        %v348 = vmul.f32 %v343, %v339
        %v349 = vmul.f32 %v343, %v340
        %v350 = vmul.f32 %v343, %v341
        %v351 = vmul.f32 %v343, %v342
        %v352 = vadd.f32 %v291, %v344
        %v353 = vadd.f32 %v292, %v345
        %v354 = vadd.f32 %v293, %v346
        %v355 = vadd.f32 %v294, %v347
        %v356 = vadd.f32 %v295, %v348
        %v357 = vadd.f32 %v296, %v349
        %v358 = vadd.f32 %v297, %v350
        %v359 = vadd.f32 %v298, %v351
        %v360 = vstv %s231
        %v361 = vmul.f32 %v360, %v335
        %v362 = vmul.f32 %v360, %v336
        %v363 = vmul.f32 %v360, %v337
        %v364 = vmul.f32 %v360, %v338
        %v365 = vmul.f32 %v360, %v339
        %v366 = vmul.f32 %v360, %v340
        %v367 = vmul.f32 %v360, %v341
        %v368 = vmul.f32 %v360, %v342
        %v369 = vadd.f32 %v308, %v361
        %v370 = vadd.f32 %v309, %v362
        %v371 = vadd.f32 %v310, %v363
        %v372 = vadd.f32 %v311, %v364
        %v373 = vadd.f32 %v312, %v365
        %v374 = vadd.f32 %v313, %v366
        %v375 = vadd.f32 %v314, %v367
        %v376 = vadd.f32 %v315, %v368
        %v377 = vstv %s249
        %v378 = vmul.f32 %v377, %v335
        %v379 = vmul.f32 %v377, %v336
        %v380 = vmul.f32 %v377, %v337
        %v381 = vmul.f32 %v377, %v338
        %v382 = vmul.f32 %v377, %v339
        %v383 = vmul.f32 %v377, %v340
        %v384 = vmul.f32 %v377, %v341
        %v385 = vmul.f32 %v377, %v342
        %v386 = vadd.f32 %v325, %v378
        %v387 = vadd.f32 %v326, %v379
        %v388 = vadd.f32 %v327, %v380
        %v389 = vadd.f32 %v328, %v381
        %v390 = vadd.f32 %v329, %v382
        %v391 = vadd.f32 %v330, %v383
        %v392 = vadd.f32 %v331, %v384
        %v393 = vadd.f32 %v332, %v385
        %s394 = sadd.s32 %s272, 576
        %s395 = scalar_lea.vmem [#allocation8], %s394
        %v396 = vld [vmem:[%s395] sm:$0xff]
        %v397 = vld [vmem:[%s395 + $0x8] sm:$0xff]
        %v398 = vld [vmem:[%s395 + $0x10] sm:$0xff]
        %v399 = vld [vmem:[%s395 + $0x18] sm:$0xff]
        %v400 = vld [vmem:[%s395 + $0x20] sm:$0xff]
        %v401 = vld [vmem:[%s395 + $0x28] sm:$0xff]
        %v402 = vld [vmem:[%s395 + $0x30] sm:$0xff]
        %v403 = vld [vmem:[%s395 + $0x38] sm:$0xff]
        %v404 = vstv %s214
        %v405 = vmul.f32 %v404, %v396
        %v406 = vmul.f32 %v404, %v397
        %v407 = vmul.f32 %v404, %v398
        %v408 = vmul.f32 %v404, %v399
        %v409 = vmul.f32 %v404, %v400
        %v410 = vmul.f32 %v404, %v401
        %v411 = vmul.f32 %v404, %v402
        %v412 = vmul.f32 %v404, %v403
        %v413 = vadd.f32 %v352, %v405
        %v414 = vadd.f32 %v353, %v406
        %v415 = vadd.f32 %v354, %v407
        %v416 = vadd.f32 %v355, %v408
        %v417 = vadd.f32 %v356, %v409
        %v418 = vadd.f32 %v357, %v410
        %v419 = vadd.f32 %v358, %v411
        %v420 = vadd.f32 %v359, %v412
        %v421 = vstv %s232
        %v422 = vmul.f32 %v421, %v396
        %v423 = vmul.f32 %v421, %v397
        %v424 = vmul.f32 %v421, %v398
        %v425 = vmul.f32 %v421, %v399
        %v426 = vmul.f32 %v421, %v400
        %v427 = vmul.f32 %v421, %v401
        %v428 = vmul.f32 %v421, %v402
        %v429 = vmul.f32 %v421, %v403
        %v430 = vadd.f32 %v369, %v422
        %v431 = vadd.f32 %v370, %v423
        %v432 = vadd.f32 %v371, %v424
        %v433 = vadd.f32 %v372, %v425
        %v434 = vadd.f32 %v373, %v426
        %v435 = vadd.f32 %v374, %v427
        %v436 = vadd.f32 %v375, %v428
        %v437 = vadd.f32 %v376, %v429
        %v438 = vstv %s250
        %v439 = vmul.f32 %v438, %v396
        %v440 = vmul.f32 %v438, %v397
        %v441 = vmul.f32 %v438, %v398
        %v442 = vmul.f32 %v438, %v399
        %v443 = vmul.f32 %v438, %v400
        %v444 = vmul.f32 %v438, %v401
        %v445 = vmul.f32 %v438, %v402
        %v446 = vmul.f32 %v438, %v403
        %v447 = vadd.f32 %v386, %v439
        %v448 = vadd.f32 %v387, %v440
        %v449 = vadd.f32 %v388, %v441
        %v450 = vadd.f32 %v389, %v442
        %v451 = vadd.f32 %v390, %v443
        %v452 = vadd.f32 %v391, %v444
        %v453 = vadd.f32 %v392, %v445
        %v454 = vadd.f32 %v393, %v446
        %s455 = sadd.s32 %s211, 1
        %s456 = smul.u32 %s455, 16
        %s457 = scalar_lea.vmem [#allocation8], %s456
        %v458 = vld [vmem:[%s457] sm:$0xff]
        %v459 = vld [vmem:[%s457 + $0x8] sm:$0xff]
        %v460 = vld [vmem:[%s457 + $0x10] sm:$0xff]
        %v461 = vld [vmem:[%s457 + $0x18] sm:$0xff]
        %v462 = vld [vmem:[%s457 + $0x20] sm:$0xff]
        %v463 = vld [vmem:[%s457 + $0x28] sm:$0xff]
        %v464 = vld [vmem:[%s457 + $0x30] sm:$0xff]
        %v465 = vld [vmem:[%s457 + $0x38] sm:$0xff]
        %v466 = vstv %s215
        %v467 = vmul.f32 %v466, %v458
        %v468 = vmul.f32 %v466, %v459
        %v469 = vmul.f32 %v466, %v460
        %v470 = vmul.f32 %v466, %v461
        %v471 = vmul.f32 %v466, %v462
        %v472 = vmul.f32 %v466, %v463
        %v473 = vmul.f32 %v466, %v464
        %v474 = vmul.f32 %v466, %v465
        %v475 = vadd.f32 %v413, %v467
        %v476 = vadd.f32 %v414, %v468
        %v477 = vadd.f32 %v415, %v469
        %v478 = vadd.f32 %v416, %v470
        %v479 = vadd.f32 %v417, %v471
        %v480 = vadd.f32 %v418, %v472
        %v481 = vadd.f32 %v419, %v473
        %v482 = vadd.f32 %v420, %v474
        %v483 = vstv %s233
        %v484 = vmul.f32 %v483, %v458
        %v485 = vmul.f32 %v483, %v459
        %v486 = vmul.f32 %v483, %v460
        %v487 = vmul.f32 %v483, %v461
        %v488 = vmul.f32 %v483, %v462
        %v489 = vmul.f32 %v483, %v463
        %v490 = vmul.f32 %v483, %v464
        %v491 = vmul.f32 %v483, %v465
        %v492 = vadd.f32 %v430, %v484
        %v493 = vadd.f32 %v431, %v485
        %v494 = vadd.f32 %v432, %v486
        %v495 = vadd.f32 %v433, %v487
        %v496 = vadd.f32 %v434, %v488
        %v497 = vadd.f32 %v435, %v489
        %v498 = vadd.f32 %v436, %v490
        %v499 = vadd.f32 %v437, %v491
        %v500 = vstv %s251
        %v501 = vmul.f32 %v500, %v458
        %v502 = vmul.f32 %v500, %v459
        %v503 = vmul.f32 %v500, %v460
        %v504 = vmul.f32 %v500, %v461
        %v505 = vmul.f32 %v500, %v462
        %v506 = vmul.f32 %v500, %v463
        %v507 = vmul.f32 %v500, %v464
        %v508 = vmul.f32 %v500, %v465
        %v509 = vadd.f32 %v447, %v501
        %v510 = vadd.f32 %v448, %v502
        %v511 = vadd.f32 %v449, %v503
        %v512 = vadd.f32 %v450, %v504
        %v513 = vadd.f32 %v451, %v505
        %v514 = vadd.f32 %v452, %v506
        %v515 = vadd.f32 %v453, %v507
        %v516 = vadd.f32 %v454, %v508
        %s517 = sadd.s32 %s456, 288
        %s518 = scalar_lea.vmem [#allocation8], %s517
        %v519 = vld [vmem:[%s518] sm:$0xff]
        %v520 = vld [vmem:[%s518 + $0x8] sm:$0xff]
        %v521 = vld [vmem:[%s518 + $0x10] sm:$0xff]
        %v522 = vld [vmem:[%s518 + $0x18] sm:$0xff]
        %v523 = vld [vmem:[%s518 + $0x20] sm:$0xff]
        %v524 = vld [vmem:[%s518 + $0x28] sm:$0xff]
        %v525 = vld [vmem:[%s518 + $0x30] sm:$0xff]
        %v526 = vld [vmem:[%s518 + $0x38] sm:$0xff]
        %v527 = vstv %s216
        %v528 = vmul.f32 %v527, %v519
        %v529 = vmul.f32 %v527, %v520
        %v530 = vmul.f32 %v527, %v521
        %v531 = vmul.f32 %v527, %v522
        %v532 = vmul.f32 %v527, %v523
        %v533 = vmul.f32 %v527, %v524
        %v534 = vmul.f32 %v527, %v525
        %v535 = vmul.f32 %v527, %v526
        %v536 = vadd.f32 %v475, %v528
        %v537 = vadd.f32 %v476, %v529
        %v538 = vadd.f32 %v477, %v530
        %v539 = vadd.f32 %v478, %v531
        %v540 = vadd.f32 %v479, %v532
        %v541 = vadd.f32 %v480, %v533
        %v542 = vadd.f32 %v481, %v534
        %v543 = vadd.f32 %v482, %v535
        %v544 = vstv %s234
        %v545 = vmul.f32 %v544, %v519
        %v546 = vmul.f32 %v544, %v520
        %v547 = vmul.f32 %v544, %v521
        %v548 = vmul.f32 %v544, %v522
        %v549 = vmul.f32 %v544, %v523
        %v550 = vmul.f32 %v544, %v524
        %v551 = vmul.f32 %v544, %v525
        %v552 = vmul.f32 %v544, %v526
        %v553 = vadd.f32 %v492, %v545
        %v554 = vadd.f32 %v493, %v546
        %v555 = vadd.f32 %v494, %v547
        %v556 = vadd.f32 %v495, %v548
        %v557 = vadd.f32 %v496, %v549
        %v558 = vadd.f32 %v497, %v550
        %v559 = vadd.f32 %v498, %v551
        %v560 = vadd.f32 %v499, %v552
        %v561 = vstv %s252
        %v562 = vmul.f32 %v561, %v519
        %v563 = vmul.f32 %v561, %v520
        %v564 = vmul.f32 %v561, %v521
        %v565 = vmul.f32 %v561, %v522
        %v566 = vmul.f32 %v561, %v523
        %v567 = vmul.f32 %v561, %v524
        %v568 = vmul.f32 %v561, %v525
        %v569 = vmul.f32 %v561, %v526
        %v570 = vadd.f32 %v509, %v562
        %v571 = vadd.f32 %v510, %v563
        %v572 = vadd.f32 %v511, %v564
        %v573 = vadd.f32 %v512, %v565
        %v574 = vadd.f32 %v513, %v566
        %v575 = vadd.f32 %v514, %v567
        %v576 = vadd.f32 %v515, %v568
        %v577 = vadd.f32 %v516, %v569
        %s578 = sadd.s32 %s456, 576
        %s579 = scalar_lea.vmem [#allocation8], %s578
        %v580 = vld [vmem:[%s579] sm:$0xff]
        %v581 = vld [vmem:[%s579 + $0x8] sm:$0xff]
        %v582 = vld [vmem:[%s579 + $0x10] sm:$0xff]
        %v583 = vld [vmem:[%s579 + $0x18] sm:$0xff]
        %v584 = vld [vmem:[%s579 + $0x20] sm:$0xff]
        %v585 = vld [vmem:[%s579 + $0x28] sm:$0xff]
        %v586 = vld [vmem:[%s579 + $0x30] sm:$0xff]
        %v587 = vld [vmem:[%s579 + $0x38] sm:$0xff]
        %v588 = vstv %s217
        %v589 = vmul.f32 %v588, %v580
        %v590 = vmul.f32 %v588, %v581
        %v591 = vmul.f32 %v588, %v582
        %v592 = vmul.f32 %v588, %v583
        %v593 = vmul.f32 %v588, %v584
        %v594 = vmul.f32 %v588, %v585
        %v595 = vmul.f32 %v588, %v586
        %v596 = vmul.f32 %v588, %v587
        %v597 = vadd.f32 %v536, %v589
        %v598 = vadd.f32 %v537, %v590
        %v599 = vadd.f32 %v538, %v591
        %v600 = vadd.f32 %v539, %v592
        %v601 = vadd.f32 %v540, %v593
        %v602 = vadd.f32 %v541, %v594
        %v603 = vadd.f32 %v542, %v595
        %v604 = vadd.f32 %v543, %v596
        %v605 = vstv %s235
        %v606 = vmul.f32 %v605, %v580
        %v607 = vmul.f32 %v605, %v581
        %v608 = vmul.f32 %v605, %v582
        %v609 = vmul.f32 %v605, %v583
        %v610 = vmul.f32 %v605, %v584
        %v611 = vmul.f32 %v605, %v585
        %v612 = vmul.f32 %v605, %v586
        %v613 = vmul.f32 %v605, %v587
        %v614 = vadd.f32 %v553, %v606
        %v615 = vadd.f32 %v554, %v607
        %v616 = vadd.f32 %v555, %v608
        %v617 = vadd.f32 %v556, %v609
        %v618 = vadd.f32 %v557, %v610
        %v619 = vadd.f32 %v558, %v611
        %v620 = vadd.f32 %v559, %v612
        %v621 = vadd.f32 %v560, %v613
        %v622 = vstv %s253
        %v623 = vmul.f32 %v622, %v580
        %v624 = vmul.f32 %v622, %v581
        %v625 = vmul.f32 %v622, %v582
        %v626 = vmul.f32 %v622, %v583
        %v627 = vmul.f32 %v622, %v584
        %v628 = vmul.f32 %v622, %v585
        %v629 = vmul.f32 %v622, %v586
        %v630 = vmul.f32 %v622, %v587
        %v631 = vadd.f32 %v570, %v623
        %v632 = vadd.f32 %v571, %v624
        %v633 = vadd.f32 %v572, %v625
        %v634 = vadd.f32 %v573, %v626
        %v635 = vadd.f32 %v574, %v627
        %v636 = vadd.f32 %v575, %v628
        %v637 = vadd.f32 %v576, %v629
        %v638 = vadd.f32 %v577, %v630
        %s639 = sadd.s32 %s211, 2
        %s640 = smul.u32 %s639, 16
        %s641 = scalar_lea.vmem [#allocation8], %s640
        %v642 = vld [vmem:[%s641] sm:$0xff]
        %v643 = vld [vmem:[%s641 + $0x8] sm:$0xff]
        %v644 = vld [vmem:[%s641 + $0x10] sm:$0xff]
        %v645 = vld [vmem:[%s641 + $0x18] sm:$0xff]
        %v646 = vld [vmem:[%s641 + $0x20] sm:$0xff]
        %v647 = vld [vmem:[%s641 + $0x28] sm:$0xff]
        %v648 = vld [vmem:[%s641 + $0x30] sm:$0xff]
        %v649 = vld [vmem:[%s641 + $0x38] sm:$0xff]
        %v650 = vstv %s218
        %v651 = vmul.f32 %v650, %v642
        %v652 = vmul.f32 %v650, %v643
        %v653 = vmul.f32 %v650, %v644
        %v654 = vmul.f32 %v650, %v645
        %v655 = vmul.f32 %v650, %v646
        %v656 = vmul.f32 %v650, %v647
        %v657 = vmul.f32 %v650, %v648
        %v658 = vmul.f32 %v650, %v649
        %v659 = vadd.f32 %v597, %v651
        %v660 = vadd.f32 %v598, %v652
        %v661 = vadd.f32 %v599, %v653
        %v662 = vadd.f32 %v600, %v654
        %v663 = vadd.f32 %v601, %v655
        %v664 = vadd.f32 %v602, %v656
        %v665 = vadd.f32 %v603, %v657
        %v666 = vadd.f32 %v604, %v658
        %v667 = vstv %s236
        %v668 = vmul.f32 %v667, %v642
        %v669 = vmul.f32 %v667, %v643
        %v670 = vmul.f32 %v667, %v644
        %v671 = vmul.f32 %v667, %v645
        %v672 = vmul.f32 %v667, %v646
        %v673 = vmul.f32 %v667, %v647
        %v674 = vmul.f32 %v667, %v648
        %v675 = vmul.f32 %v667, %v649
        %v676 = vadd.f32 %v614, %v668
        %v677 = vadd.f32 %v615, %v669
        %v678 = vadd.f32 %v616, %v670
        %v679 = vadd.f32 %v617, %v671
        %v680 = vadd.f32 %v618, %v672
        %v681 = vadd.f32 %v619, %v673
        %v682 = vadd.f32 %v620, %v674
        %v683 = vadd.f32 %v621, %v675
        %v684 = vstv %s254
        %v685 = vmul.f32 %v684, %v642
        %v686 = vmul.f32 %v684, %v643
        %v687 = vmul.f32 %v684, %v644
        %v688 = vmul.f32 %v684, %v645
        %v689 = vmul.f32 %v684, %v646
        %v690 = vmul.f32 %v684, %v647
        %v691 = vmul.f32 %v684, %v648
        %v692 = vmul.f32 %v684, %v649
        %v693 = vadd.f32 %v631, %v685
        %v694 = vadd.f32 %v632, %v686
        %v695 = vadd.f32 %v633, %v687
        %v696 = vadd.f32 %v634, %v688
        %v697 = vadd.f32 %v635, %v689
        %v698 = vadd.f32 %v636, %v690
        %v699 = vadd.f32 %v637, %v691
        %v700 = vadd.f32 %v638, %v692
        %s701 = sadd.s32 %s640, 288
        %s702 = scalar_lea.vmem [#allocation8], %s701
        %v703 = vld [vmem:[%s702] sm:$0xff]
        %v704 = vld [vmem:[%s702 + $0x8] sm:$0xff]
        %v705 = vld [vmem:[%s702 + $0x10] sm:$0xff]
        %v706 = vld [vmem:[%s702 + $0x18] sm:$0xff]
        %v707 = vld [vmem:[%s702 + $0x20] sm:$0xff]
        %v708 = vld [vmem:[%s702 + $0x28] sm:$0xff]
        %v709 = vld [vmem:[%s702 + $0x30] sm:$0xff]
        %v710 = vld [vmem:[%s702 + $0x38] sm:$0xff]
        %v711 = vstv %s219
        %v712 = vmul.f32 %v711, %v703
        %v713 = vmul.f32 %v711, %v704
        %v714 = vmul.f32 %v711, %v705
        %v715 = vmul.f32 %v711, %v706
        %v716 = vmul.f32 %v711, %v707
        %v717 = vmul.f32 %v711, %v708
        %v718 = vmul.f32 %v711, %v709
        %v719 = vmul.f32 %v711, %v710
        %v720 = vadd.f32 %v659, %v712
        %v721 = vadd.f32 %v660, %v713
        %v722 = vadd.f32 %v661, %v714
        %v723 = vadd.f32 %v662, %v715
        %v724 = vadd.f32 %v663, %v716
        %v725 = vadd.f32 %v664, %v717
        %v726 = vadd.f32 %v665, %v718
        %v727 = vadd.f32 %v666, %v719
        %v728 = vstv %s237
        %v729 = vmul.f32 %v728, %v703
        %v730 = vmul.f32 %v728, %v704
        %v731 = vmul.f32 %v728, %v705
        %v732 = vmul.f32 %v728, %v706
        %v733 = vmul.f32 %v728, %v707
        %v734 = vmul.f32 %v728, %v708
        %v735 = vmul.f32 %v728, %v709
        %v736 = vmul.f32 %v728, %v710
        %v737 = vadd.f32 %v676, %v729
        %v738 = vadd.f32 %v677, %v730
        %v739 = vadd.f32 %v678, %v731
        %v740 = vadd.f32 %v679, %v732
        %v741 = vadd.f32 %v680, %v733
        %v742 = vadd.f32 %v681, %v734
        %v743 = vadd.f32 %v682, %v735
        %v744 = vadd.f32 %v683, %v736
        %v745 = vstv %s255
        %v746 = vmul.f32 %v745, %v703
        %v747 = vmul.f32 %v745, %v704
        %v748 = vmul.f32 %v745, %v705
        %v749 = vmul.f32 %v745, %v706
        %v750 = vmul.f32 %v745, %v707
        %v751 = vmul.f32 %v745, %v708
        %v752 = vmul.f32 %v745, %v709
        %v753 = vmul.f32 %v745, %v710
        %v754 = vadd.f32 %v693, %v746
        %v755 = vadd.f32 %v694, %v747
        %v756 = vadd.f32 %v695, %v748
        %v757 = vadd.f32 %v696, %v749
        %v758 = vadd.f32 %v697, %v750
        %v759 = vadd.f32 %v698, %v751
        %v760 = vadd.f32 %v699, %v752
        %v761 = vadd.f32 %v700, %v753
        %s762 = sadd.s32 %s640, 576
        %s763 = scalar_lea.vmem [#allocation8], %s762
        %v764 = vld [vmem:[%s763] sm:$0xff]
        %v765 = vld [vmem:[%s763 + $0x8] sm:$0xff]
        %v766 = vld [vmem:[%s763 + $0x10] sm:$0xff]
        %v767 = vld [vmem:[%s763 + $0x18] sm:$0xff]
        %v768 = vld [vmem:[%s763 + $0x20] sm:$0xff]
        %v769 = vld [vmem:[%s763 + $0x28] sm:$0xff]
        %v770 = vld [vmem:[%s763 + $0x30] sm:$0xff]
        %v771 = vld [vmem:[%s763 + $0x38] sm:$0xff]
        %v772 = vstv %s220
        %v773 = vmul.f32 %v772, %v764
        %v774 = vmul.f32 %v772, %v765
        %v775 = vmul.f32 %v772, %v766
        %v776 = vmul.f32 %v772, %v767
        %v777 = vmul.f32 %v772, %v768
        %v778 = vmul.f32 %v772, %v769
        %v779 = vmul.f32 %v772, %v770
        %v780 = vmul.f32 %v772, %v771
        %v781 = vadd.f32 %v720, %v773
        %v782 = vadd.f32 %v721, %v774
        %v783 = vadd.f32 %v722, %v775
        %v784 = vadd.f32 %v723, %v776
        %v785 = vadd.f32 %v724, %v777
        %v786 = vadd.f32 %v725, %v778
        %v787 = vadd.f32 %v726, %v779
        %v788 = vadd.f32 %v727, %v780
        %v789 = vstv %s238
        %v790 = vmul.f32 %v789, %v764
        %v791 = vmul.f32 %v789, %v765
        %v792 = vmul.f32 %v789, %v766
        %v793 = vmul.f32 %v789, %v767
        %v794 = vmul.f32 %v789, %v768
        %v795 = vmul.f32 %v789, %v769
        %v796 = vmul.f32 %v789, %v770
        %v797 = vmul.f32 %v789, %v771
        %v798 = vadd.f32 %v737, %v790
        %v799 = vadd.f32 %v738, %v791
        %v800 = vadd.f32 %v739, %v792
        %v801 = vadd.f32 %v740, %v793
        %v802 = vadd.f32 %v741, %v794
        %v803 = vadd.f32 %v742, %v795
        %v804 = vadd.f32 %v743, %v796
        %v805 = vadd.f32 %v744, %v797
        %v806 = vstv %s256
        %v807 = vmul.f32 %v806, %v764
        %v808 = vmul.f32 %v806, %v765
        %v809 = vmul.f32 %v806, %v766
        %v810 = vmul.f32 %v806, %v767
        %v811 = vmul.f32 %v806, %v768
        %v812 = vmul.f32 %v806, %v769
        %v813 = vmul.f32 %v806, %v770
        %v814 = vmul.f32 %v806, %v771
        %v815 = vadd.f32 %v754, %v807
        %v816 = vadd.f32 %v755, %v808
        %v817 = vadd.f32 %v756, %v809
        %v818 = vadd.f32 %v757, %v810
        %v819 = vadd.f32 %v758, %v811
        %v820 = vadd.f32 %v759, %v812
        %v821 = vadd.f32 %v760, %v813
        %v822 = vadd.f32 %v761, %v814
        %s823 = sadd.s32 %s272, 864
        %s824 = scalar_lea.vmem [#allocation8], %s823
        %v825 = vld [vmem:[%s824] sm:$0xff]
        %v826 = vld [vmem:[%s824 + $0x8] sm:$0xff]
        %v827 = vld [vmem:[%s824 + $0x10] sm:$0xff]
        %v828 = vld [vmem:[%s824 + $0x18] sm:$0xff]
        %v829 = vld [vmem:[%s824 + $0x20] sm:$0xff]
        %v830 = vld [vmem:[%s824 + $0x28] sm:$0xff]
        %v831 = vld [vmem:[%s824 + $0x30] sm:$0xff]
        %v832 = vld [vmem:[%s824 + $0x38] sm:$0xff]
        %v833 = vstv %s221
        %v834 = vmul.f32 %v833, %v825
        %v835 = vmul.f32 %v833, %v826
        %v836 = vmul.f32 %v833, %v827
        %v837 = vmul.f32 %v833, %v828
        %v838 = vmul.f32 %v833, %v829
        %v839 = vmul.f32 %v833, %v830
        %v840 = vmul.f32 %v833, %v831
        %v841 = vmul.f32 %v833, %v832
        %v842 = vadd.f32 %v781, %v834
        %v843 = vadd.f32 %v782, %v835
        %v844 = vadd.f32 %v783, %v836
        %v845 = vadd.f32 %v784, %v837
        %v846 = vadd.f32 %v785, %v838
        %v847 = vadd.f32 %v786, %v839
        %v848 = vadd.f32 %v787, %v840
        %v849 = vadd.f32 %v788, %v841
        %v850 = vstv %s239
        %v851 = vmul.f32 %v850, %v825
        %v852 = vmul.f32 %v850, %v826
        %v853 = vmul.f32 %v850, %v827
        %v854 = vmul.f32 %v850, %v828
        %v855 = vmul.f32 %v850, %v829
        %v856 = vmul.f32 %v850, %v830
        %v857 = vmul.f32 %v850, %v831
        %v858 = vmul.f32 %v850, %v832
        %v859 = vadd.f32 %v798, %v851
        %v860 = vadd.f32 %v799, %v852
        %v861 = vadd.f32 %v800, %v853
        %v862 = vadd.f32 %v801, %v854
        %v863 = vadd.f32 %v802, %v855
        %v864 = vadd.f32 %v803, %v856
        %v865 = vadd.f32 %v804, %v857
        %v866 = vadd.f32 %v805, %v858
        %v867 = vstv %s257
        %v868 = vmul.f32 %v867, %v825
        %v869 = vmul.f32 %v867, %v826
        %v870 = vmul.f32 %v867, %v827
        %v871 = vmul.f32 %v867, %v828
        %v872 = vmul.f32 %v867, %v829
        %v873 = vmul.f32 %v867, %v830
        %v874 = vmul.f32 %v867, %v831
        %v875 = vmul.f32 %v867, %v832
        %v876 = vadd.f32 %v815, %v868
        %v877 = vadd.f32 %v816, %v869
        %v878 = vadd.f32 %v817, %v870
        %v879 = vadd.f32 %v818, %v871
        %v880 = vadd.f32 %v819, %v872
        %v881 = vadd.f32 %v820, %v873
        %v882 = vadd.f32 %v821, %v874
        %v883 = vadd.f32 %v822, %v875
        %s884 = sadd.s32 %s333, 864
        %s885 = scalar_lea.vmem [#allocation8], %s884
        %v886 = vld [vmem:[%s885] sm:$0xff]
        %v887 = vld [vmem:[%s885 + $0x8] sm:$0xff]
        %v888 = vld [vmem:[%s885 + $0x10] sm:$0xff]
        %v889 = vld [vmem:[%s885 + $0x18] sm:$0xff]
        %v890 = vld [vmem:[%s885 + $0x20] sm:$0xff]
        %v891 = vld [vmem:[%s885 + $0x28] sm:$0xff]
        %v892 = vld [vmem:[%s885 + $0x30] sm:$0xff]
        %v893 = vld [vmem:[%s885 + $0x38] sm:$0xff]
        %v894 = vstv %s222
        %v895 = vmul.f32 %v894, %v886
        %v896 = vmul.f32 %v894, %v887
        %v897 = vmul.f32 %v894, %v888
        %v898 = vmul.f32 %v894, %v889
        %v899 = vmul.f32 %v894, %v890
        %v900 = vmul.f32 %v894, %v891
        %v901 = vmul.f32 %v894, %v892
        %v902 = vmul.f32 %v894, %v893
        %v903 = vadd.f32 %v842, %v895
        %v904 = vadd.f32 %v843, %v896
        %v905 = vadd.f32 %v844, %v897
        %v906 = vadd.f32 %v845, %v898
        %v907 = vadd.f32 %v846, %v899
        %v908 = vadd.f32 %v847, %v900
        %v909 = vadd.f32 %v848, %v901
        %v910 = vadd.f32 %v849, %v902
        %v911 = vstv %s240
        %v912 = vmul.f32 %v911, %v886
        %v913 = vmul.f32 %v911, %v887
        %v914 = vmul.f32 %v911, %v888
        %v915 = vmul.f32 %v911, %v889
        %v916 = vmul.f32 %v911, %v890
        %v917 = vmul.f32 %v911, %v891
        %v918 = vmul.f32 %v911, %v892
        %v919 = vmul.f32 %v911, %v893
        %v920 = vadd.f32 %v859, %v912
        %v921 = vadd.f32 %v860, %v913
        %v922 = vadd.f32 %v861, %v914
        %v923 = vadd.f32 %v862, %v915
        %v924 = vadd.f32 %v863, %v916
        %v925 = vadd.f32 %v864, %v917
        %v926 = vadd.f32 %v865, %v918
        %v927 = vadd.f32 %v866, %v919
        %v928 = vstv %s258
        %v929 = vmul.f32 %v928, %v886
        %v930 = vmul.f32 %v928, %v887
        %v931 = vmul.f32 %v928, %v888
        %v932 = vmul.f32 %v928, %v889
        %v933 = vmul.f32 %v928, %v890
        %v934 = vmul.f32 %v928, %v891
        %v935 = vmul.f32 %v928, %v892
        %v936 = vmul.f32 %v928, %v893
        %v937 = vadd.f32 %v876, %v929
        %v938 = vadd.f32 %v877, %v930
        %v939 = vadd.f32 %v878, %v931
        %v940 = vadd.f32 %v879, %v932
        %v941 = vadd.f32 %v880, %v933
        %v942 = vadd.f32 %v881, %v934
        %v943 = vadd.f32 %v882, %v935
        %v944 = vadd.f32 %v883, %v936
        %s945 = sadd.s32 %s394, 864
        %s946 = scalar_lea.vmem [#allocation8], %s945
        %v947 = vld [vmem:[%s946] sm:$0xff]
        %v948 = vld [vmem:[%s946 + $0x8] sm:$0xff]
        %v949 = vld [vmem:[%s946 + $0x10] sm:$0xff]
        %v950 = vld [vmem:[%s946 + $0x18] sm:$0xff]
        %v951 = vld [vmem:[%s946 + $0x20] sm:$0xff]
        %v952 = vld [vmem:[%s946 + $0x28] sm:$0xff]
        %v953 = vld [vmem:[%s946 + $0x30] sm:$0xff]
        %v954 = vld [vmem:[%s946 + $0x38] sm:$0xff]
        %v955 = vstv %s223
        %v956 = vmul.f32 %v955, %v947
        %v957 = vmul.f32 %v955, %v948
        %v958 = vmul.f32 %v955, %v949
        %v959 = vmul.f32 %v955, %v950
        %v960 = vmul.f32 %v955, %v951
        %v961 = vmul.f32 %v955, %v952
        %v962 = vmul.f32 %v955, %v953
        %v963 = vmul.f32 %v955, %v954
        %v964 = vadd.f32 %v903, %v956
        %v965 = vadd.f32 %v904, %v957
        %v966 = vadd.f32 %v905, %v958
        %v967 = vadd.f32 %v906, %v959
        %v968 = vadd.f32 %v907, %v960
        %v969 = vadd.f32 %v908, %v961
        %v970 = vadd.f32 %v909, %v962
        %v971 = vadd.f32 %v910, %v963
        %v972 = vstv %s241
        %v973 = vmul.f32 %v972, %v947
        %v974 = vmul.f32 %v972, %v948
        %v975 = vmul.f32 %v972, %v949
        %v976 = vmul.f32 %v972, %v950
        %v977 = vmul.f32 %v972, %v951
        %v978 = vmul.f32 %v972, %v952
        %v979 = vmul.f32 %v972, %v953
        %v980 = vmul.f32 %v972, %v954
        %v981 = vadd.f32 %v920, %v973
        %v982 = vadd.f32 %v921, %v974
        %v983 = vadd.f32 %v922, %v975
        %v984 = vadd.f32 %v923, %v976
        %v985 = vadd.f32 %v924, %v977
        %v986 = vadd.f32 %v925, %v978
        %v987 = vadd.f32 %v926, %v979
        %v988 = vadd.f32 %v927, %v980
        %v989 = vstv %s259
        %v990 = vmul.f32 %v989, %v947
        %v991 = vmul.f32 %v989, %v948
        %v992 = vmul.f32 %v989, %v949
        %v993 = vmul.f32 %v989, %v950
        %v994 = vmul.f32 %v989, %v951
        %v995 = vmul.f32 %v989, %v952
        %v996 = vmul.f32 %v989, %v953
        %v997 = vmul.f32 %v989, %v954
        %v998 = vadd.f32 %v937, %v990
        %v999 = vadd.f32 %v938, %v991
        %v1000 = vadd.f32 %v939, %v992
        %v1001 = vadd.f32 %v940, %v993
        %v1002 = vadd.f32 %v941, %v994
        %v1003 = vadd.f32 %v942, %v995
        %v1004 = vadd.f32 %v943, %v996
        %v1005 = vadd.f32 %v944, %v997
        %s1006 = sadd.s32 %s456, 864
        %s1007 = scalar_lea.vmem [#allocation8], %s1006
        %v1008 = vld [vmem:[%s1007] sm:$0xff]
        %v1009 = vld [vmem:[%s1007 + $0x8] sm:$0xff]
        %v1010 = vld [vmem:[%s1007 + $0x10] sm:$0xff]
        %v1011 = vld [vmem:[%s1007 + $0x18] sm:$0xff]
        %v1012 = vld [vmem:[%s1007 + $0x20] sm:$0xff]
        %v1013 = vld [vmem:[%s1007 + $0x28] sm:$0xff]
        %v1014 = vld [vmem:[%s1007 + $0x30] sm:$0xff]
        %v1015 = vld [vmem:[%s1007 + $0x38] sm:$0xff]
        %v1016 = vstv %s224
        %v1017 = vmul.f32 %v1016, %v1008
        %v1018 = vmul.f32 %v1016, %v1009
        %v1019 = vmul.f32 %v1016, %v1010
        %v1020 = vmul.f32 %v1016, %v1011
        %v1021 = vmul.f32 %v1016, %v1012
        %v1022 = vmul.f32 %v1016, %v1013
        %v1023 = vmul.f32 %v1016, %v1014
        %v1024 = vmul.f32 %v1016, %v1015
        %v1025 = vadd.f32 %v964, %v1017
        %v1026 = vadd.f32 %v965, %v1018
        %v1027 = vadd.f32 %v966, %v1019
        %v1028 = vadd.f32 %v967, %v1020
        %v1029 = vadd.f32 %v968, %v1021
        %v1030 = vadd.f32 %v969, %v1022
        %v1031 = vadd.f32 %v970, %v1023
        %v1032 = vadd.f32 %v971, %v1024
        %v1033 = vstv %s242
        %v1034 = vmul.f32 %v1033, %v1008
        %v1035 = vmul.f32 %v1033, %v1009
        %v1036 = vmul.f32 %v1033, %v1010
        %v1037 = vmul.f32 %v1033, %v1011
        %v1038 = vmul.f32 %v1033, %v1012
        %v1039 = vmul.f32 %v1033, %v1013
        %v1040 = vmul.f32 %v1033, %v1014
        %v1041 = vmul.f32 %v1033, %v1015
        %v1042 = vadd.f32 %v981, %v1034
        %v1043 = vadd.f32 %v982, %v1035
        %v1044 = vadd.f32 %v983, %v1036
        %v1045 = vadd.f32 %v984, %v1037
        %v1046 = vadd.f32 %v985, %v1038
        %v1047 = vadd.f32 %v986, %v1039
        %v1048 = vadd.f32 %v987, %v1040
        %v1049 = vadd.f32 %v988, %v1041
        %v1050 = vstv %s260
        %v1051 = vmul.f32 %v1050, %v1008
        %v1052 = vmul.f32 %v1050, %v1009
        %v1053 = vmul.f32 %v1050, %v1010
        %v1054 = vmul.f32 %v1050, %v1011
        %v1055 = vmul.f32 %v1050, %v1012
        %v1056 = vmul.f32 %v1050, %v1013
        %v1057 = vmul.f32 %v1050, %v1014
        %v1058 = vmul.f32 %v1050, %v1015
        %v1059 = vadd.f32 %v998, %v1051
        %v1060 = vadd.f32 %v999, %v1052
        %v1061 = vadd.f32 %v1000, %v1053
        %v1062 = vadd.f32 %v1001, %v1054
        %v1063 = vadd.f32 %v1002, %v1055
        %v1064 = vadd.f32 %v1003, %v1056
        %v1065 = vadd.f32 %v1004, %v1057
        %v1066 = vadd.f32 %v1005, %v1058
        %s1067 = sadd.s32 %s517, 864
        %s1068 = scalar_lea.vmem [#allocation8], %s1067
        %v1069 = vld [vmem:[%s1068] sm:$0xff]
        %v1070 = vld [vmem:[%s1068 + $0x8] sm:$0xff]
        %v1071 = vld [vmem:[%s1068 + $0x10] sm:$0xff]
        %v1072 = vld [vmem:[%s1068 + $0x18] sm:$0xff]
        %v1073 = vld [vmem:[%s1068 + $0x20] sm:$0xff]
        %v1074 = vld [vmem:[%s1068 + $0x28] sm:$0xff]
        %v1075 = vld [vmem:[%s1068 + $0x30] sm:$0xff]
        %v1076 = vld [vmem:[%s1068 + $0x38] sm:$0xff]
        %v1077 = vstv %s225
        %v1078 = vmul.f32 %v1077, %v1069
        %v1079 = vmul.f32 %v1077, %v1070
        %v1080 = vmul.f32 %v1077, %v1071
        %v1081 = vmul.f32 %v1077, %v1072
        %v1082 = vmul.f32 %v1077, %v1073
        %v1083 = vmul.f32 %v1077, %v1074
        %v1084 = vmul.f32 %v1077, %v1075
        %v1085 = vmul.f32 %v1077, %v1076
        %v1086 = vadd.f32 %v1025, %v1078
        %v1087 = vadd.f32 %v1026, %v1079
        %v1088 = vadd.f32 %v1027, %v1080
        %v1089 = vadd.f32 %v1028, %v1081
        %v1090 = vadd.f32 %v1029, %v1082
        %v1091 = vadd.f32 %v1030, %v1083
        %v1092 = vadd.f32 %v1031, %v1084
        %v1093 = vadd.f32 %v1032, %v1085
        %v1094 = vstv %s243
        %v1095 = vmul.f32 %v1094, %v1069
        %v1096 = vmul.f32 %v1094, %v1070
        %v1097 = vmul.f32 %v1094, %v1071
        %v1098 = vmul.f32 %v1094, %v1072
        %v1099 = vmul.f32 %v1094, %v1073
        %v1100 = vmul.f32 %v1094, %v1074
        %v1101 = vmul.f32 %v1094, %v1075
        %v1102 = vmul.f32 %v1094, %v1076
        %v1103 = vadd.f32 %v1042, %v1095
        %v1104 = vadd.f32 %v1043, %v1096
        %v1105 = vadd.f32 %v1044, %v1097
        %v1106 = vadd.f32 %v1045, %v1098
        %v1107 = vadd.f32 %v1046, %v1099
        %v1108 = vadd.f32 %v1047, %v1100
        %v1109 = vadd.f32 %v1048, %v1101
        %v1110 = vadd.f32 %v1049, %v1102
        %v1111 = vstv %s261
        %v1112 = vmul.f32 %v1111, %v1069
        %v1113 = vmul.f32 %v1111, %v1070
        %v1114 = vmul.f32 %v1111, %v1071
        %v1115 = vmul.f32 %v1111, %v1072
        %v1116 = vmul.f32 %v1111, %v1073
        %v1117 = vmul.f32 %v1111, %v1074
        %v1118 = vmul.f32 %v1111, %v1075
        %v1119 = vmul.f32 %v1111, %v1076
        %v1120 = vadd.f32 %v1059, %v1112
        %v1121 = vadd.f32 %v1060, %v1113
        %v1122 = vadd.f32 %v1061, %v1114
        %v1123 = vadd.f32 %v1062, %v1115
        %v1124 = vadd.f32 %v1063, %v1116
        %v1125 = vadd.f32 %v1064, %v1117
        %v1126 = vadd.f32 %v1065, %v1118
        %v1127 = vadd.f32 %v1066, %v1119
        %s1128 = sadd.s32 %s578, 864
        %s1129 = scalar_lea.vmem [#allocation8], %s1128
        %v1130 = vld [vmem:[%s1129] sm:$0xff]
        %v1131 = vld [vmem:[%s1129 + $0x8] sm:$0xff]
        %v1132 = vld [vmem:[%s1129 + $0x10] sm:$0xff]
        %v1133 = vld [vmem:[%s1129 + $0x18] sm:$0xff]
        %v1134 = vld [vmem:[%s1129 + $0x20] sm:$0xff]
        %v1135 = vld [vmem:[%s1129 + $0x28] sm:$0xff]
        %v1136 = vld [vmem:[%s1129 + $0x30] sm:$0xff]
        %v1137 = vld [vmem:[%s1129 + $0x38] sm:$0xff]
        %v1138 = vstv %s226
        %v1139 = vmul.f32 %v1138, %v1130
        %v1140 = vmul.f32 %v1138, %v1131
        %v1141 = vmul.f32 %v1138, %v1132
        %v1142 = vmul.f32 %v1138, %v1133
        %v1143 = vmul.f32 %v1138, %v1134
        %v1144 = vmul.f32 %v1138, %v1135
        %v1145 = vmul.f32 %v1138, %v1136
        %v1146 = vmul.f32 %v1138, %v1137
        %v1147 = vadd.f32 %v1086, %v1139
        %v1148 = vadd.f32 %v1087, %v1140
        %v1149 = vadd.f32 %v1088, %v1141
        %v1150 = vadd.f32 %v1089, %v1142
        %v1151 = vadd.f32 %v1090, %v1143
        %v1152 = vadd.f32 %v1091, %v1144
        %v1153 = vadd.f32 %v1092, %v1145
        %v1154 = vadd.f32 %v1093, %v1146
        %v1155 = vstv %s244
        %v1156 = vmul.f32 %v1155, %v1130
        %v1157 = vmul.f32 %v1155, %v1131
        %v1158 = vmul.f32 %v1155, %v1132
        %v1159 = vmul.f32 %v1155, %v1133
        %v1160 = vmul.f32 %v1155, %v1134
        %v1161 = vmul.f32 %v1155, %v1135
        %v1162 = vmul.f32 %v1155, %v1136
        %v1163 = vmul.f32 %v1155, %v1137
        %v1164 = vadd.f32 %v1103, %v1156
        %v1165 = vadd.f32 %v1104, %v1157
        %v1166 = vadd.f32 %v1105, %v1158
        %v1167 = vadd.f32 %v1106, %v1159
        %v1168 = vadd.f32 %v1107, %v1160
        %v1169 = vadd.f32 %v1108, %v1161
        %v1170 = vadd.f32 %v1109, %v1162
        %v1171 = vadd.f32 %v1110, %v1163
        %v1172 = vstv %s262
        %v1173 = vmul.f32 %v1172, %v1130
        %v1174 = vmul.f32 %v1172, %v1131
        %v1175 = vmul.f32 %v1172, %v1132
        %v1176 = vmul.f32 %v1172, %v1133
        %v1177 = vmul.f32 %v1172, %v1134
        %v1178 = vmul.f32 %v1172, %v1135
        %v1179 = vmul.f32 %v1172, %v1136
        %v1180 = vmul.f32 %v1172, %v1137
        %v1181 = vadd.f32 %v1120, %v1173
        %v1182 = vadd.f32 %v1121, %v1174
        %v1183 = vadd.f32 %v1122, %v1175
        %v1184 = vadd.f32 %v1123, %v1176
        %v1185 = vadd.f32 %v1124, %v1177
        %v1186 = vadd.f32 %v1125, %v1178
        %v1187 = vadd.f32 %v1126, %v1179
        %v1188 = vadd.f32 %v1127, %v1180
        %s1189 = sadd.s32 %s640, 864
        %s1190 = scalar_lea.vmem [#allocation8], %s1189
        %v1191 = vld [vmem:[%s1190] sm:$0xff]
        %v1192 = vld [vmem:[%s1190 + $0x8] sm:$0xff]
        %v1193 = vld [vmem:[%s1190 + $0x10] sm:$0xff]
        %v1194 = vld [vmem:[%s1190 + $0x18] sm:$0xff]
        %v1195 = vld [vmem:[%s1190 + $0x20] sm:$0xff]
        %v1196 = vld [vmem:[%s1190 + $0x28] sm:$0xff]
        %v1197 = vld [vmem:[%s1190 + $0x30] sm:$0xff]
        %v1198 = vld [vmem:[%s1190 + $0x38] sm:$0xff]
        %v1199 = vstv %s227
        %v1200 = vmul.f32 %v1199, %v1191
        %v1201 = vmul.f32 %v1199, %v1192
        %v1202 = vmul.f32 %v1199, %v1193
        %v1203 = vmul.f32 %v1199, %v1194
        %v1204 = vmul.f32 %v1199, %v1195
        %v1205 = vmul.f32 %v1199, %v1196
        %v1206 = vmul.f32 %v1199, %v1197
        %v1207 = vmul.f32 %v1199, %v1198
        %v1208 = vadd.f32 %v1147, %v1200
        %v1209 = vadd.f32 %v1148, %v1201
        %v1210 = vadd.f32 %v1149, %v1202
        %v1211 = vadd.f32 %v1150, %v1203
        %v1212 = vadd.f32 %v1151, %v1204
        %v1213 = vadd.f32 %v1152, %v1205
        %v1214 = vadd.f32 %v1153, %v1206
        %v1215 = vadd.f32 %v1154, %v1207
        %v1216 = vstv %s245
        %v1217 = vmul.f32 %v1216, %v1191
        %v1218 = vmul.f32 %v1216, %v1192
        %v1219 = vmul.f32 %v1216, %v1193
        %v1220 = vmul.f32 %v1216, %v1194
        %v1221 = vmul.f32 %v1216, %v1195
        %v1222 = vmul.f32 %v1216, %v1196
        %v1223 = vmul.f32 %v1216, %v1197
        %v1224 = vmul.f32 %v1216, %v1198
        %v1225 = vadd.f32 %v1164, %v1217
        %v1226 = vadd.f32 %v1165, %v1218
        %v1227 = vadd.f32 %v1166, %v1219
        %v1228 = vadd.f32 %v1167, %v1220
        %v1229 = vadd.f32 %v1168, %v1221
        %v1230 = vadd.f32 %v1169, %v1222
        %v1231 = vadd.f32 %v1170, %v1223
        %v1232 = vadd.f32 %v1171, %v1224
        %v1233 = vstv %s263
        %v1234 = vmul.f32 %v1233, %v1191
        %v1235 = vmul.f32 %v1233, %v1192
        %v1236 = vmul.f32 %v1233, %v1193
        %v1237 = vmul.f32 %v1233, %v1194
        %v1238 = vmul.f32 %v1233, %v1195
        %v1239 = vmul.f32 %v1233, %v1196
        %v1240 = vmul.f32 %v1233, %v1197
        %v1241 = vmul.f32 %v1233, %v1198
        %v1242 = vadd.f32 %v1181, %v1234
        %v1243 = vadd.f32 %v1182, %v1235
        %v1244 = vadd.f32 %v1183, %v1236
        %v1245 = vadd.f32 %v1184, %v1237
        %v1246 = vadd.f32 %v1185, %v1238
        %v1247 = vadd.f32 %v1186, %v1239
        %v1248 = vadd.f32 %v1187, %v1240
        %v1249 = vadd.f32 %v1188, %v1241
        %s1250 = sadd.s32 %s701, 864
        %s1251 = scalar_lea.vmem [#allocation8], %s1250
        %v1252 = vld [vmem:[%s1251] sm:$0xff]
        %v1253 = vld [vmem:[%s1251 + $0x8] sm:$0xff]
        %v1254 = vld [vmem:[%s1251 + $0x10] sm:$0xff]
        %v1255 = vld [vmem:[%s1251 + $0x18] sm:$0xff]
        %v1256 = vld [vmem:[%s1251 + $0x20] sm:$0xff]
        %v1257 = vld [vmem:[%s1251 + $0x28] sm:$0xff]
        %v1258 = vld [vmem:[%s1251 + $0x30] sm:$0xff]
        %v1259 = vld [vmem:[%s1251 + $0x38] sm:$0xff]
        %v1260 = vstv %s228
        %v1261 = vmul.f32 %v1260, %v1252
        %v1262 = vmul.f32 %v1260, %v1253
        %v1263 = vmul.f32 %v1260, %v1254
        %v1264 = vmul.f32 %v1260, %v1255
        %v1265 = vmul.f32 %v1260, %v1256
        %v1266 = vmul.f32 %v1260, %v1257
        %v1267 = vmul.f32 %v1260, %v1258
        %v1268 = vmul.f32 %v1260, %v1259
        %v1269 = vadd.f32 %v1208, %v1261
        %v1270 = vadd.f32 %v1209, %v1262
        %v1271 = vadd.f32 %v1210, %v1263
        %v1272 = vadd.f32 %v1211, %v1264
        %v1273 = vadd.f32 %v1212, %v1265
        %v1274 = vadd.f32 %v1213, %v1266
        %v1275 = vadd.f32 %v1214, %v1267
        %v1276 = vadd.f32 %v1215, %v1268
        %v1277 = vstv %s246
        %v1278 = vmul.f32 %v1277, %v1252
        %v1279 = vmul.f32 %v1277, %v1253
        %v1280 = vmul.f32 %v1277, %v1254
        %v1281 = vmul.f32 %v1277, %v1255
        %v1282 = vmul.f32 %v1277, %v1256
        %v1283 = vmul.f32 %v1277, %v1257
        %v1284 = vmul.f32 %v1277, %v1258
        %v1285 = vmul.f32 %v1277, %v1259
        %v1286 = vadd.f32 %v1225, %v1278
        %v1287 = vadd.f32 %v1226, %v1279
        %v1288 = vadd.f32 %v1227, %v1280
        %v1289 = vadd.f32 %v1228, %v1281
        %v1290 = vadd.f32 %v1229, %v1282
        %v1291 = vadd.f32 %v1230, %v1283
        %v1292 = vadd.f32 %v1231, %v1284
        %v1293 = vadd.f32 %v1232, %v1285
        %v1294 = vstv %s264
        %v1295 = vmul.f32 %v1294, %v1252
        %v1296 = vmul.f32 %v1294, %v1253
        %v1297 = vmul.f32 %v1294, %v1254
        %v1298 = vmul.f32 %v1294, %v1255
        %v1299 = vmul.f32 %v1294, %v1256
        %v1300 = vmul.f32 %v1294, %v1257
        %v1301 = vmul.f32 %v1294, %v1258
        %v1302 = vmul.f32 %v1294, %v1259
        %v1303 = vadd.f32 %v1242, %v1295
        %v1304 = vadd.f32 %v1243, %v1296
        %v1305 = vadd.f32 %v1244, %v1297
        %v1306 = vadd.f32 %v1245, %v1298
        %v1307 = vadd.f32 %v1246, %v1299
        %v1308 = vadd.f32 %v1247, %v1300
        %v1309 = vadd.f32 %v1248, %v1301
        %v1310 = vadd.f32 %v1249, %v1302
        %s1311 = sadd.s32 %s762, 864
        %s1312 = scalar_lea.vmem [#allocation8], %s1311
        %v1313 = vld [vmem:[%s1312] sm:$0xff]
        %v1314 = vld [vmem:[%s1312 + $0x8] sm:$0xff]
        %v1315 = vld [vmem:[%s1312 + $0x10] sm:$0xff]
        %v1316 = vld [vmem:[%s1312 + $0x18] sm:$0xff]
        %v1317 = vld [vmem:[%s1312 + $0x20] sm:$0xff]
        %v1318 = vld [vmem:[%s1312 + $0x28] sm:$0xff]
        %v1319 = vld [vmem:[%s1312 + $0x30] sm:$0xff]
        %v1320 = vld [vmem:[%s1312 + $0x38] sm:$0xff]
        %v1321 = vstv %s229
        %v1322 = vmul.f32 %v1321, %v1313
        %v1323 = vmul.f32 %v1321, %v1314
        %v1324 = vmul.f32 %v1321, %v1315
        %v1325 = vmul.f32 %v1321, %v1316
        %v1326 = vmul.f32 %v1321, %v1317
        %v1327 = vmul.f32 %v1321, %v1318
        %v1328 = vmul.f32 %v1321, %v1319
        %v1329 = vmul.f32 %v1321, %v1320
        %v1330 = vadd.f32 %v1269, %v1322
        %v1331 = vadd.f32 %v1270, %v1323
        %v1332 = vadd.f32 %v1271, %v1324
        %v1333 = vadd.f32 %v1272, %v1325
        %v1334 = vadd.f32 %v1273, %v1326
        %v1335 = vadd.f32 %v1274, %v1327
        %v1336 = vadd.f32 %v1275, %v1328
        %v1337 = vadd.f32 %v1276, %v1329
        %v1338 = vstv %s247
        %v1339 = vmul.f32 %v1338, %v1313
        %v1340 = vmul.f32 %v1338, %v1314
        %v1341 = vmul.f32 %v1338, %v1315
        %v1342 = vmul.f32 %v1338, %v1316
        %v1343 = vmul.f32 %v1338, %v1317
        %v1344 = vmul.f32 %v1338, %v1318
        %v1345 = vmul.f32 %v1338, %v1319
        %v1346 = vmul.f32 %v1338, %v1320
        %v1347 = vadd.f32 %v1286, %v1339
        %v1348 = vadd.f32 %v1287, %v1340
        %v1349 = vadd.f32 %v1288, %v1341
        %v1350 = vadd.f32 %v1289, %v1342
        %v1351 = vadd.f32 %v1290, %v1343
        %v1352 = vadd.f32 %v1291, %v1344
        %v1353 = vadd.f32 %v1292, %v1345
        %v1354 = vadd.f32 %v1293, %v1346
        %v1355 = vstv %s265
        %v1356 = vmul.f32 %v1355, %v1313
        %v1357 = vmul.f32 %v1355, %v1314
        %v1358 = vmul.f32 %v1355, %v1315
        %v1359 = vmul.f32 %v1355, %v1316
        %v1360 = vmul.f32 %v1355, %v1317
        %v1361 = vmul.f32 %v1355, %v1318
        %v1362 = vmul.f32 %v1355, %v1319
        %v1363 = vmul.f32 %v1355, %v1320
        %v1364 = vadd.f32 %v1303, %v1356
        %v1365 = vadd.f32 %v1304, %v1357
        %v1366 = vadd.f32 %v1305, %v1358
        %v1367 = vadd.f32 %v1306, %v1359
        %v1368 = vadd.f32 %v1307, %v1360
        %v1369 = vadd.f32 %v1308, %v1361
        %v1370 = vadd.f32 %v1309, %v1362
        %v1371 = vadd.f32 %v1310, %v1363
        %1372 = vst [vmem:[%s209] sm:$0xff] %v1330
        %1373 = vst [vmem:[%s209 + $0x8] sm:$0xff] %v1331
        %1374 = vst [vmem:[%s209 + $0x10] sm:$0xff] %v1332
        %1375 = vst [vmem:[%s209 + $0x18] sm:$0xff] %v1333
        %1376 = vst [vmem:[%s209 + $0x20] sm:$0xff] %v1334
        %1377 = vst [vmem:[%s209 + $0x28] sm:$0xff] %v1335
        %1378 = vst [vmem:[%s209 + $0x30] sm:$0xff] %v1336
        %1379 = vst [vmem:[%s209 + $0x38] sm:$0xff] %v1337
        %s1380 = scalar_lea.vmem %s209, 128 [#allocation9]
        %1381 = vst [vmem:[%s1380] sm:$0xff] %v1347
        %1382 = vst [vmem:[%s1380 + $0x8] sm:$0xff] %v1348
        %1383 = vst [vmem:[%s1380 + $0x10] sm:$0xff] %v1349
        %1384 = vst [vmem:[%s1380 + $0x18] sm:$0xff] %v1350
        %1385 = vst [vmem:[%s1380 + $0x20] sm:$0xff] %v1351
        %1386 = vst [vmem:[%s1380 + $0x28] sm:$0xff] %v1352
        %1387 = vst [vmem:[%s1380 + $0x30] sm:$0xff] %v1353
        %1388 = vst [vmem:[%s1380 + $0x38] sm:$0xff] %v1354
        %s1389 = scalar_lea.vmem %s209, 256 [#allocation9]
        %1390 = vst [vmem:[%s1389] sm:$0xff] %v1364
        %1391 = vst [vmem:[%s1389 + $0x8] sm:$0xff] %v1365
        %1392 = vst [vmem:[%s1389 + $0x10] sm:$0xff] %v1366
        %1393 = vst [vmem:[%s1389 + $0x18] sm:$0xff] %v1367
        %1394 = vst [vmem:[%s1389 + $0x20] sm:$0xff] %v1368
        %1395 = vst [vmem:[%s1389 + $0x28] sm:$0xff] %v1369
        %1396 = vst [vmem:[%s1389 + $0x30] sm:$0xff] %v1370
        %1397 = vst [vmem:[%s1389 + $0x38] sm:$0xff] %v1371
        %s1398 = sadd.s32 %s211, 4
        %s1399 = smul.u32 %s1398, 16
        %s1400 = scalar_lea.vmem [#allocation8], %s1399
        %v1401 = vld [vmem:[%s1400] sm:$0xff]
        %v1402 = vld [vmem:[%s1400 + $0x8] sm:$0xff]
        %v1403 = vld [vmem:[%s1400 + $0x10] sm:$0xff]
        %v1404 = vld [vmem:[%s1400 + $0x18] sm:$0xff]
        %v1405 = vld [vmem:[%s1400 + $0x20] sm:$0xff]
        %v1406 = vld [vmem:[%s1400 + $0x28] sm:$0xff]
        %v1407 = vld [vmem:[%s1400 + $0x30] sm:$0xff]
        %v1408 = vld [vmem:[%s1400 + $0x38] sm:$0xff]
        %v1409 = vmul.f32 %v282, %v1401
        %v1410 = vmul.f32 %v282, %v1402
        %v1411 = vmul.f32 %v282, %v1403
        %v1412 = vmul.f32 %v282, %v1404
        %v1413 = vmul.f32 %v282, %v1405
        %v1414 = vmul.f32 %v282, %v1406
        %v1415 = vmul.f32 %v282, %v1407
        %v1416 = vmul.f32 %v282, %v1408
        %v1417 = vadd.f32 %v269, %v1409
        %v1418 = vadd.f32 %v269, %v1410
        %v1419 = vadd.f32 %v269, %v1411
        %v1420 = vadd.f32 %v269, %v1412
        %v1421 = vadd.f32 %v269, %v1413
        %v1422 = vadd.f32 %v269, %v1414
        %v1423 = vadd.f32 %v269, %v1415
        %v1424 = vadd.f32 %v269, %v1416
        %v1425 = vmul.f32 %v299, %v1401
        %v1426 = vmul.f32 %v299, %v1402
        %v1427 = vmul.f32 %v299, %v1403
        %v1428 = vmul.f32 %v299, %v1404
        %v1429 = vmul.f32 %v299, %v1405
        %v1430 = vmul.f32 %v299, %v1406
        %v1431 = vmul.f32 %v299, %v1407
        %v1432 = vmul.f32 %v299, %v1408
        %v1433 = vadd.f32 %v270, %v1425
        %v1434 = vadd.f32 %v270, %v1426
        %v1435 = vadd.f32 %v270, %v1427
        %v1436 = vadd.f32 %v270, %v1428
        %v1437 = vadd.f32 %v270, %v1429
        %v1438 = vadd.f32 %v270, %v1430
        %v1439 = vadd.f32 %v270, %v1431
        %v1440 = vadd.f32 %v270, %v1432
        %v1441 = vmul.f32 %v316, %v1401
        %v1442 = vmul.f32 %v316, %v1402
        %v1443 = vmul.f32 %v316, %v1403
        %v1444 = vmul.f32 %v316, %v1404
        %v1445 = vmul.f32 %v316, %v1405
        %v1446 = vmul.f32 %v316, %v1406
        %v1447 = vmul.f32 %v316, %v1407
        %v1448 = vmul.f32 %v316, %v1408
        %v1449 = vadd.f32 %v271, %v1441
        %v1450 = vadd.f32 %v271, %v1442
        %v1451 = vadd.f32 %v271, %v1443
        %v1452 = vadd.f32 %v271, %v1444
        %v1453 = vadd.f32 %v271, %v1445
        %v1454 = vadd.f32 %v271, %v1446
        %v1455 = vadd.f32 %v271, %v1447
        %v1456 = vadd.f32 %v271, %v1448
        %s1457 = sadd.s32 %s1399, 288
        %s1458 = scalar_lea.vmem [#allocation8], %s1457
        %v1459 = vld [vmem:[%s1458] sm:$0xff]
        %v1460 = vld [vmem:[%s1458 + $0x8] sm:$0xff]
        %v1461 = vld [vmem:[%s1458 + $0x10] sm:$0xff]
        %v1462 = vld [vmem:[%s1458 + $0x18] sm:$0xff]
        %v1463 = vld [vmem:[%s1458 + $0x20] sm:$0xff]
        %v1464 = vld [vmem:[%s1458 + $0x28] sm:$0xff]
        %v1465 = vld [vmem:[%s1458 + $0x30] sm:$0xff]
        %v1466 = vld [vmem:[%s1458 + $0x38] sm:$0xff]
        %v1467 = vmul.f32 %v343, %v1459
        %v1468 = vmul.f32 %v343, %v1460
        %v1469 = vmul.f32 %v343, %v1461
        %v1470 = vmul.f32 %v343, %v1462
        %v1471 = vmul.f32 %v343, %v1463
        %v1472 = vmul.f32 %v343, %v1464
        %v1473 = vmul.f32 %v343, %v1465
        %v1474 = vmul.f32 %v343, %v1466
        %v1475 = vadd.f32 %v1417, %v1467
        %v1476 = vadd.f32 %v1418, %v1468
        %v1477 = vadd.f32 %v1419, %v1469
        %v1478 = vadd.f32 %v1420, %v1470
        %v1479 = vadd.f32 %v1421, %v1471
        %v1480 = vadd.f32 %v1422, %v1472
        %v1481 = vadd.f32 %v1423, %v1473
        %v1482 = vadd.f32 %v1424, %v1474
        %v1483 = vmul.f32 %v360, %v1459
        %v1484 = vmul.f32 %v360, %v1460
        %v1485 = vmul.f32 %v360, %v1461
        %v1486 = vmul.f32 %v360, %v1462
        %v1487 = vmul.f32 %v360, %v1463
        %v1488 = vmul.f32 %v360, %v1464
        %v1489 = vmul.f32 %v360, %v1465
        %v1490 = vmul.f32 %v360, %v1466
        %v1491 = vadd.f32 %v1433, %v1483
        %v1492 = vadd.f32 %v1434, %v1484
        %v1493 = vadd.f32 %v1435, %v1485
        %v1494 = vadd.f32 %v1436, %v1486
        %v1495 = vadd.f32 %v1437, %v1487
        %v1496 = vadd.f32 %v1438, %v1488
        %v1497 = vadd.f32 %v1439, %v1489
        %v1498 = vadd.f32 %v1440, %v1490
        %v1499 = vmul.f32 %v377, %v1459
        %v1500 = vmul.f32 %v377, %v1460
        %v1501 = vmul.f32 %v377, %v1461
        %v1502 = vmul.f32 %v377, %v1462
        %v1503 = vmul.f32 %v377, %v1463
        %v1504 = vmul.f32 %v377, %v1464
        %v1505 = vmul.f32 %v377, %v1465
        %v1506 = vmul.f32 %v377, %v1466
        %v1507 = vadd.f32 %v1449, %v1499
        %v1508 = vadd.f32 %v1450, %v1500
        %v1509 = vadd.f32 %v1451, %v1501
        %v1510 = vadd.f32 %v1452, %v1502
        %v1511 = vadd.f32 %v1453, %v1503
        %v1512 = vadd.f32 %v1454, %v1504
        %v1513 = vadd.f32 %v1455, %v1505
        %v1514 = vadd.f32 %v1456, %v1506
        %s1515 = sadd.s32 %s1399, 576
        %s1516 = scalar_lea.vmem [#allocation8], %s1515
        %v1517 = vld [vmem:[%s1516] sm:$0xff]
        %v1518 = vld [vmem:[%s1516 + $0x8] sm:$0xff]
        %v1519 = vld [vmem:[%s1516 + $0x10] sm:$0xff]
        %v1520 = vld [vmem:[%s1516 + $0x18] sm:$0xff]
        %v1521 = vld [vmem:[%s1516 + $0x20] sm:$0xff]
        %v1522 = vld [vmem:[%s1516 + $0x28] sm:$0xff]
        %v1523 = vld [vmem:[%s1516 + $0x30] sm:$0xff]
        %v1524 = vld [vmem:[%s1516 + $0x38] sm:$0xff]
        %v1525 = vmul.f32 %v404, %v1517
        %v1526 = vmul.f32 %v404, %v1518
        %v1527 = vmul.f32 %v404, %v1519
        %v1528 = vmul.f32 %v404, %v1520
        %v1529 = vmul.f32 %v404, %v1521
        %v1530 = vmul.f32 %v404, %v1522
        %v1531 = vmul.f32 %v404, %v1523
        %v1532 = vmul.f32 %v404, %v1524
        %v1533 = vadd.f32 %v1475, %v1525
        %v1534 = vadd.f32 %v1476, %v1526
        %v1535 = vadd.f32 %v1477, %v1527
        %v1536 = vadd.f32 %v1478, %v1528
        %v1537 = vadd.f32 %v1479, %v1529
        %v1538 = vadd.f32 %v1480, %v1530
        %v1539 = vadd.f32 %v1481, %v1531
        %v1540 = vadd.f32 %v1482, %v1532
        %v1541 = vmul.f32 %v421, %v1517
        %v1542 = vmul.f32 %v421, %v1518
        %v1543 = vmul.f32 %v421, %v1519
        %v1544 = vmul.f32 %v421, %v1520
        %v1545 = vmul.f32 %v421, %v1521
        %v1546 = vmul.f32 %v421, %v1522
        %v1547 = vmul.f32 %v421, %v1523
        %v1548 = vmul.f32 %v421, %v1524
        %v1549 = vadd.f32 %v1491, %v1541
        %v1550 = vadd.f32 %v1492, %v1542
        %v1551 = vadd.f32 %v1493, %v1543
        %v1552 = vadd.f32 %v1494, %v1544
        %v1553 = vadd.f32 %v1495, %v1545
        %v1554 = vadd.f32 %v1496, %v1546
        %v1555 = vadd.f32 %v1497, %v1547
        %v1556 = vadd.f32 %v1498, %v1548
        %v1557 = vmul.f32 %v438, %v1517
        %v1558 = vmul.f32 %v438, %v1518
        %v1559 = vmul.f32 %v438, %v1519
        %v1560 = vmul.f32 %v438, %v1520
        %v1561 = vmul.f32 %v438, %v1521
        %v1562 = vmul.f32 %v438, %v1522
        %v1563 = vmul.f32 %v438, %v1523
        %v1564 = vmul.f32 %v438, %v1524
        %v1565 = vadd.f32 %v1507, %v1557
        %v1566 = vadd.f32 %v1508, %v1558
        %v1567 = vadd.f32 %v1509, %v1559
        %v1568 = vadd.f32 %v1510, %v1560
        %v1569 = vadd.f32 %v1511, %v1561
        %v1570 = vadd.f32 %v1512, %v1562
        %v1571 = vadd.f32 %v1513, %v1563
        %v1572 = vadd.f32 %v1514, %v1564
        %s1573 = sadd.s32 %s211, 5
        %s1574 = smul.u32 %s1573, 16
        %s1575 = scalar_lea.vmem [#allocation8], %s1574
        %v1576 = vld [vmem:[%s1575] sm:$0xff]
        %v1577 = vld [vmem:[%s1575 + $0x8] sm:$0xff]
        %v1578 = vld [vmem:[%s1575 + $0x10] sm:$0xff]
        %v1579 = vld [vmem:[%s1575 + $0x18] sm:$0xff]
        %v1580 = vld [vmem:[%s1575 + $0x20] sm:$0xff]
        %v1581 = vld [vmem:[%s1575 + $0x28] sm:$0xff]
        %v1582 = vld [vmem:[%s1575 + $0x30] sm:$0xff]
        %v1583 = vld [vmem:[%s1575 + $0x38] sm:$0xff]
        %v1584 = vmul.f32 %v466, %v1576
        %v1585 = vmul.f32 %v466, %v1577
        %v1586 = vmul.f32 %v466, %v1578
        %v1587 = vmul.f32 %v466, %v1579
        %v1588 = vmul.f32 %v466, %v1580
        %v1589 = vmul.f32 %v466, %v1581
        %v1590 = vmul.f32 %v466, %v1582
        %v1591 = vmul.f32 %v466, %v1583
        %v1592 = vadd.f32 %v1533, %v1584
        %v1593 = vadd.f32 %v1534, %v1585
        %v1594 = vadd.f32 %v1535, %v1586
        %v1595 = vadd.f32 %v1536, %v1587
        %v1596 = vadd.f32 %v1537, %v1588
        %v1597 = vadd.f32 %v1538, %v1589
        %v1598 = vadd.f32 %v1539, %v1590
        %v1599 = vadd.f32 %v1540, %v1591
        %v1600 = vmul.f32 %v483, %v1576
        %v1601 = vmul.f32 %v483, %v1577
        %v1602 = vmul.f32 %v483, %v1578
        %v1603 = vmul.f32 %v483, %v1579
        %v1604 = vmul.f32 %v483, %v1580
        %v1605 = vmul.f32 %v483, %v1581
        %v1606 = vmul.f32 %v483, %v1582
        %v1607 = vmul.f32 %v483, %v1583
        %v1608 = vadd.f32 %v1549, %v1600
        %v1609 = vadd.f32 %v1550, %v1601
        %v1610 = vadd.f32 %v1551, %v1602
        %v1611 = vadd.f32 %v1552, %v1603
        %v1612 = vadd.f32 %v1553, %v1604
        %v1613 = vadd.f32 %v1554, %v1605
        %v1614 = vadd.f32 %v1555, %v1606
        %v1615 = vadd.f32 %v1556, %v1607
        %v1616 = vmul.f32 %v500, %v1576
        %v1617 = vmul.f32 %v500, %v1577
        %v1618 = vmul.f32 %v500, %v1578
        %v1619 = vmul.f32 %v500, %v1579
        %v1620 = vmul.f32 %v500, %v1580
        %v1621 = vmul.f32 %v500, %v1581
        %v1622 = vmul.f32 %v500, %v1582
        %v1623 = vmul.f32 %v500, %v1583
        %v1624 = vadd.f32 %v1565, %v1616
        %v1625 = vadd.f32 %v1566, %v1617
        %v1626 = vadd.f32 %v1567, %v1618
        %v1627 = vadd.f32 %v1568, %v1619
        %v1628 = vadd.f32 %v1569, %v1620
        %v1629 = vadd.f32 %v1570, %v1621
        %v1630 = vadd.f32 %v1571, %v1622
        %v1631 = vadd.f32 %v1572, %v1623
        %s1632 = sadd.s32 %s1574, 288
        %s1633 = scalar_lea.vmem [#allocation8], %s1632
        %v1634 = vld [vmem:[%s1633] sm:$0xff]
        %v1635 = vld [vmem:[%s1633 + $0x8] sm:$0xff]
        %v1636 = vld [vmem:[%s1633 + $0x10] sm:$0xff]
        %v1637 = vld [vmem:[%s1633 + $0x18] sm:$0xff]
        %v1638 = vld [vmem:[%s1633 + $0x20] sm:$0xff]
        %v1639 = vld [vmem:[%s1633 + $0x28] sm:$0xff]
        %v1640 = vld [vmem:[%s1633 + $0x30] sm:$0xff]
        %v1641 = vld [vmem:[%s1633 + $0x38] sm:$0xff]
        %v1642 = vmul.f32 %v527, %v1634
        %v1643 = vmul.f32 %v527, %v1635
        %v1644 = vmul.f32 %v527, %v1636
        %v1645 = vmul.f32 %v527, %v1637
        %v1646 = vmul.f32 %v527, %v1638
        %v1647 = vmul.f32 %v527, %v1639
        %v1648 = vmul.f32 %v527, %v1640
        %v1649 = vmul.f32 %v527, %v1641
        %v1650 = vadd.f32 %v1592, %v1642
        %v1651 = vadd.f32 %v1593, %v1643
        %v1652 = vadd.f32 %v1594, %v1644
        %v1653 = vadd.f32 %v1595, %v1645
        %v1654 = vadd.f32 %v1596, %v1646
        %v1655 = vadd.f32 %v1597, %v1647
        %v1656 = vadd.f32 %v1598, %v1648
        %v1657 = vadd.f32 %v1599, %v1649
        %v1658 = vmul.f32 %v544, %v1634
        %v1659 = vmul.f32 %v544, %v1635
        %v1660 = vmul.f32 %v544, %v1636
        %v1661 = vmul.f32 %v544, %v1637
        %v1662 = vmul.f32 %v544, %v1638
        %v1663 = vmul.f32 %v544, %v1639
        %v1664 = vmul.f32 %v544, %v1640
        %v1665 = vmul.f32 %v544, %v1641
        %v1666 = vadd.f32 %v1608, %v1658
        %v1667 = vadd.f32 %v1609, %v1659
        %v1668 = vadd.f32 %v1610, %v1660
        %v1669 = vadd.f32 %v1611, %v1661
        %v1670 = vadd.f32 %v1612, %v1662
        %v1671 = vadd.f32 %v1613, %v1663
        %v1672 = vadd.f32 %v1614, %v1664
        %v1673 = vadd.f32 %v1615, %v1665
        %v1674 = vmul.f32 %v561, %v1634
        %v1675 = vmul.f32 %v561, %v1635
        %v1676 = vmul.f32 %v561, %v1636
        %v1677 = vmul.f32 %v561, %v1637
        %v1678 = vmul.f32 %v561, %v1638
        %v1679 = vmul.f32 %v561, %v1639
        %v1680 = vmul.f32 %v561, %v1640
        %v1681 = vmul.f32 %v561, %v1641
        %v1682 = vadd.f32 %v1624, %v1674
        %v1683 = vadd.f32 %v1625, %v1675
        %v1684 = vadd.f32 %v1626, %v1676
        %v1685 = vadd.f32 %v1627, %v1677
        %v1686 = vadd.f32 %v1628, %v1678
        %v1687 = vadd.f32 %v1629, %v1679
        %v1688 = vadd.f32 %v1630, %v1680
        %v1689 = vadd.f32 %v1631, %v1681
        %s1690 = sadd.s32 %s1574, 576
        %s1691 = scalar_lea.vmem [#allocation8], %s1690
        %v1692 = vld [vmem:[%s1691] sm:$0xff]
        %v1693 = vld [vmem:[%s1691 + $0x8] sm:$0xff]
        %v1694 = vld [vmem:[%s1691 + $0x10] sm:$0xff]
        %v1695 = vld [vmem:[%s1691 + $0x18] sm:$0xff]
        %v1696 = vld [vmem:[%s1691 + $0x20] sm:$0xff]
        %v1697 = vld [vmem:[%s1691 + $0x28] sm:$0xff]
        %v1698 = vld [vmem:[%s1691 + $0x30] sm:$0xff]
        %v1699 = vld [vmem:[%s1691 + $0x38] sm:$0xff]
        %v1700 = vmul.f32 %v588, %v1692
        %v1701 = vmul.f32 %v588, %v1693
        %v1702 = vmul.f32 %v588, %v1694
        %v1703 = vmul.f32 %v588, %v1695
        %v1704 = vmul.f32 %v588, %v1696
        %v1705 = vmul.f32 %v588, %v1697
        %v1706 = vmul.f32 %v588, %v1698
        %v1707 = vmul.f32 %v588, %v1699
        %v1708 = vadd.f32 %v1650, %v1700
        %v1709 = vadd.f32 %v1651, %v1701
        %v1710 = vadd.f32 %v1652, %v1702
        %v1711 = vadd.f32 %v1653, %v1703
        %v1712 = vadd.f32 %v1654, %v1704
        %v1713 = vadd.f32 %v1655, %v1705
        %v1714 = vadd.f32 %v1656, %v1706
        %v1715 = vadd.f32 %v1657, %v1707
        %v1716 = vmul.f32 %v605, %v1692
        %v1717 = vmul.f32 %v605, %v1693
        %v1718 = vmul.f32 %v605, %v1694
        %v1719 = vmul.f32 %v605, %v1695
        %v1720 = vmul.f32 %v605, %v1696
        %v1721 = vmul.f32 %v605, %v1697
        %v1722 = vmul.f32 %v605, %v1698
        %v1723 = vmul.f32 %v605, %v1699
        %v1724 = vadd.f32 %v1666, %v1716
        %v1725 = vadd.f32 %v1667, %v1717
        %v1726 = vadd.f32 %v1668, %v1718
        %v1727 = vadd.f32 %v1669, %v1719
        %v1728 = vadd.f32 %v1670, %v1720
        %v1729 = vadd.f32 %v1671, %v1721
        %v1730 = vadd.f32 %v1672, %v1722
        %v1731 = vadd.f32 %v1673, %v1723
        %v1732 = vmul.f32 %v622, %v1692
        %v1733 = vmul.f32 %v622, %v1693
        %v1734 = vmul.f32 %v622, %v1694
        %v1735 = vmul.f32 %v622, %v1695
        %v1736 = vmul.f32 %v622, %v1696
        %v1737 = vmul.f32 %v622, %v1697
        %v1738 = vmul.f32 %v622, %v1698
        %v1739 = vmul.f32 %v622, %v1699
        %v1740 = vadd.f32 %v1682, %v1732
        %v1741 = vadd.f32 %v1683, %v1733
        %v1742 = vadd.f32 %v1684, %v1734
        %v1743 = vadd.f32 %v1685, %v1735
        %v1744 = vadd.f32 %v1686, %v1736
        %v1745 = vadd.f32 %v1687, %v1737
        %v1746 = vadd.f32 %v1688, %v1738
        %v1747 = vadd.f32 %v1689, %v1739
        %s1748 = sadd.s32 %s211, 6
        %s1749 = smul.u32 %s1748, 16
        %s1750 = scalar_lea.vmem [#allocation8], %s1749
        %v1751 = vld [vmem:[%s1750] sm:$0xff]
        %v1752 = vld [vmem:[%s1750 + $0x8] sm:$0xff]
        %v1753 = vld [vmem:[%s1750 + $0x10] sm:$0xff]
        %v1754 = vld [vmem:[%s1750 + $0x18] sm:$0xff]
        %v1755 = vld [vmem:[%s1750 + $0x20] sm:$0xff]
        %v1756 = vld [vmem:[%s1750 + $0x28] sm:$0xff]
        %v1757 = vld [vmem:[%s1750 + $0x30] sm:$0xff]
        %v1758 = vld [vmem:[%s1750 + $0x38] sm:$0xff]
        %v1759 = vmul.f32 %v650, %v1751
        %v1760 = vmul.f32 %v650, %v1752
        %v1761 = vmul.f32 %v650, %v1753
        %v1762 = vmul.f32 %v650, %v1754
        %v1763 = vmul.f32 %v650, %v1755
        %v1764 = vmul.f32 %v650, %v1756
        %v1765 = vmul.f32 %v650, %v1757
        %v1766 = vmul.f32 %v650, %v1758
        %v1767 = vadd.f32 %v1708, %v1759
        %v1768 = vadd.f32 %v1709, %v1760
        %v1769 = vadd.f32 %v1710, %v1761
        %v1770 = vadd.f32 %v1711, %v1762
        %v1771 = vadd.f32 %v1712, %v1763
        %v1772 = vadd.f32 %v1713, %v1764
        %v1773 = vadd.f32 %v1714, %v1765
        %v1774 = vadd.f32 %v1715, %v1766
        %v1775 = vmul.f32 %v667, %v1751
        %v1776 = vmul.f32 %v667, %v1752
        %v1777 = vmul.f32 %v667, %v1753
        %v1778 = vmul.f32 %v667, %v1754
        %v1779 = vmul.f32 %v667, %v1755
        %v1780 = vmul.f32 %v667, %v1756
        %v1781 = vmul.f32 %v667, %v1757
        %v1782 = vmul.f32 %v667, %v1758
        %v1783 = vadd.f32 %v1724, %v1775
        %v1784 = vadd.f32 %v1725, %v1776
        %v1785 = vadd.f32 %v1726, %v1777
        %v1786 = vadd.f32 %v1727, %v1778
        %v1787 = vadd.f32 %v1728, %v1779
        %v1788 = vadd.f32 %v1729, %v1780
        %v1789 = vadd.f32 %v1730, %v1781
        %v1790 = vadd.f32 %v1731, %v1782
        %v1791 = vmul.f32 %v684, %v1751
        %v1792 = vmul.f32 %v684, %v1752
        %v1793 = vmul.f32 %v684, %v1753
        %v1794 = vmul.f32 %v684, %v1754
        %v1795 = vmul.f32 %v684, %v1755
        %v1796 = vmul.f32 %v684, %v1756
        %v1797 = vmul.f32 %v684, %v1757
        %v1798 = vmul.f32 %v684, %v1758
        %v1799 = vadd.f32 %v1740, %v1791
        %v1800 = vadd.f32 %v1741, %v1792
        %v1801 = vadd.f32 %v1742, %v1793
        %v1802 = vadd.f32 %v1743, %v1794
        %v1803 = vadd.f32 %v1744, %v1795
        %v1804 = vadd.f32 %v1745, %v1796
        %v1805 = vadd.f32 %v1746, %v1797
        %v1806 = vadd.f32 %v1747, %v1798
        %s1807 = sadd.s32 %s1749, 288
        %s1808 = scalar_lea.vmem [#allocation8], %s1807
        %v1809 = vld [vmem:[%s1808] sm:$0xff]
        %v1810 = vld [vmem:[%s1808 + $0x8] sm:$0xff]
        %v1811 = vld [vmem:[%s1808 + $0x10] sm:$0xff]
        %v1812 = vld [vmem:[%s1808 + $0x18] sm:$0xff]
        %v1813 = vld [vmem:[%s1808 + $0x20] sm:$0xff]
        %v1814 = vld [vmem:[%s1808 + $0x28] sm:$0xff]
        %v1815 = vld [vmem:[%s1808 + $0x30] sm:$0xff]
        %v1816 = vld [vmem:[%s1808 + $0x38] sm:$0xff]
        %v1817 = vmul.f32 %v711, %v1809
        %v1818 = vmul.f32 %v711, %v1810
        %v1819 = vmul.f32 %v711, %v1811
        %v1820 = vmul.f32 %v711, %v1812
        %v1821 = vmul.f32 %v711, %v1813
        %v1822 = vmul.f32 %v711, %v1814
        %v1823 = vmul.f32 %v711, %v1815
        %v1824 = vmul.f32 %v711, %v1816
        %v1825 = vadd.f32 %v1767, %v1817
        %v1826 = vadd.f32 %v1768, %v1818
        %v1827 = vadd.f32 %v1769, %v1819
        %v1828 = vadd.f32 %v1770, %v1820
        %v1829 = vadd.f32 %v1771, %v1821
        %v1830 = vadd.f32 %v1772, %v1822
        %v1831 = vadd.f32 %v1773, %v1823
        %v1832 = vadd.f32 %v1774, %v1824
        %v1833 = vmul.f32 %v728, %v1809
        %v1834 = vmul.f32 %v728, %v1810
        %v1835 = vmul.f32 %v728, %v1811
        %v1836 = vmul.f32 %v728, %v1812
        %v1837 = vmul.f32 %v728, %v1813
        %v1838 = vmul.f32 %v728, %v1814
        %v1839 = vmul.f32 %v728, %v1815
        %v1840 = vmul.f32 %v728, %v1816
        %v1841 = vadd.f32 %v1783, %v1833
        %v1842 = vadd.f32 %v1784, %v1834
        %v1843 = vadd.f32 %v1785, %v1835
        %v1844 = vadd.f32 %v1786, %v1836
        %v1845 = vadd.f32 %v1787, %v1837
        %v1846 = vadd.f32 %v1788, %v1838
        %v1847 = vadd.f32 %v1789, %v1839
        %v1848 = vadd.f32 %v1790, %v1840
        %v1849 = vmul.f32 %v745, %v1809
        %v1850 = vmul.f32 %v745, %v1810
        %v1851 = vmul.f32 %v745, %v1811
        %v1852 = vmul.f32 %v745, %v1812
        %v1853 = vmul.f32 %v745, %v1813
        %v1854 = vmul.f32 %v745, %v1814
        %v1855 = vmul.f32 %v745, %v1815
        %v1856 = vmul.f32 %v745, %v1816
        %v1857 = vadd.f32 %v1799, %v1849
        %v1858 = vadd.f32 %v1800, %v1850
        %v1859 = vadd.f32 %v1801, %v1851
        %v1860 = vadd.f32 %v1802, %v1852
        %v1861 = vadd.f32 %v1803, %v1853
        %v1862 = vadd.f32 %v1804, %v1854
        %v1863 = vadd.f32 %v1805, %v1855
        %v1864 = vadd.f32 %v1806, %v1856
        %s1865 = sadd.s32 %s1749, 576
        %s1866 = scalar_lea.vmem [#allocation8], %s1865
        %v1867 = vld [vmem:[%s1866] sm:$0xff]
        %v1868 = vld [vmem:[%s1866 + $0x8] sm:$0xff]
        %v1869 = vld [vmem:[%s1866 + $0x10] sm:$0xff]
        %v1870 = vld [vmem:[%s1866 + $0x18] sm:$0xff]
        %v1871 = vld [vmem:[%s1866 + $0x20] sm:$0xff]
        %v1872 = vld [vmem:[%s1866 + $0x28] sm:$0xff]
        %v1873 = vld [vmem:[%s1866 + $0x30] sm:$0xff]
        %v1874 = vld [vmem:[%s1866 + $0x38] sm:$0xff]
        %v1875 = vmul.f32 %v772, %v1867
        %v1876 = vmul.f32 %v772, %v1868
        %v1877 = vmul.f32 %v772, %v1869
        %v1878 = vmul.f32 %v772, %v1870
        %v1879 = vmul.f32 %v772, %v1871
        %v1880 = vmul.f32 %v772, %v1872
        %v1881 = vmul.f32 %v772, %v1873
        %v1882 = vmul.f32 %v772, %v1874
        %v1883 = vadd.f32 %v1825, %v1875
        %v1884 = vadd.f32 %v1826, %v1876
        %v1885 = vadd.f32 %v1827, %v1877
        %v1886 = vadd.f32 %v1828, %v1878
        %v1887 = vadd.f32 %v1829, %v1879
        %v1888 = vadd.f32 %v1830, %v1880
        %v1889 = vadd.f32 %v1831, %v1881
        %v1890 = vadd.f32 %v1832, %v1882
        %v1891 = vmul.f32 %v789, %v1867
        %v1892 = vmul.f32 %v789, %v1868
        %v1893 = vmul.f32 %v789, %v1869
        %v1894 = vmul.f32 %v789, %v1870
        %v1895 = vmul.f32 %v789, %v1871
        %v1896 = vmul.f32 %v789, %v1872
        %v1897 = vmul.f32 %v789, %v1873
        %v1898 = vmul.f32 %v789, %v1874
        %v1899 = vadd.f32 %v1841, %v1891
        %v1900 = vadd.f32 %v1842, %v1892
        %v1901 = vadd.f32 %v1843, %v1893
        %v1902 = vadd.f32 %v1844, %v1894
        %v1903 = vadd.f32 %v1845, %v1895
        %v1904 = vadd.f32 %v1846, %v1896
        %v1905 = vadd.f32 %v1847, %v1897
        %v1906 = vadd.f32 %v1848, %v1898
        %v1907 = vmul.f32 %v806, %v1867
        %v1908 = vmul.f32 %v806, %v1868
        %v1909 = vmul.f32 %v806, %v1869
        %v1910 = vmul.f32 %v806, %v1870
        %v1911 = vmul.f32 %v806, %v1871
        %v1912 = vmul.f32 %v806, %v1872
        %v1913 = vmul.f32 %v806, %v1873
        %v1914 = vmul.f32 %v806, %v1874
        %v1915 = vadd.f32 %v1857, %v1907
        %v1916 = vadd.f32 %v1858, %v1908
        %v1917 = vadd.f32 %v1859, %v1909
        %v1918 = vadd.f32 %v1860, %v1910
        %v1919 = vadd.f32 %v1861, %v1911
        %v1920 = vadd.f32 %v1862, %v1912
        %v1921 = vadd.f32 %v1863, %v1913
        %v1922 = vadd.f32 %v1864, %v1914
        %s1923 = sadd.s32 %s1399, 864
        %s1924 = scalar_lea.vmem [#allocation8], %s1923
        %v1925 = vld [vmem:[%s1924] sm:$0xff]
        %v1926 = vld [vmem:[%s1924 + $0x8] sm:$0xff]
        %v1927 = vld [vmem:[%s1924 + $0x10] sm:$0xff]
        %v1928 = vld [vmem:[%s1924 + $0x18] sm:$0xff]
        %v1929 = vld [vmem:[%s1924 + $0x20] sm:$0xff]
        %v1930 = vld [vmem:[%s1924 + $0x28] sm:$0xff]
        %v1931 = vld [vmem:[%s1924 + $0x30] sm:$0xff]
        %v1932 = vld [vmem:[%s1924 + $0x38] sm:$0xff]
        %v1933 = vmul.f32 %v833, %v1925
        %v1934 = vmul.f32 %v833, %v1926
        %v1935 = vmul.f32 %v833, %v1927
        %v1936 = vmul.f32 %v833, %v1928
        %v1937 = vmul.f32 %v833, %v1929
        %v1938 = vmul.f32 %v833, %v1930
        %v1939 = vmul.f32 %v833, %v1931
        %v1940 = vmul.f32 %v833, %v1932
        %v1941 = vadd.f32 %v1883, %v1933
        %v1942 = vadd.f32 %v1884, %v1934
        %v1943 = vadd.f32 %v1885, %v1935
        %v1944 = vadd.f32 %v1886, %v1936
        %v1945 = vadd.f32 %v1887, %v1937
        %v1946 = vadd.f32 %v1888, %v1938
        %v1947 = vadd.f32 %v1889, %v1939
        %v1948 = vadd.f32 %v1890, %v1940
        %v1949 = vmul.f32 %v850, %v1925
        %v1950 = vmul.f32 %v850, %v1926
        %v1951 = vmul.f32 %v850, %v1927
        %v1952 = vmul.f32 %v850, %v1928
        %v1953 = vmul.f32 %v850, %v1929
        %v1954 = vmul.f32 %v850, %v1930
        %v1955 = vmul.f32 %v850, %v1931
        %v1956 = vmul.f32 %v850, %v1932
        %v1957 = vadd.f32 %v1899, %v1949
        %v1958 = vadd.f32 %v1900, %v1950
        %v1959 = vadd.f32 %v1901, %v1951
        %v1960 = vadd.f32 %v1902, %v1952
        %v1961 = vadd.f32 %v1903, %v1953
        %v1962 = vadd.f32 %v1904, %v1954
        %v1963 = vadd.f32 %v1905, %v1955
        %v1964 = vadd.f32 %v1906, %v1956
        %v1965 = vmul.f32 %v867, %v1925
        %v1966 = vmul.f32 %v867, %v1926
        %v1967 = vmul.f32 %v867, %v1927
        %v1968 = vmul.f32 %v867, %v1928
        %v1969 = vmul.f32 %v867, %v1929
        %v1970 = vmul.f32 %v867, %v1930
        %v1971 = vmul.f32 %v867, %v1931
        %v1972 = vmul.f32 %v867, %v1932
        %v1973 = vadd.f32 %v1915, %v1965
        %v1974 = vadd.f32 %v1916, %v1966
        %v1975 = vadd.f32 %v1917, %v1967
        %v1976 = vadd.f32 %v1918, %v1968
        %v1977 = vadd.f32 %v1919, %v1969
        %v1978 = vadd.f32 %v1920, %v1970
        %v1979 = vadd.f32 %v1921, %v1971
        %v1980 = vadd.f32 %v1922, %v1972
        %s1981 = sadd.s32 %s1457, 864
        %s1982 = scalar_lea.vmem [#allocation8], %s1981
        %v1983 = vld [vmem:[%s1982] sm:$0xff]
        %v1984 = vld [vmem:[%s1982 + $0x8] sm:$0xff]
        %v1985 = vld [vmem:[%s1982 + $0x10] sm:$0xff]
        %v1986 = vld [vmem:[%s1982 + $0x18] sm:$0xff]
        %v1987 = vld [vmem:[%s1982 + $0x20] sm:$0xff]
        %v1988 = vld [vmem:[%s1982 + $0x28] sm:$0xff]
        %v1989 = vld [vmem:[%s1982 + $0x30] sm:$0xff]
        %v1990 = vld [vmem:[%s1982 + $0x38] sm:$0xff]
        %v1991 = vmul.f32 %v894, %v1983
        %v1992 = vmul.f32 %v894, %v1984
        %v1993 = vmul.f32 %v894, %v1985
        %v1994 = vmul.f32 %v894, %v1986
        %v1995 = vmul.f32 %v894, %v1987
        %v1996 = vmul.f32 %v894, %v1988
        %v1997 = vmul.f32 %v894, %v1989
        %v1998 = vmul.f32 %v894, %v1990
        %v1999 = vadd.f32 %v1941, %v1991
        %v2000 = vadd.f32 %v1942, %v1992
        %v2001 = vadd.f32 %v1943, %v1993
        %v2002 = vadd.f32 %v1944, %v1994
        %v2003 = vadd.f32 %v1945, %v1995
        %v2004 = vadd.f32 %v1946, %v1996
        %v2005 = vadd.f32 %v1947, %v1997
        %v2006 = vadd.f32 %v1948, %v1998
        %v2007 = vmul.f32 %v911, %v1983
        %v2008 = vmul.f32 %v911, %v1984
        %v2009 = vmul.f32 %v911, %v1985
        %v2010 = vmul.f32 %v911, %v1986
        %v2011 = vmul.f32 %v911, %v1987
        %v2012 = vmul.f32 %v911, %v1988
        %v2013 = vmul.f32 %v911, %v1989
        %v2014 = vmul.f32 %v911, %v1990
        %v2015 = vadd.f32 %v1957, %v2007
        %v2016 = vadd.f32 %v1958, %v2008
        %v2017 = vadd.f32 %v1959, %v2009
        %v2018 = vadd.f32 %v1960, %v2010
        %v2019 = vadd.f32 %v1961, %v2011
        %v2020 = vadd.f32 %v1962, %v2012
        %v2021 = vadd.f32 %v1963, %v2013
        %v2022 = vadd.f32 %v1964, %v2014
        %v2023 = vmul.f32 %v928, %v1983
        %v2024 = vmul.f32 %v928, %v1984
        %v2025 = vmul.f32 %v928, %v1985
        %v2026 = vmul.f32 %v928, %v1986
        %v2027 = vmul.f32 %v928, %v1987
        %v2028 = vmul.f32 %v928, %v1988
        %v2029 = vmul.f32 %v928, %v1989
        %v2030 = vmul.f32 %v928, %v1990
        %v2031 = vadd.f32 %v1973, %v2023
        %v2032 = vadd.f32 %v1974, %v2024
        %v2033 = vadd.f32 %v1975, %v2025
        %v2034 = vadd.f32 %v1976, %v2026
        %v2035 = vadd.f32 %v1977, %v2027
        %v2036 = vadd.f32 %v1978, %v2028
        %v2037 = vadd.f32 %v1979, %v2029
        %v2038 = vadd.f32 %v1980, %v2030
        %s2039 = sadd.s32 %s1515, 864
        %s2040 = scalar_lea.vmem [#allocation8], %s2039
        %v2041 = vld [vmem:[%s2040] sm:$0xff]
        %v2042 = vld [vmem:[%s2040 + $0x8] sm:$0xff]
        %v2043 = vld [vmem:[%s2040 + $0x10] sm:$0xff]
        %v2044 = vld [vmem:[%s2040 + $0x18] sm:$0xff]
        %v2045 = vld [vmem:[%s2040 + $0x20] sm:$0xff]
        %v2046 = vld [vmem:[%s2040 + $0x28] sm:$0xff]
        %v2047 = vld [vmem:[%s2040 + $0x30] sm:$0xff]
        %v2048 = vld [vmem:[%s2040 + $0x38] sm:$0xff]
        %v2049 = vmul.f32 %v955, %v2041
        %v2050 = vmul.f32 %v955, %v2042
        %v2051 = vmul.f32 %v955, %v2043
        %v2052 = vmul.f32 %v955, %v2044
        %v2053 = vmul.f32 %v955, %v2045
        %v2054 = vmul.f32 %v955, %v2046
        %v2055 = vmul.f32 %v955, %v2047
        %v2056 = vmul.f32 %v955, %v2048
        %v2057 = vadd.f32 %v1999, %v2049
        %v2058 = vadd.f32 %v2000, %v2050
        %v2059 = vadd.f32 %v2001, %v2051
        %v2060 = vadd.f32 %v2002, %v2052
        %v2061 = vadd.f32 %v2003, %v2053
        %v2062 = vadd.f32 %v2004, %v2054
        %v2063 = vadd.f32 %v2005, %v2055
        %v2064 = vadd.f32 %v2006, %v2056
        %v2065 = vmul.f32 %v972, %v2041
        %v2066 = vmul.f32 %v972, %v2042
        %v2067 = vmul.f32 %v972, %v2043
        %v2068 = vmul.f32 %v972, %v2044
        %v2069 = vmul.f32 %v972, %v2045
        %v2070 = vmul.f32 %v972, %v2046
        %v2071 = vmul.f32 %v972, %v2047
        %v2072 = vmul.f32 %v972, %v2048
        %v2073 = vadd.f32 %v2015, %v2065
        %v2074 = vadd.f32 %v2016, %v2066
        %v2075 = vadd.f32 %v2017, %v2067
        %v2076 = vadd.f32 %v2018, %v2068
        %v2077 = vadd.f32 %v2019, %v2069
        %v2078 = vadd.f32 %v2020, %v2070
        %v2079 = vadd.f32 %v2021, %v2071
        %v2080 = vadd.f32 %v2022, %v2072
        %v2081 = vmul.f32 %v989, %v2041
        %v2082 = vmul.f32 %v989, %v2042
        %v2083 = vmul.f32 %v989, %v2043
        %v2084 = vmul.f32 %v989, %v2044
        %v2085 = vmul.f32 %v989, %v2045
        %v2086 = vmul.f32 %v989, %v2046
        %v2087 = vmul.f32 %v989, %v2047
        %v2088 = vmul.f32 %v989, %v2048
        %v2089 = vadd.f32 %v2031, %v2081
        %v2090 = vadd.f32 %v2032, %v2082
        %v2091 = vadd.f32 %v2033, %v2083
        %v2092 = vadd.f32 %v2034, %v2084
        %v2093 = vadd.f32 %v2035, %v2085
        %v2094 = vadd.f32 %v2036, %v2086
        %v2095 = vadd.f32 %v2037, %v2087
        %v2096 = vadd.f32 %v2038, %v2088
        %s2097 = sadd.s32 %s1574, 864
        %s2098 = scalar_lea.vmem [#allocation8], %s2097
        %v2099 = vld [vmem:[%s2098] sm:$0xff]
        %v2100 = vld [vmem:[%s2098 + $0x8] sm:$0xff]
        %v2101 = vld [vmem:[%s2098 + $0x10] sm:$0xff]
        %v2102 = vld [vmem:[%s2098 + $0x18] sm:$0xff]
        %v2103 = vld [vmem:[%s2098 + $0x20] sm:$0xff]
        %v2104 = vld [vmem:[%s2098 + $0x28] sm:$0xff]
        %v2105 = vld [vmem:[%s2098 + $0x30] sm:$0xff]
        %v2106 = vld [vmem:[%s2098 + $0x38] sm:$0xff]
        %v2107 = vmul.f32 %v1016, %v2099
        %v2108 = vmul.f32 %v1016, %v2100
        %v2109 = vmul.f32 %v1016, %v2101
        %v2110 = vmul.f32 %v1016, %v2102
        %v2111 = vmul.f32 %v1016, %v2103
        %v2112 = vmul.f32 %v1016, %v2104
        %v2113 = vmul.f32 %v1016, %v2105
        %v2114 = vmul.f32 %v1016, %v2106
        %v2115 = vadd.f32 %v2057, %v2107
        %v2116 = vadd.f32 %v2058, %v2108
        %v2117 = vadd.f32 %v2059, %v2109
        %v2118 = vadd.f32 %v2060, %v2110
        %v2119 = vadd.f32 %v2061, %v2111
        %v2120 = vadd.f32 %v2062, %v2112
        %v2121 = vadd.f32 %v2063, %v2113
        %v2122 = vadd.f32 %v2064, %v2114
        %v2123 = vmul.f32 %v1033, %v2099
        %v2124 = vmul.f32 %v1033, %v2100
        %v2125 = vmul.f32 %v1033, %v2101
        %v2126 = vmul.f32 %v1033, %v2102
        %v2127 = vmul.f32 %v1033, %v2103
        %v2128 = vmul.f32 %v1033, %v2104
        %v2129 = vmul.f32 %v1033, %v2105
        %v2130 = vmul.f32 %v1033, %v2106
        %v2131 = vadd.f32 %v2073, %v2123
        %v2132 = vadd.f32 %v2074, %v2124
        %v2133 = vadd.f32 %v2075, %v2125
        %v2134 = vadd.f32 %v2076, %v2126
        %v2135 = vadd.f32 %v2077, %v2127
        %v2136 = vadd.f32 %v2078, %v2128
        %v2137 = vadd.f32 %v2079, %v2129
        %v2138 = vadd.f32 %v2080, %v2130
        %v2139 = vmul.f32 %v1050, %v2099
        %v2140 = vmul.f32 %v1050, %v2100
        %v2141 = vmul.f32 %v1050, %v2101
        %v2142 = vmul.f32 %v1050, %v2102
        %v2143 = vmul.f32 %v1050, %v2103
        %v2144 = vmul.f32 %v1050, %v2104
        %v2145 = vmul.f32 %v1050, %v2105
        %v2146 = vmul.f32 %v1050, %v2106
        %v2147 = vadd.f32 %v2089, %v2139
        %v2148 = vadd.f32 %v2090, %v2140
        %v2149 = vadd.f32 %v2091, %v2141
        %v2150 = vadd.f32 %v2092, %v2142
        %v2151 = vadd.f32 %v2093, %v2143
        %v2152 = vadd.f32 %v2094, %v2144
        %v2153 = vadd.f32 %v2095, %v2145
        %v2154 = vadd.f32 %v2096, %v2146
        %s2155 = sadd.s32 %s1632, 864
        %s2156 = scalar_lea.vmem [#allocation8], %s2155
        %v2157 = vld [vmem:[%s2156] sm:$0xff]
        %v2158 = vld [vmem:[%s2156 + $0x8] sm:$0xff]
        %v2159 = vld [vmem:[%s2156 + $0x10] sm:$0xff]
        %v2160 = vld [vmem:[%s2156 + $0x18] sm:$0xff]
        %v2161 = vld [vmem:[%s2156 + $0x20] sm:$0xff]
        %v2162 = vld [vmem:[%s2156 + $0x28] sm:$0xff]
        %v2163 = vld [vmem:[%s2156 + $0x30] sm:$0xff]
        %v2164 = vld [vmem:[%s2156 + $0x38] sm:$0xff]
        %v2165 = vmul.f32 %v1077, %v2157
        %v2166 = vmul.f32 %v1077, %v2158
        %v2167 = vmul.f32 %v1077, %v2159
        %v2168 = vmul.f32 %v1077, %v2160
        %v2169 = vmul.f32 %v1077, %v2161
        %v2170 = vmul.f32 %v1077, %v2162
        %v2171 = vmul.f32 %v1077, %v2163
        %v2172 = vmul.f32 %v1077, %v2164
        %v2173 = vadd.f32 %v2115, %v2165
        %v2174 = vadd.f32 %v2116, %v2166
        %v2175 = vadd.f32 %v2117, %v2167
        %v2176 = vadd.f32 %v2118, %v2168
        %v2177 = vadd.f32 %v2119, %v2169
        %v2178 = vadd.f32 %v2120, %v2170
        %v2179 = vadd.f32 %v2121, %v2171
        %v2180 = vadd.f32 %v2122, %v2172
        %v2181 = vmul.f32 %v1094, %v2157
        %v2182 = vmul.f32 %v1094, %v2158
        %v2183 = vmul.f32 %v1094, %v2159
        %v2184 = vmul.f32 %v1094, %v2160
        %v2185 = vmul.f32 %v1094, %v2161
        %v2186 = vmul.f32 %v1094, %v2162
        %v2187 = vmul.f32 %v1094, %v2163
        %v2188 = vmul.f32 %v1094, %v2164
        %v2189 = vadd.f32 %v2131, %v2181
        %v2190 = vadd.f32 %v2132, %v2182
        %v2191 = vadd.f32 %v2133, %v2183
        %v2192 = vadd.f32 %v2134, %v2184
        %v2193 = vadd.f32 %v2135, %v2185
        %v2194 = vadd.f32 %v2136, %v2186
        %v2195 = vadd.f32 %v2137, %v2187
        %v2196 = vadd.f32 %v2138, %v2188
        %v2197 = vmul.f32 %v1111, %v2157
        %v2198 = vmul.f32 %v1111, %v2158
        %v2199 = vmul.f32 %v1111, %v2159
        %v2200 = vmul.f32 %v1111, %v2160
        %v2201 = vmul.f32 %v1111, %v2161
        %v2202 = vmul.f32 %v1111, %v2162
        %v2203 = vmul.f32 %v1111, %v2163
        %v2204 = vmul.f32 %v1111, %v2164
        %v2205 = vadd.f32 %v2147, %v2197
        %v2206 = vadd.f32 %v2148, %v2198
        %v2207 = vadd.f32 %v2149, %v2199
        %v2208 = vadd.f32 %v2150, %v2200
        %v2209 = vadd.f32 %v2151, %v2201
        %v2210 = vadd.f32 %v2152, %v2202
        %v2211 = vadd.f32 %v2153, %v2203
        %v2212 = vadd.f32 %v2154, %v2204
        %s2213 = sadd.s32 %s1690, 864
        %s2214 = scalar_lea.vmem [#allocation8], %s2213
        %v2215 = vld [vmem:[%s2214] sm:$0xff]
        %v2216 = vld [vmem:[%s2214 + $0x8] sm:$0xff]
        %v2217 = vld [vmem:[%s2214 + $0x10] sm:$0xff]
        %v2218 = vld [vmem:[%s2214 + $0x18] sm:$0xff]
        %v2219 = vld [vmem:[%s2214 + $0x20] sm:$0xff]
        %v2220 = vld [vmem:[%s2214 + $0x28] sm:$0xff]
        %v2221 = vld [vmem:[%s2214 + $0x30] sm:$0xff]
        %v2222 = vld [vmem:[%s2214 + $0x38] sm:$0xff]
        %v2223 = vmul.f32 %v1138, %v2215
        %v2224 = vmul.f32 %v1138, %v2216
        %v2225 = vmul.f32 %v1138, %v2217
        %v2226 = vmul.f32 %v1138, %v2218
        %v2227 = vmul.f32 %v1138, %v2219
        %v2228 = vmul.f32 %v1138, %v2220
        %v2229 = vmul.f32 %v1138, %v2221
        %v2230 = vmul.f32 %v1138, %v2222
        %v2231 = vadd.f32 %v2173, %v2223
        %v2232 = vadd.f32 %v2174, %v2224
        %v2233 = vadd.f32 %v2175, %v2225
        %v2234 = vadd.f32 %v2176, %v2226
        %v2235 = vadd.f32 %v2177, %v2227
        %v2236 = vadd.f32 %v2178, %v2228
        %v2237 = vadd.f32 %v2179, %v2229
        %v2238 = vadd.f32 %v2180, %v2230
        %v2239 = vmul.f32 %v1155, %v2215
        %v2240 = vmul.f32 %v1155, %v2216
        %v2241 = vmul.f32 %v1155, %v2217
        %v2242 = vmul.f32 %v1155, %v2218
        %v2243 = vmul.f32 %v1155, %v2219
        %v2244 = vmul.f32 %v1155, %v2220
        %v2245 = vmul.f32 %v1155, %v2221
        %v2246 = vmul.f32 %v1155, %v2222
        %v2247 = vadd.f32 %v2189, %v2239
        %v2248 = vadd.f32 %v2190, %v2240
        %v2249 = vadd.f32 %v2191, %v2241
        %v2250 = vadd.f32 %v2192, %v2242
        %v2251 = vadd.f32 %v2193, %v2243
        %v2252 = vadd.f32 %v2194, %v2244
        %v2253 = vadd.f32 %v2195, %v2245
        %v2254 = vadd.f32 %v2196, %v2246
        %v2255 = vmul.f32 %v1172, %v2215
        %v2256 = vmul.f32 %v1172, %v2216
        %v2257 = vmul.f32 %v1172, %v2217
        %v2258 = vmul.f32 %v1172, %v2218
        %v2259 = vmul.f32 %v1172, %v2219
        %v2260 = vmul.f32 %v1172, %v2220
        %v2261 = vmul.f32 %v1172, %v2221
        %v2262 = vmul.f32 %v1172, %v2222
        %v2263 = vadd.f32 %v2205, %v2255
        %v2264 = vadd.f32 %v2206, %v2256
        %v2265 = vadd.f32 %v2207, %v2257
        %v2266 = vadd.f32 %v2208, %v2258
        %v2267 = vadd.f32 %v2209, %v2259
        %v2268 = vadd.f32 %v2210, %v2260
        %v2269 = vadd.f32 %v2211, %v2261
        %v2270 = vadd.f32 %v2212, %v2262
        %s2271 = sadd.s32 %s1749, 864
        %s2272 = scalar_lea.vmem [#allocation8], %s2271
        %v2273 = vld [vmem:[%s2272] sm:$0xff]
        %v2274 = vld [vmem:[%s2272 + $0x8] sm:$0xff]
        %v2275 = vld [vmem:[%s2272 + $0x10] sm:$0xff]
        %v2276 = vld [vmem:[%s2272 + $0x18] sm:$0xff]
        %v2277 = vld [vmem:[%s2272 + $0x20] sm:$0xff]
        %v2278 = vld [vmem:[%s2272 + $0x28] sm:$0xff]
        %v2279 = vld [vmem:[%s2272 + $0x30] sm:$0xff]
        %v2280 = vld [vmem:[%s2272 + $0x38] sm:$0xff]
        %v2281 = vmul.f32 %v1199, %v2273
        %v2282 = vmul.f32 %v1199, %v2274
        %v2283 = vmul.f32 %v1199, %v2275
        %v2284 = vmul.f32 %v1199, %v2276
        %v2285 = vmul.f32 %v1199, %v2277
        %v2286 = vmul.f32 %v1199, %v2278
        %v2287 = vmul.f32 %v1199, %v2279
        %v2288 = vmul.f32 %v1199, %v2280
        %v2289 = vadd.f32 %v2231, %v2281
        %v2290 = vadd.f32 %v2232, %v2282
        %v2291 = vadd.f32 %v2233, %v2283
        %v2292 = vadd.f32 %v2234, %v2284
        %v2293 = vadd.f32 %v2235, %v2285
        %v2294 = vadd.f32 %v2236, %v2286
        %v2295 = vadd.f32 %v2237, %v2287
        %v2296 = vadd.f32 %v2238, %v2288
        %v2297 = vmul.f32 %v1216, %v2273
        %v2298 = vmul.f32 %v1216, %v2274
        %v2299 = vmul.f32 %v1216, %v2275
        %v2300 = vmul.f32 %v1216, %v2276
        %v2301 = vmul.f32 %v1216, %v2277
        %v2302 = vmul.f32 %v1216, %v2278
        %v2303 = vmul.f32 %v1216, %v2279
        %v2304 = vmul.f32 %v1216, %v2280
        %v2305 = vadd.f32 %v2247, %v2297
        %v2306 = vadd.f32 %v2248, %v2298
        %v2307 = vadd.f32 %v2249, %v2299
        %v2308 = vadd.f32 %v2250, %v2300
        %v2309 = vadd.f32 %v2251, %v2301
        %v2310 = vadd.f32 %v2252, %v2302
        %v2311 = vadd.f32 %v2253, %v2303
        %v2312 = vadd.f32 %v2254, %v2304
        %v2313 = vmul.f32 %v1233, %v2273
        %v2314 = vmul.f32 %v1233, %v2274
        %v2315 = vmul.f32 %v1233, %v2275
        %v2316 = vmul.f32 %v1233, %v2276
        %v2317 = vmul.f32 %v1233, %v2277
        %v2318 = vmul.f32 %v1233, %v2278
        %v2319 = vmul.f32 %v1233, %v2279
        %v2320 = vmul.f32 %v1233, %v2280
        %v2321 = vadd.f32 %v2263, %v2313
        %v2322 = vadd.f32 %v2264, %v2314
        %v2323 = vadd.f32 %v2265, %v2315
        %v2324 = vadd.f32 %v2266, %v2316
        %v2325 = vadd.f32 %v2267, %v2317
        %v2326 = vadd.f32 %v2268, %v2318
        %v2327 = vadd.f32 %v2269, %v2319
        %v2328 = vadd.f32 %v2270, %v2320
        %s2329 = sadd.s32 %s1807, 864
        %s2330 = scalar_lea.vmem [#allocation8], %s2329
        %v2331 = vld [vmem:[%s2330] sm:$0xff]
        %v2332 = vld [vmem:[%s2330 + $0x8] sm:$0xff]
        %v2333 = vld [vmem:[%s2330 + $0x10] sm:$0xff]
        %v2334 = vld [vmem:[%s2330 + $0x18] sm:$0xff]
        %v2335 = vld [vmem:[%s2330 + $0x20] sm:$0xff]
        %v2336 = vld [vmem:[%s2330 + $0x28] sm:$0xff]
        %v2337 = vld [vmem:[%s2330 + $0x30] sm:$0xff]
        %v2338 = vld [vmem:[%s2330 + $0x38] sm:$0xff]
        %v2339 = vmul.f32 %v1260, %v2331
        %v2340 = vmul.f32 %v1260, %v2332
        %v2341 = vmul.f32 %v1260, %v2333
        %v2342 = vmul.f32 %v1260, %v2334
        %v2343 = vmul.f32 %v1260, %v2335
        %v2344 = vmul.f32 %v1260, %v2336
        %v2345 = vmul.f32 %v1260, %v2337
        %v2346 = vmul.f32 %v1260, %v2338
        %v2347 = vadd.f32 %v2289, %v2339
        %v2348 = vadd.f32 %v2290, %v2340
        %v2349 = vadd.f32 %v2291, %v2341
        %v2350 = vadd.f32 %v2292, %v2342
        %v2351 = vadd.f32 %v2293, %v2343
        %v2352 = vadd.f32 %v2294, %v2344
        %v2353 = vadd.f32 %v2295, %v2345
        %v2354 = vadd.f32 %v2296, %v2346
        %v2355 = vmul.f32 %v1277, %v2331
        %v2356 = vmul.f32 %v1277, %v2332
        %v2357 = vmul.f32 %v1277, %v2333
        %v2358 = vmul.f32 %v1277, %v2334
        %v2359 = vmul.f32 %v1277, %v2335
        %v2360 = vmul.f32 %v1277, %v2336
        %v2361 = vmul.f32 %v1277, %v2337
        %v2362 = vmul.f32 %v1277, %v2338
        %v2363 = vadd.f32 %v2305, %v2355
        %v2364 = vadd.f32 %v2306, %v2356
        %v2365 = vadd.f32 %v2307, %v2357
        %v2366 = vadd.f32 %v2308, %v2358
        %v2367 = vadd.f32 %v2309, %v2359
        %v2368 = vadd.f32 %v2310, %v2360
        %v2369 = vadd.f32 %v2311, %v2361
        %v2370 = vadd.f32 %v2312, %v2362
        %v2371 = vmul.f32 %v1294, %v2331
        %v2372 = vmul.f32 %v1294, %v2332
        %v2373 = vmul.f32 %v1294, %v2333
        %v2374 = vmul.f32 %v1294, %v2334
        %v2375 = vmul.f32 %v1294, %v2335
        %v2376 = vmul.f32 %v1294, %v2336
        %v2377 = vmul.f32 %v1294, %v2337
        %v2378 = vmul.f32 %v1294, %v2338
        %v2379 = vadd.f32 %v2321, %v2371
        %v2380 = vadd.f32 %v2322, %v2372
        %v2381 = vadd.f32 %v2323, %v2373
        %v2382 = vadd.f32 %v2324, %v2374
        %v2383 = vadd.f32 %v2325, %v2375
        %v2384 = vadd.f32 %v2326, %v2376
        %v2385 = vadd.f32 %v2327, %v2377
        %v2386 = vadd.f32 %v2328, %v2378
        %s2387 = sadd.s32 %s1865, 864
        %s2388 = scalar_lea.vmem [#allocation8], %s2387
        %v2389 = vld [vmem:[%s2388] sm:$0xff]
        %v2390 = vld [vmem:[%s2388 + $0x8] sm:$0xff]
        %v2391 = vld [vmem:[%s2388 + $0x10] sm:$0xff]
        %v2392 = vld [vmem:[%s2388 + $0x18] sm:$0xff]
        %v2393 = vld [vmem:[%s2388 + $0x20] sm:$0xff]
        %v2394 = vld [vmem:[%s2388 + $0x28] sm:$0xff]
        %v2395 = vld [vmem:[%s2388 + $0x30] sm:$0xff]
        %v2396 = vld [vmem:[%s2388 + $0x38] sm:$0xff]
        %v2397 = vmul.f32 %v1321, %v2389
        %v2398 = vmul.f32 %v1321, %v2390
        %v2399 = vmul.f32 %v1321, %v2391
        %v2400 = vmul.f32 %v1321, %v2392
        %v2401 = vmul.f32 %v1321, %v2393
        %v2402 = vmul.f32 %v1321, %v2394
        %v2403 = vmul.f32 %v1321, %v2395
        %v2404 = vmul.f32 %v1321, %v2396
        %v2405 = vadd.f32 %v2347, %v2397
        %v2406 = vadd.f32 %v2348, %v2398
        %v2407 = vadd.f32 %v2349, %v2399
        %v2408 = vadd.f32 %v2350, %v2400
        %v2409 = vadd.f32 %v2351, %v2401
        %v2410 = vadd.f32 %v2352, %v2402
        %v2411 = vadd.f32 %v2353, %v2403
        %v2412 = vadd.f32 %v2354, %v2404
        %v2413 = vmul.f32 %v1338, %v2389
        %v2414 = vmul.f32 %v1338, %v2390
        %v2415 = vmul.f32 %v1338, %v2391
        %v2416 = vmul.f32 %v1338, %v2392
        %v2417 = vmul.f32 %v1338, %v2393
        %v2418 = vmul.f32 %v1338, %v2394
        %v2419 = vmul.f32 %v1338, %v2395
        %v2420 = vmul.f32 %v1338, %v2396
        %v2421 = vadd.f32 %v2363, %v2413
        %v2422 = vadd.f32 %v2364, %v2414
        %v2423 = vadd.f32 %v2365, %v2415
        %v2424 = vadd.f32 %v2366, %v2416
        %v2425 = vadd.f32 %v2367, %v2417
        %v2426 = vadd.f32 %v2368, %v2418
        %v2427 = vadd.f32 %v2369, %v2419
        %v2428 = vadd.f32 %v2370, %v2420
        %v2429 = vmul.f32 %v1355, %v2389
        %v2430 = vmul.f32 %v1355, %v2390
        %v2431 = vmul.f32 %v1355, %v2391
        %v2432 = vmul.f32 %v1355, %v2392
        %v2433 = vmul.f32 %v1355, %v2393
        %v2434 = vmul.f32 %v1355, %v2394
        %v2435 = vmul.f32 %v1355, %v2395
        %v2436 = vmul.f32 %v1355, %v2396
        %v2437 = vadd.f32 %v2379, %v2429
        %v2438 = vadd.f32 %v2380, %v2430
        %v2439 = vadd.f32 %v2381, %v2431
        %v2440 = vadd.f32 %v2382, %v2432
        %v2441 = vadd.f32 %v2383, %v2433
        %v2442 = vadd.f32 %v2384, %v2434
        %v2443 = vadd.f32 %v2385, %v2435
        %v2444 = vadd.f32 %v2386, %v2436
        %s2445 = scalar_lea.vmem %s209, 64 [#allocation9]
        %2446 = vst [vmem:[%s2445] sm:$0xff] %v2405
        %2447 = vst [vmem:[%s2445 + $0x8] sm:$0xff] %v2406
        %2448 = vst [vmem:[%s2445 + $0x10] sm:$0xff] %v2407
        %2449 = vst [vmem:[%s2445 + $0x18] sm:$0xff] %v2408
        %2450 = vst [vmem:[%s2445 + $0x20] sm:$0xff] %v2409
        %2451 = vst [vmem:[%s2445 + $0x28] sm:$0xff] %v2410
        %2452 = vst [vmem:[%s2445 + $0x30] sm:$0xff] %v2411
        %2453 = vst [vmem:[%s2445 + $0x38] sm:$0xff] %v2412
        %s2454 = scalar_lea.vmem %s209, 192 [#allocation9]
        %2455 = vst [vmem:[%s2454] sm:$0xff] %v2421
        %2456 = vst [vmem:[%s2454 + $0x8] sm:$0xff] %v2422
        %2457 = vst [vmem:[%s2454 + $0x10] sm:$0xff] %v2423
        %2458 = vst [vmem:[%s2454 + $0x18] sm:$0xff] %v2424
        %2459 = vst [vmem:[%s2454 + $0x20] sm:$0xff] %v2425
        %2460 = vst [vmem:[%s2454 + $0x28] sm:$0xff] %v2426
        %2461 = vst [vmem:[%s2454 + $0x30] sm:$0xff] %v2427
        %2462 = vst [vmem:[%s2454 + $0x38] sm:$0xff] %v2428
        %s2463 = scalar_lea.vmem %s209, 320 [#allocation9]
        %2464 = vst [vmem:[%s2463] sm:$0xff] %v2437
        %2465 = vst [vmem:[%s2463 + $0x8] sm:$0xff] %v2438
        %2466 = vst [vmem:[%s2463 + $0x10] sm:$0xff] %v2439
        %2467 = vst [vmem:[%s2463 + $0x18] sm:$0xff] %v2440
        %2468 = vst [vmem:[%s2463 + $0x20] sm:$0xff] %v2441
        %2469 = vst [vmem:[%s2463 + $0x28] sm:$0xff] %v2442
        %2470 = vst [vmem:[%s2463 + $0x30] sm:$0xff] %v2443
        %2471 = vst [vmem:[%s2463 + $0x38] sm:$0xff] %v2444
        %s2472 = sand.u32 %s110, 1
        %s2473 = scalar_lea.sflag [#allocation4], %s2472
        %s2474 = sand.u32 %s110, 1
        %s2475 = smul.addr %s2474, 384
        %s2476 = scalar_lea.vmem [#allocation9], %s2475
        // Predicated region
        $region45: #{tpu_custom_call.1} parent=31 // pred_check
          %p2477 = pneg %p120
        $region46: #{tpu_custom_call.1} parent=31 // pred_check_branch
          %2479 = sbr.rel (%p2477) target = $region48
        $region47: #{tpu_custom_call.1} parent=31 // pred_region
          #allocation11 [shape = 'u32[6]{0}', space=smem, size = 0x18, scoped, tag = 'DMA stride descriptor']
          %s2480 = smul.u32 8, %s24
          %s2482 = ssub.s32 6144, 6144
          %2483 = vsyncadd %s2473, %s2482
          %s2484 = smul.addr %s2480, 2
          %s2485 = sadd.s32 %s25, %s2484
          %s2486 = smul.addr %s2485, 128
          %s2487 = scalar_lea.hbm %s3, %s2486
          %s2489 = sshll.u32 1, 14
          %s2490 = sxor.u32 4294967295, %s2489
          %s2493 = sshll.u32 7, 18
          %s2494 = sxor.u32 4294967295, %s2493
          %s2495 = sand.u32 0, %s2494
          %s2497 = sor.u32 %s2495, 0
          %s2499 = sshll.u32 3, 24
          %s2500 = sxor.u32 4294967295, %s2499
          %s2501 = sand.u32 %s2497, %s2500
          %s2503 = sor.u32 %s2501, 0
          %s2504 = sshll.u32 %s2476, 4
          %s2505 = int_to_ptr.vmem [resolvable:$true] %s2504
          %2511 = sst [smem:[#allocation11]] 2048
          %s2512 = scalar_lea.smem [#allocation11], 1
          %2513 = sst [smem:[%s2512]] 4096
          %s2514 = scalar_lea.smem [#allocation11], 2
          %2515 = sst [smem:[%s2514]] 16
          %s2516 = scalar_lea.smem [#allocation11], 3
          %2517 = sst [smem:[%s2516]] 128
          %s2518 = scalar_lea.smem [#allocation11], 4
          %2519 = sst [smem:[%s2518]] 128
          %s2520 = scalar_lea.smem [#allocation11], 5
          %2521 = sst [smem:[%s2520]] 8
          %2523 = dma.general %s2505, 6144, %s2487, %s2473, [#allocation10], [#allocation11], %s2503, 0
        $region48: #{tpu_custom_call.1} parent=31 // pred_fallthru
          _
      $region32: #{tpu_custom_call.1} parent=5 // pred_fallthru
        _
      %p2524 = scmp.le.s32.totalorder 2, %s15
      // Predicated region
      $region49: #{tpu_custom_call.1} parent=5 // pred_check
        %p2525 = pneg %p2524
      $region50: #{tpu_custom_call.1} parent=5 // pred_check_branch
        %2527 = sbr.rel (%p2525) target = $region52
      $region51: #{tpu_custom_call.1} parent=5 // pred_region
        %s2528 = ssub.s32 %s15, 2
        // Predicated region
        $region53: #{tpu_custom_call.1} parent=51 // pred_check
          %p2529 = pneg %p126
        $region54: #{tpu_custom_call.1} parent=51 // pred_check_branch
          %2531 = sbr.rel (%p2529) target = $region56
        $region55: #{tpu_custom_call.1} parent=51 // pred_region
          %s2532 = sand.u32 %s111, 1
          %s2533 = scalar_lea.sflag [#allocation4], %s2532
          %s2534 = sand.u32 %s111, 1
          %s2535 = smul.addr %s2534, 384
          %s2536 = scalar_lea.vmem [#allocation9], %s2535
          %2537 = dma.done %s2533, 6144
        $region56: #{tpu_custom_call.1} parent=51 // pred_fallthru
          _
      $region52: #{tpu_custom_call.1} parent=5 // pred_fallthru
        _
    $region6: #{tpu_custom_call.1} parent=1 // loop_footer
      %s19 = sadd.s32 1, %s15
    $region7: #{tpu_custom_call.1} parent=1 // loop_footer_branch
      %14 = sbr.rel target = $region3
    $region8: #{tpu_custom_call.1} parent=1 // loop_exit
      _
    %2538 = vsyncpa [#allocation3], 1
    %s2539 = scalar_lea.sflag [#allocation3], 1
    %2540 = vsyncpa %s2539, 1
    %2541 = vsyncpa [#allocation4], 1
    %s2542 = scalar_lea.sflag [#allocation4], 1
    %2543 = vsyncpa %s2542, 1
    %2544 = vsyncpa [#allocation5], 1
    %s2545 = scalar_lea.sflag [#allocation5], 1
    %2546 = vsyncpa %s2545, 1
    %2547 = vsyncpa [#allocation6], 1
    %s2548 = scalar_lea.sflag [#allocation6], 1
    %2549 = vsyncpa %s2548, 1

</llo_original>
